<compile_context>
chip_gen: v5e
topology: v5e:2x2
jax: 0.10.0
libtpu: 0.0.40
codegen_flags: <defaults>
</compile_context>

<pallas_src>
import functools
import math

import jax
import jax.numpy as jnp
from jax.experimental import pallas as pl
from jax.experimental.pallas import tpu as pltpu

_LN_EPS = 1e-5
_MAX_ROW_TILE = 512      # rows per block for row-tiled kernels
_MAX_Q_TILE = 256        # query rows per attention grid step
_MAX_FF_TILE = 2048      # dim_ff chunk for the K-tiled FFN kernel


def _row_tile(n):
    return n if n <= _MAX_ROW_TILE else _MAX_ROW_TILE


def _ff_tile(f):
    # Chunk of dim_ff streamed per reduction step.  Must divide dim_ff exactly (no
    # masking of the contraction axis), so fall back to full dim_ff if nothing fits.
    if f <= _MAX_FF_TILE:
        return f
    for t in (_MAX_FF_TILE, 1024, 512, 256, 128):
        if f % t == 0:
            return t
    return f


# ---------------------------------------------------------------------------
# Buffered(1) support probe + spec / compiler-param helpers
# ---------------------------------------------------------------------------
_BUFFERED_SINGLE_OK = None


def _probe_kernel(x_ref, o_ref):
    o_ref[...] = x_ref[...] + 1.0


def _buffered_single_ok():
    """True iff this JAX/Mosaic build supports single-buffered (pl.Buffered(1)) inputs."""
    global _BUFFERED_SINGLE_OK
    if _BUFFERED_SINGLE_OK is None:
        try:
            spec = pl.BlockSpec((8, 128), lambda i: (0, 0), pipeline_mode=pl.Buffered(1))
            fn = pl.pallas_call(
                _probe_kernel,
                out_shape=jax.ShapeDtypeStruct((8, 128), jnp.float32),
                grid=(2,),
                in_specs=[spec],
                out_specs=pl.BlockSpec((8, 128), lambda i: (0, 0)),
            )
            jax.jit(fn).lower(jnp.zeros((8, 128), jnp.float32)).compile()
            _BUFFERED_SINGLE_OK = True
        except Exception:
            _BUFFERED_SINGLE_OK = False
    return _BUFFERED_SINGLE_OK


def _wspec(shape, index_map):
    """BlockSpec for grid-invariant operands (weights / biases / LN params).

    These blocks are revisited every grid step, so default double-buffering only doubles
    their VMEM residency for no prefetch benefit."""
    if _buffered_single_ok():
        return pl.BlockSpec(shape, index_map, pipeline_mode=pl.Buffered(1))
    return pl.BlockSpec(shape, index_map)


def _weight_bufs():
    return 1 if _buffered_single_ok() else 2


def _cparams(dimension_semantics, blocks):
    """CompilerParams with an explicit VMEM limit derived from the block footprint.

    blocks: iterable of (block_shape, dtype, n_buffers).  2x margin, 32 MiB floor
    (>= every chip's default scoped limit, so this can only relax the default)."""
    total = 0
    for shape, dtype, bufs in blocks:
        total += math.prod(shape) * jnp.dtype(dtype).itemsize * bufs
    limit = int(min(max(2 * total, 32 * 1024 * 1024), 100 * 1024 * 1024))
    return pltpu.CompilerParams(dimension_semantics=dimension_semantics,
                                vmem_limit_bytes=limit)


# ---------------------------------------------------------------------------
# Pallas kernels
# ---------------------------------------------------------------------------
def _linear_kernel(x_ref, w_ref, b_ref, o_ref):
    # x: (rows, Din) f32, w: (Din, Dout) bf16 (pre-transposed), b: (1, Dout) f32.
    # Output dtype follows o_ref (bf16 for inter-kernel activations).
    y = jnp.dot(x_ref[...].astype(jnp.bfloat16), w_ref[...],
                preferred_element_type=jnp.float32) + b_ref[...]
    o_ref[...] = y.astype(o_ref.dtype)


def _attn_block_kernel(x_ref, kv_ref, wq_ref, bq_ref, wo_ref, bo_ref, g_ref, beta_ref,
                       o_ref, *, nhead, dh, d_model, eps):
    """Fused attention block for one (batch, q_tile) grid step:
         LN(x + MHA(q = x @ Wq, k/v from precomputed KV projection) @ Wout + bout)

    x_ref:  (1, tq, D)  f32  (residual stream; also the Q-projection input)
    kv_ref: (1, S, 2D)  bf16 (K columns [0:D], V columns [D:2D])
    o_ref:  (1, tq, D)  f32  — single lane-dense store.
    The 1/sqrt(dh) scale is pre-folded into Wq / bq.
    """
    x = x_ref[0]                                                   # (tq, D) f32
    q = (jnp.dot(x.astype(jnp.bfloat16), wq_ref[...],
                 preferred_element_type=jnp.float32) + bq_ref[...]).astype(jnp.bfloat16)
    kv = kv_ref[0]                                                 # (S, 2D) bf16

    outs = []
    for h in range(nhead):
        lo = h * dh
        qh = q[:, lo:lo + dh]                                      # (tq, dh) bf16
        kh = kv[:, lo:lo + dh]                                     # (S, dh)  bf16
        vh = kv[:, d_model + lo:d_model + lo + dh]                 # (S, dh)  bf16
        # q @ k^T via trans_b contraction (no explicit transpose through the XLU).
        s = jax.lax.dot_general(qh, kh, (((1,), (1,)), ((), ())),
                                preferred_element_type=jnp.float32)  # (tq, S)
        s = s - jnp.max(s, axis=-1, keepdims=True)
        p = jnp.exp(s)
        p = p * pl.reciprocal(jnp.sum(p, axis=-1, keepdims=True), approx=True)
        outs.append(jax.lax.dot_general(p.astype(jnp.bfloat16), vh,
                                        (((1,), (0,)), ((), ())),
                                        preferred_element_type=jnp.float32))  # (tq, dh)
    attn = jnp.concatenate(outs, axis=-1)                          # (tq, D) lane-dense

    y = jnp.dot(attn.astype(jnp.bfloat16), wo_ref[...],
                preferred_element_type=jnp.float32) + bo_ref[...]
    z = x + y
    mu = jnp.mean(z, axis=-1, keepdims=True)
    zc = z - mu
    var = jnp.mean(zc * zc, axis=-1, keepdims=True)
    o_ref[0] = zc * jax.lax.rsqrt(var + eps) * g_ref[...] + beta_ref[...]


def _ffn_res_ln_kernel(x_ref, w1_ref, b1_ref, w2_ref, b2_ref, g_ref, beta_ref,
                       o_ref, acc_ref, *, eps):
    """K-tiled FFN: LN(x + W2 @ ReLU(W1 @ x + b1) + b2), reduction over dim_ff chunks."""
    f = pl.program_id(1)
    nf = pl.num_programs(1)

    @pl.when(f == 0)
    def _():
        acc_ref[...] = jnp.zeros_like(acc_ref)

    xb = x_ref[...].astype(jnp.bfloat16)
    h = jnp.dot(xb, w1_ref[...], preferred_element_type=jnp.float32) + b1_ref[...]
    h = jnp.maximum(h, 0.0)  # ReLU; dropout = identity (eval)
    acc_ref[...] += jnp.dot(h.astype(jnp.bfloat16), w2_ref[...],
                            preferred_element_type=jnp.float32)

    @pl.when(f == nf - 1)
    def _():
        z = x_ref[...] + acc_ref[...] + b2_ref[...]
        mu = jnp.mean(z, axis=-1, keepdims=True)
        zc = z - mu
        var = jnp.mean(zc * zc, axis=-1, keepdims=True)
        o_ref[...] = (zc * jax.lax.rsqrt(var + eps) * g_ref[...] + beta_ref[...]
                      ).astype(o_ref.dtype)


def _ln_kernel(x_ref, g_ref, b_ref, o_ref, *, eps):
    x = x_ref[...]
    mu = jnp.mean(x, axis=-1, keepdims=True)
    xc = x - mu
    var = jnp.mean(xc * xc, axis=-1, keepdims=True)
    o_ref[...] = xc * jax.lax.rsqrt(var + eps) * g_ref[...] + b_ref[...]


# ---------------------------------------------------------------------------
# pallas_call wrappers
# ---------------------------------------------------------------------------
def linear(x, w, b, out_dtype=jnp.bfloat16):
    n, din = x.shape
    dout = w.shape[1]
    tile = _row_tile(n)
    wb = _weight_bufs()
    return pl.pallas_call(
        _linear_kernel,
        out_shape=jax.ShapeDtypeStruct((n, dout), out_dtype),
        grid=(pl.cdiv(n, tile),),
        in_specs=[
            pl.BlockSpec((tile, din), lambda i: (i, 0)),
            _wspec((din, dout), lambda i: (0, 0)),
            _wspec((1, dout), lambda i: (0, 0)),
        ],
        out_specs=pl.BlockSpec((tile, dout), lambda i: (i, 0)),
        compiler_params=_cparams(
            ("parallel",),
            [((tile, din), jnp.float32, 2),
             ((din, dout), jnp.bfloat16, wb),
             ((1, dout), jnp.float32, wb),
             ((tile, dout), out_dtype, 2)]),
    )(x, w, b)


def attention_block(x2d, kv3, w_q, b_q, w_out, b_out, g, beta, *, B, T, nhead, d_model):
    """One fused kernel per (batch, q_tile) step: Q-proj + MHA + out-proj + residual + LN."""
    S = kv3.shape[1]
    x3 = x2d.reshape(B, T, d_model)
    tq = min(T, _MAX_Q_TILE)
    wb = _weight_bufs()
    kern = functools.partial(_attn_block_kernel, nhead=nhead, dh=d_model // nhead,
                             d_model=d_model, eps=_LN_EPS)
    out = pl.pallas_call(
        kern,
        out_shape=jax.ShapeDtypeStruct((B, T, d_model), jnp.float32),
        grid=(B, pl.cdiv(T, tq)),
        in_specs=[
            pl.BlockSpec((1, tq, d_model), lambda b, q: (b, q, 0)),
            pl.BlockSpec((1, S, 2 * d_model), lambda b, q: (b, 0, 0)),
            _wspec((d_model, d_model), lambda b, q: (0, 0)),
            _wspec((1, d_model), lambda b, q: (0, 0)),
            _wspec((d_model, d_model), lambda b, q: (0, 0)),
            _wspec((1, d_model), lambda b, q: (0, 0)),
            _wspec((1, d_model), lambda b, q: (0, 0)),
            _wspec((1, d_model), lambda b, q: (0, 0)),
        ],
        out_specs=pl.BlockSpec((1, tq, d_model), lambda b, q: (b, q, 0)),
        compiler_params=_cparams(
            ("parallel", "parallel"),
            [((tq, d_model), jnp.float32, 2),           # x block
             ((S, 2 * d_model), jnp.bfloat16, 2),       # kv block
             ((d_model, d_model), jnp.bfloat16, 2 * wb),  # Wq + Wout
             ((1, d_model), jnp.float32, 4 * wb),       # biases + LN params
             ((tq, S), jnp.float32, 2),                 # score headroom
             ((tq, d_model), jnp.float32, 2)]),         # output block
    )(x3, kv3, w_q, b_q, w_out, b_out, g, beta)
    return out.reshape(B * T, d_model)


def ffn_res_ln(x, w1, b1, w2, b2, g, beta):
    n, d = x.shape
    f = w1.shape[1]
    tile = _row_tile(n)
    tf = _ff_tile(f)
    wb = _weight_bufs()
    kern = functools.partial(_ffn_res_ln_kernel, eps=_LN_EPS)
    return pl.pallas_call(
        kern,
        out_shape=jax.ShapeDtypeStruct((n, d), jnp.float32),
        grid=(pl.cdiv(n, tile), pl.cdiv(f, tf)),
        in_specs=[
            pl.BlockSpec((tile, d), lambda i, k: (i, 0)),
            pl.BlockSpec((d, tf), lambda i, k: (0, k)),
            pl.BlockSpec((1, tf), lambda i, k: (0, k)),
            pl.BlockSpec((tf, d), lambda i, k: (k, 0)),
            _wspec((1, d), lambda i, k: (0, 0)),
            _wspec((1, d), lambda i, k: (0, 0)),
            _wspec((1, d), lambda i, k: (0, 0)),
        ],
        out_specs=pl.BlockSpec((tile, d), lambda i, k: (i, 0)),
        scratch_shapes=[pltpu.VMEM((tile, d), jnp.float32)],
        compiler_params=_cparams(
            ("parallel", "arbitrary"),
            [((tile, d), jnp.float32, 2),      # x block
             ((d, tf), jnp.bfloat16, 2),       # W1 chunk (streamed)
             ((1, tf), jnp.float32, 2),        # b1 chunk
             ((tf, d), jnp.bfloat16, 2),       # W2 chunk (streamed)
             ((1, d), jnp.float32, 3 * wb),    # b2 + LN params
             ((tile, d), jnp.float32, 2),      # output block
             ((tile, tf), jnp.float32, 1),     # hidden intermediate headroom
             ((tile, d), jnp.float32, 1)]),    # accumulator scratch
    )(x, w1, b1, w2, b2, g, beta)


def layernorm(x, g, b):
    n, d = x.shape
    tile = _row_tile(n)
    kern = functools.partial(_ln_kernel, eps=_LN_EPS)
    return pl.pallas_call(
        kern,
        out_shape=jax.ShapeDtypeStruct((n, d), jnp.float32),
        grid=(pl.cdiv(n, tile),),
        in_specs=[
            pl.BlockSpec((tile, d), lambda i: (i, 0)),
            _wspec((1, d), lambda i: (0, 0)),
            _wspec((1, d), lambda i: (0, 0)),
        ],
        out_specs=pl.BlockSpec((tile, d), lambda i: (i, 0)),
        compiler_params=_cparams(
            ("parallel",),
            [((tile, d), jnp.float32, 4),
             ((1, d), jnp.float32, 2 * _weight_bufs())]),
    )(x, g, b)


# ---------------------------------------------------------------------------
# Decoder composition (glue in plain JAX; internally batch-first (B*T, D))
# ---------------------------------------------------------------------------
def decoder_layer(x2d, mem2d, p, *, B, T, S, nhead, d_model):
    # Self-attention block: KV projection (bf16) + fused Qproj/MHA/out-proj/res/LN1.
    kv = linear(x2d, p["sa_w_kv"], p["sa_b_kv"])                       # (B*T, 2D) bf16
    x2d = attention_block(x2d, kv.reshape(B, T, 2 * d_model),
                          p["sa_w_q"], p["sa_b_q"], p["sa_w_out"], p["sa_b_out"],
                          p["ln1_g"], p["ln1_b"],
                          B=B, T=T, nhead=nhead, d_model=d_model)

    # Cross-attention block: memory KV projection (bf16) + fused block for LN2.
    kv = linear(mem2d, p["ca_w_kv"], p["ca_b_kv"])                     # (B*S, 2D) bf16
    x2d = attention_block(x2d, kv.reshape(B, S, 2 * d_model),
                          p["ca_w_q"], p["ca_b_q"], p["ca_w_out"], p["ca_b_out"],
                          p["ln2_g"], p["ln2_b"],
                          B=B, T=T, nhead=nhead, d_model=d_model)

    # Feed-forward block: K-tiled over dim_ff, residual + LN3 fused.
    x2d = ffn_res_ln(x2d, p["w1"], p["b1"], p["w2"], p["b2"], p["ln3_g"], p["ln3_b"])
    return x2d


def transformer_decoder(tgt, memory, params, nhead):
    T, B, D = tgt.shape
    S = memory.shape[0]
    # Single layout conversion to batch-first flat rows (and back at the end);
    # no per-layer transposes.
    x2d = jnp.transpose(tgt, (1, 0, 2)).reshape(B * T, D)
    mem2d = jnp.transpose(memory, (1, 0, 2)).reshape(B * S, D)

    layer_fn = jax.checkpoint(
        functools.partial(decoder_layer, B=B, T=T, S=S, nhead=nhead, d_model=D))
    for p in params["layers"]:
        x2d = layer_fn(x2d, mem2d, p)

    if params.get("final_norm") is not None:
        fn = params["final_norm"]
        x2d = layernorm(x2d, fn["g"], fn["b"])

    return jnp.transpose(x2d.reshape(B, T, D), (1, 0, 2))


# ---------------------------------------------------------------------------
# Parameters: PyTorch layout -> kernel layout (pre-transposed, bf16, scale folded)
# ---------------------------------------------------------------------------
def init_params(key, d_model, nhead, dim_ff, num_layers):
    """Raw parameters in PyTorch nn.TransformerDecoderLayer layout."""
    def mha_params(k):
        k1, k2 = jax.random.split(k)
        return {
            "in_proj_weight": 0.05 * jax.random.normal(k1, (3 * d_model, d_model), jnp.float32),
            "in_proj_bias": jnp.zeros((3 * d_model,), jnp.float32),
            "out_proj_weight": 0.05 * jax.random.normal(k2, (d_model, d_model), jnp.float32),
            "out_proj_bias": jnp.zeros((d_model,), jnp.float32),
        }

    layers = []
    for _ in range(num_layers):
        key, ka, kb, kc, kd = jax.random.split(key, 5)
        layers.append({
            "self_attn": mha_params(ka),
            "cross_attn": mha_params(kb),
            "w1": 0.05 * jax.random.normal(kc, (dim_ff, d_model), jnp.float32),
            "b1": jnp.zeros((dim_ff,), jnp.float32),
            "w2": 0.05 * jax.random.normal(kd, (d_model, dim_ff), jnp.float32),
            "b2": jnp.zeros((d_model,), jnp.float32),
            "norm1_w": jnp.ones((d_model,), jnp.float32),
            "norm1_b": jnp.zeros((d_model,), jnp.float32),
            "norm2_w": jnp.ones((d_model,), jnp.float32),
            "norm2_b": jnp.zeros((d_model,), jnp.float32),
            "norm3_w": jnp.ones((d_model,), jnp.float32),
            "norm3_b": jnp.zeros((d_model,), jnp.float32),
        })
    final_norm = {"w": jnp.ones((d_model,), jnp.float32),
                  "b": jnp.zeros((d_model,), jnp.float32)}
    return {"layers": layers, "final_norm": final_norm}


def prepare_params(raw, nhead):
    """Pre-transpose weights to (Din, Dout), cast matmul weights to bf16, fold the
    1/sqrt(dh) attention scale into the Q projection, split in_proj into Q / KV parts,
    and reshape biases/LN params to (1, D) rows (lane-dense, broadcast-friendly)."""
    d_model = raw["layers"][0]["self_attn"]["out_proj_weight"].shape[0]
    dh = d_model // nhead
    scale = 1.0 / float(dh) ** 0.5

    def prep_mha(p):
        w_in = p["in_proj_weight"]
        b_in = p["in_proj_bias"]
        return {
            "w_q": (w_in[:d_model] * scale).T.astype(jnp.bfloat16),    # (D, D), scale folded
            "b_q": (b_in[:d_model] * scale).reshape(1, -1),
            "w_kv": w_in[d_model:].T.astype(jnp.bfloat16),             # (D, 2D)
            "b_kv": b_in[d_model:].reshape(1, -1),
            "w_out": p["out_proj_weight"].T.astype(jnp.bfloat16),      # (D, D)
            "b_out": p["out_proj_bias"].reshape(1, -1),
        }

    layers = []
    for lp in raw["layers"]:
        sa = prep_mha(lp["self_attn"])
        ca = prep_mha(lp["cross_attn"])
        layers.append({
            "sa_w_q": sa["w_q"], "sa_b_q": sa["b_q"],
            "sa_w_kv": sa["w_kv"], "sa_b_kv": sa["b_kv"],
            "sa_w_out": sa["w_out"], "sa_b_out": sa["b_out"],
            "ca_w_q": ca["w_q"], "ca_b_q": ca["b_q"],
            "ca_w_kv": ca["w_kv"], "ca_b_kv": ca["b_kv"],
            "ca_w_out": ca["w_out"], "ca_b_out": ca["b_out"],
            "w1": lp["w1"].T.astype(jnp.bfloat16), "b1": lp["b1"].reshape(1, -1),
            "w2": lp["w2"].T.astype(jnp.bfloat16), "b2": lp["b2"].reshape(1, -1),
            "ln1_g": lp["norm1_w"].reshape(1, -1), "ln1_b": lp["norm1_b"].reshape(1, -1),
            "ln2_g": lp["norm2_w"].reshape(1, -1), "ln2_b": lp["norm2_b"].reshape(1, -1),
            "ln3_g": lp["norm3_w"].reshape(1, -1), "ln3_b": lp["norm3_b"].reshape(1, -1),
        })
    final = raw.get("final_norm")
    final_norm = None if final is None else {"g": final["w"].reshape(1, -1),
                                             "b": final["b"].reshape(1, -1)}
    return {"layers": layers, "final_norm": final_norm}


if __name__ == "__main__":
    d_model, nhead, dim_ff, num_layers = 32, 4, 64, 2
    T, S, B = 8, 10, 2

    # Resolve the Buffered(1) capability probe eagerly (outside any jit trace).
    _buffered_single_ok()

    key = jax.random.PRNGKey(0)
    kp, kt, km = jax.random.split(key, 3)
    raw_params = init_params(kp, d_model, nhead, dim_ff, num_layers)
    params = prepare_params(raw_params, nhead)

    tgt = jax.random.normal(kt, (T, B, d_model), jnp.float32)      # (T, B, D)
    memory = jax.random.normal(km, (S, B, d_model), jnp.float32)   # (S, B, D)

    fwd = jax.jit(lambda t, m: transformer_decoder(t, m, params, nhead))
    out = fwd(tgt, memory)
    jax.block_until_ready(out)

    assert out.shape == (T, B, d_model)
    assert bool(jnp.all(jnp.isfinite(out)))
    print("KERNEL_OK")
</pallas_src>

<mosaic_0001>
module attributes {stable_mosaic.version = 11 : i64} {
  func.func @_linear_kernel(%arg0: i32, %arg1: memref<20x32xf32, #tpu.memory_space<vmem>>, %arg2: memref<32x64xbf16, #tpu.memory_space<vmem>>, %arg3: memref<1x64xf32, #tpu.memory_space<vmem>>, %arg4: memref<20x64xbf16, #tpu.memory_space<vmem>>) attributes {dimension_semantics = [#tpu.dimension_semantics<parallel>], iteration_bounds = array<i64: 1>, scalar_prefetch = 0 : i64, scratch_operands = 0 : i64, tpu.core_type = #tpu.core_type<tc>, window_params = [{transform_indices = @transform_0, window_bounds = array<i64: 20, 32>}, {pipeline_mode = #tpu.pipeline_mode<synchronous>, transform_indices = @transform_1, window_bounds = array<i64: 32, 64>}, {pipeline_mode = #tpu.pipeline_mode<synchronous>, transform_indices = @transform_2, window_bounds = array<i64: 1, 64>}, {transform_indices = @transform_3, window_bounds = array<i64: 20, 64>}]} {
    %c0 = arith.constant 0 : index
    %c0_0 = arith.constant 0 : index
    %0 = vector.load %arg1[%c0, %c0_0] : memref<20x32xf32, #tpu.memory_space<vmem>>, vector<20x32xf32>
    %1 = arith.truncf %0 : vector<20x32xf32> to vector<20x32xbf16>
    %c0_1 = arith.constant 0 : index
    %c0_2 = arith.constant 0 : index
    %2 = vector.load %arg2[%c0_1, %c0_2] : memref<32x64xbf16, #tpu.memory_space<vmem>>, vector<32x64xbf16>
    %cst = arith.constant dense<0.000000e+00> : vector<20x64xf32>
    %3 = tpu.matmul %1, %2, %cst {dimension_numbers = #tpu.dot_dimension_numbers<[1], [0], [0], [1], [0, 0, 1, 1], [], []>} : vector<20x32xbf16>, vector<32x64xbf16>, vector<20x64xf32> -> vector<20x64xf32>
    %c0_3 = arith.constant 0 : index
    %c0_4 = arith.constant 0 : index
    %4 = vector.load %arg3[%c0_3, %c0_4] : memref<1x64xf32, #tpu.memory_space<vmem>>, vector<1x64xf32>
    %5 = vector.broadcast %4 : vector<1x64xf32> to vector<20x64xf32>
    %6 = arith.addf %3, %5 : vector<20x64xf32>
    %7 = arith.truncf %6 : vector<20x64xf32> to vector<20x64xbf16>
    %c0_5 = arith.constant 0 : index
    %c0_6 = arith.constant 0 : index
    %8 = vector.load %arg4[%c0_5, %c0_6] : memref<20x64xbf16, #tpu.memory_space<vmem>>, vector<20x64xbf16>
    tpu.vector_store %arg4[%c0_5, %c0_6], %7 {strides = array<i32>} : memref<20x64xbf16, #tpu.memory_space<vmem>>, vector<20x64xbf16>,
    return
  }
  func.func @transform_0(%arg0: i32) -> (i32, i32) {
    %c0_i32 = arith.constant 0 : i32
    %c0_i32_0 = arith.constant 0 : i32
    return %arg0, %c0_i32 : i32, i32
  }
  func.func @transform_1(%arg0: i32) -> (i32, i32) {
    %c0_i32 = arith.constant 0 : i32
    %c0_i32_0 = arith.constant 0 : i32
    %c0_i32_1 = arith.constant 0 : i32
    return %c0_i32, %c0_i32_0 : i32, i32
  }
  func.func @transform_2(%arg0: i32) -> (i32, i32) {
    %c0_i32 = arith.constant 0 : i32
    %c0_i32_0 = arith.constant 0 : i32
    %c0_i32_1 = arith.constant 0 : i32
    return %c0_i32, %c0_i32_0 : i32, i32
  }
  func.func @transform_3(%arg0: i32) -> (i32, i32) {
    %c0_i32 = arith.constant 0 : i32
    %c0_i32_0 = arith.constant 0 : i32
    return %arg0, %c0_i32 : i32, i32
  }
}

module attributes {stable_mosaic.version = 11 : i64} {
  func.func @_linear_kernel(%arg0: i32, %arg1: memref<16x32xf32, #tpu.memory_space<vmem>>, %arg2: memref<32x64xbf16, #tpu.memory_space<vmem>>, %arg3: memref<1x64xf32, #tpu.memory_space<vmem>>, %arg4: memref<16x64xbf16, #tpu.memory_space<vmem>>) attributes {dimension_semantics = [#tpu.dimension_semantics<parallel>], iteration_bounds = array<i64: 1>, scalar_prefetch = 0 : i64, scratch_operands = 0 : i64, tpu.core_type = #tpu.core_type<tc>, window_params = [{transform_indices = @transform_0, window_bounds = array<i64: 16, 32>}, {pipeline_mode = #tpu.pipeline_mode<synchronous>, transform_indices = @transform_1, window_bounds = array<i64: 32, 64>}, {pipeline_mode = #tpu.pipeline_mode<synchronous>, transform_indices = @transform_2, window_bounds = array<i64: 1, 64>}, {transform_indices = @transform_3, window_bounds = array<i64: 16, 64>}]} {
    %c0 = arith.constant 0 : index
    %c0_0 = arith.constant 0 : index
    %0 = vector.load %arg1[%c0, %c0_0] : memref<16x32xf32, #tpu.memory_space<vmem>>, vector<16x32xf32>
    %1 = arith.truncf %0 : vector<16x32xf32> to vector<16x32xbf16>
    %c0_1 = arith.constant 0 : index
    %c0_2 = arith.constant 0 : index
    %2 = vector.load %arg2[%c0_1, %c0_2] : memref<32x64xbf16, #tpu.memory_space<vmem>>, vector<32x64xbf16>
    %cst = arith.constant dense<0.000000e+00> : vector<16x64xf32>
    %3 = tpu.matmul %1, %2, %cst {dimension_numbers = #tpu.dot_dimension_numbers<[1], [0], [0], [1], [0, 0, 1, 1], [], []>} : vector<16x32xbf16>, vector<32x64xbf16>, vector<16x64xf32> -> vector<16x64xf32>
    %c0_3 = arith.constant 0 : index
    %c0_4 = arith.constant 0 : index
    %4 = vector.load %arg3[%c0_3, %c0_4] : memref<1x64xf32, #tpu.memory_space<vmem>>, vector<1x64xf32>
    %5 = vector.broadcast %4 : vector<1x64xf32> to vector<16x64xf32>
    %6 = arith.addf %3, %5 : vector<16x64xf32>
    %7 = arith.truncf %6 : vector<16x64xf32> to vector<16x64xbf16>
    %c0_5 = arith.constant 0 : index
    %c0_6 = arith.constant 0 : index
    %8 = vector.load %arg4[%c0_5, %c0_6] : memref<16x64xbf16, #tpu.memory_space<vmem>>, vector<16x64xbf16>
    tpu.vector_store %arg4[%c0_5, %c0_6], %7 {strides = array<i32>} : memref<16x64xbf16, #tpu.memory_space<vmem>>, vector<16x64xbf16>,
    return
  }
  func.func @transform_0(%arg0: i32) -> (i32, i32) {
    %c0_i32 = arith.constant 0 : i32
    %c0_i32_0 = arith.constant 0 : i32
    return %arg0, %c0_i32 : i32, i32
  }
  func.func @transform_1(%arg0: i32) -> (i32, i32) {
    %c0_i32 = arith.constant 0 : i32
    %c0_i32_0 = arith.constant 0 : i32
    %c0_i32_1 = arith.constant 0 : i32
    return %c0_i32, %c0_i32_0 : i32, i32
  }
  func.func @transform_2(%arg0: i32) -> (i32, i32) {
    %c0_i32 = arith.constant 0 : i32
    %c0_i32_0 = arith.constant 0 : i32
    %c0_i32_1 = arith.constant 0 : i32
    return %c0_i32, %c0_i32_0 : i32, i32
  }
  func.func @transform_3(%arg0: i32) -> (i32, i32) {
    %c0_i32 = arith.constant 0 : i32
    %c0_i32_0 = arith.constant 0 : i32
    return %arg0, %c0_i32 : i32, i32
  }
}

module attributes {stable_mosaic.version = 11 : i64} {
  func.func @_attn_block_kernel(%arg0: i32, %arg1: i32, %arg2: memref<1x8x32xf32, #tpu.memory_space<vmem>>, %arg3: memref<1x8x64xbf16, #tpu.memory_space<vmem>>, %arg4: memref<32x32xbf16, #tpu.memory_space<vmem>>, %arg5: memref<1x32xf32, #tpu.memory_space<vmem>>, %arg6: memref<32x32xbf16, #tpu.memory_space<vmem>>, %arg7: memref<1x32xf32, #tpu.memory_space<vmem>>, %arg8: memref<1x32xf32, #tpu.memory_space<vmem>>, %arg9: memref<1x32xf32, #tpu.memory_space<vmem>>, %arg10: memref<1x8x32xf32, #tpu.memory_space<vmem>>) attributes {dimension_semantics = [#tpu.dimension_semantics<parallel>, #tpu.dimension_semantics<parallel>], iteration_bounds = array<i64: 2, 1>, scalar_prefetch = 0 : i64, scratch_operands = 0 : i64, tpu.core_type = #tpu.core_type<tc>, window_params = [{transform_indices = @transform_0, window_bounds = array<i64: 1, 8, 32>}, {transform_indices = @transform_1, window_bounds = array<i64: 1, 8, 64>}, {pipeline_mode = #tpu.pipeline_mode<synchronous>, transform_indices = @transform_2, window_bounds = array<i64: 32, 32>}, {pipeline_mode = #tpu.pipeline_mode<synchronous>, transform_indices = @transform_3, window_bounds = array<i64: 1, 32>}, {pipeline_mode = #tpu.pipeline_mode<synchronous>, transform_indices = @transform_4, window_bounds = array<i64: 32, 32>}, {pipeline_mode = #tpu.pipeline_mode<synchronous>, transform_indices = @transform_5, window_bounds = array<i64: 1, 32>}, {pipeline_mode = #tpu.pipeline_mode<synchronous>, transform_indices = @transform_6, window_bounds = array<i64: 1, 32>}, {pipeline_mode = #tpu.pipeline_mode<synchronous>, transform_indices = @transform_7, window_bounds = array<i64: 1, 32>}, {transform_indices = @transform_8, window_bounds = array<i64: 1, 8, 32>}]} {
    %c0 = arith.constant 0 : index
    %c0_0 = arith.constant 0 : index
    %c0_1 = arith.constant 0 : index
    %0 = vector.load %arg2[%c0, %c0_0, %c0_1] : memref<1x8x32xf32, #tpu.memory_space<vmem>>, vector<1x8x32xf32>
    %1 = vector.shape_cast %0 : vector<1x8x32xf32> to vector<8x32xf32>
    %2 = arith.truncf %1 : vector<8x32xf32> to vector<8x32xbf16>
    %c0_2 = arith.constant 0 : index
    %c0_3 = arith.constant 0 : index
    %3 = vector.load %arg4[%c0_2, %c0_3] : memref<32x32xbf16, #tpu.memory_space<vmem>>, vector<32x32xbf16>
    %cst = arith.constant dense<0.000000e+00> : vector<8x32xf32>
    %4 = tpu.matmul %2, %3, %cst {dimension_numbers = #tpu.dot_dimension_numbers<[1], [0], [0], [1], [0, 0, 1, 1], [], []>} : vector<8x32xbf16>, vector<32x32xbf16>, vector<8x32xf32> -> vector<8x32xf32>
    %c0_4 = arith.constant 0 : index
    %c0_5 = arith.constant 0 : index
    %5 = vector.load %arg5[%c0_4, %c0_5] : memref<1x32xf32, #tpu.memory_space<vmem>>, vector<1x32xf32>
    %6 = vector.broadcast %5 : vector<1x32xf32> to vector<8x32xf32>
    %7 = arith.addf %4, %6 : vector<8x32xf32>
    %8 = arith.truncf %7 : vector<8x32xf32> to vector<8x32xbf16>
    %c0_6 = arith.constant 0 : index
    %c0_7 = arith.constant 0 : index
    %c0_8 = arith.constant 0 : index
    %9 = vector.load %arg3[%c0_6, %c0_7, %c0_8] : memref<1x8x64xbf16, #tpu.memory_space<vmem>>, vector<1x8x64xbf16>
    %10 = vector.shape_cast %9 : vector<1x8x64xbf16> to vector<8x64xbf16>
    %11 = vector.extract_strided_slice %8 {offsets = [0, 0], sizes = [8, 8], strides = [1, 1]} : vector<8x32xbf16> to vector<8x8xbf16>
    %12 = vector.extract_strided_slice %10 {offsets = [0, 0], sizes = [8, 8], strides = [1, 1]} : vector<8x64xbf16> to vector<8x8xbf16>
    %13 = vector.extract_strided_slice %10 {offsets = [0, 32], sizes = [8, 8], strides = [1, 1]} : vector<8x64xbf16> to vector<8x8xbf16>
    %cst_9 = arith.constant dense<0.000000e+00> : vector<8x8xf32>
    %14 = tpu.matmul %11, %12, %cst_9 {dimension_numbers = #tpu.dot_dimension_numbers<[1], [1], [0], [0], [0, 0, 1, 0], [], []>} : vector<8x8xbf16>, vector<8x8xbf16>, vector<8x8xf32> -> vector<8x8xf32>
    %cst_10 = arith.constant dense<0xFF800000> : vector<8xf32>
    %15 = vector.multi_reduction <maximumf>, %14, %cst_10 [1] : vector<8x8xf32> to vector<8xf32>
    %16 = vector.shape_cast %15 : vector<8xf32> to vector<8x1xf32>
    %17 = vector.broadcast %16 : vector<8x1xf32> to vector<8x8xf32>
    %18 = arith.subf %14, %17 : vector<8x8xf32>
    %19 = math.exp %18 : vector<8x8xf32>
    %cst_11 = arith.constant dense<0.000000e+00> : vector<8xf32>
    %20 = vector.multi_reduction <add>, %19, %cst_11 [1] : vector<8x8xf32> to vector<8xf32>
    %21 = vector.shape_cast %20 : vector<8xf32> to vector<8x1xf32>
    %22 = tpu.reciprocal %21 {approx = true} : vector<8x1xf32> -> vector<8x1xf32>
    %23 = vector.broadcast %22 : vector<8x1xf32> to vector<8x8xf32>
    %24 = arith.mulf %19, %23 : vector<8x8xf32>
    %25 = arith.truncf %24 : vector<8x8xf32> to vector<8x8xbf16>
    %cst_12 = arith.constant dense<0.000000e+00> : vector<8x8xf32>
    %26 = tpu.matmul %25, %13, %cst_12 {dimension_numbers = #tpu.dot_dimension_numbers<[1], [0], [0], [1], [0, 0, 1, 1], [], []>} : vector<8x8xbf16>, vector<8x8xbf16>, vector<8x8xf32> -> vector<8x8xf32>
    %27 = vector.extract_strided_slice %8 {offsets = [0, 8], sizes = [8, 8], strides = [1, 1]} : vector<8x32xbf16> to vector<8x8xbf16>
    %28 = vector.extract_strided_slice %10 {offsets = [0, 8], sizes = [8, 8], strides = [1, 1]} : vector<8x64xbf16> to vector<8x8xbf16>
    %29 = vector.extract_strided_slice %10 {offsets = [0, 40], sizes = [8, 8], strides = [1, 1]} : vector<8x64xbf16> to vector<8x8xbf16>
    %cst_13 = arith.constant dense<0.000000e+00> : vector<8x8xf32>
    %30 = tpu.matmul %27, %28, %cst_13 {dimension_numbers = #tpu.dot_dimension_numbers<[1], [1], [0], [0], [0, 0, 1, 0], [], []>} : vector<8x8xbf16>, vector<8x8xbf16>, vector<8x8xf32> -> vector<8x8xf32>
    %cst_14 = arith.constant dense<0xFF800000> : vector<8xf32>
    %31 = vector.multi_reduction <maximumf>, %30, %cst_14 [1] : vector<8x8xf32> to vector<8xf32>
    %32 = vector.shape_cast %31 : vector<8xf32> to vector<8x1xf32>
    %33 = vector.broadcast %32 : vector<8x1xf32> to vector<8x8xf32>
    %34 = arith.subf %30, %33 : vector<8x8xf32>
    %35 = math.exp %34 : vector<8x8xf32>
    %cst_15 = arith.constant dense<0.000000e+00> : vector<8xf32>
    %36 = vector.multi_reduction <add>, %35, %cst_15 [1] : vector<8x8xf32> to vector<8xf32>
    %37 = vector.shape_cast %36 : vector<8xf32> to vector<8x1xf32>
    %38 = tpu.reciprocal %37 {approx = true} : vector<8x1xf32> -> vector<8x1xf32>
    %39 = vector.broadcast %38 : vector<8x1xf32> to vector<8x8xf32>
    %40 = arith.mulf %35, %39 : vector<8x8xf32>
    %41 = arith.truncf %40 : vector<8x8xf32> to vector<8x8xbf16>
    %cst_16 = arith.constant dense<0.000000e+00> : vector<8x8xf32>
    %42 = tpu.matmul %41, %29, %cst_16 {dimension_numbers = #tpu.dot_dimension_numbers<[1], [0], [0], [1], [0, 0, 1, 1], [], []>} : vector<8x8xbf16>, vector<8x8xbf16>, vector<8x8xf32> -> vector<8x8xf32>
    %43 = vector.extract_strided_slice %8 {offsets = [0, 16], sizes = [8, 8], strides = [1, 1]} : vector<8x32xbf16> to vector<8x8xbf16>
    %44 = vector.extract_strided_slice %10 {offsets = [0, 16], sizes = [8, 8], strides = [1, 1]} : vector<8x64xbf16> to vector<8x8xbf16>
    %45 = vector.extract_strided_slice %10 {offsets = [0, 48], sizes = [8, 8], strides = [1, 1]} : vector<8x64xbf16> to vector<8x8xbf16>
    %cst_17 = arith.constant dense<0.000000e+00> : vector<8x8xf32>
    %46 = tpu.matmul %43, %44, %cst_17 {dimension_numbers = #tpu.dot_dimension_numbers<[1], [1], [0], [0], [0, 0, 1, 0], [], []>} : vector<8x8xbf16>, vector<8x8xbf16>, vector<8x8xf32> -> vector<8x8xf32>
    %cst_18 = arith.constant dense<0xFF800000> : vector<8xf32>
    %47 = vector.multi_reduction <maximumf>, %46, %cst_18 [1] : vector<8x8xf32> to vector<8xf32>
    %48 = vector.shape_cast %47 : vector<8xf32> to vector<8x1xf32>
    %49 = vector.broadcast %48 : vector<8x1xf32> to vector<8x8xf32>
    %50 = arith.subf %46, %49 : vector<8x8xf32>
    %51 = math.exp %50 : vector<8x8xf32>
    %cst_19 = arith.constant dense<0.000000e+00> : vector<8xf32>
    %52 = vector.multi_reduction <add>, %51, %cst_19 [1] : vector<8x8xf32> to vector<8xf32>
    %53 = vector.shape_cast %52 : vector<8xf32> to vector<8x1xf32>
    %54 = tpu.reciprocal %53 {approx = true} : vector<8x1xf32> -> vector<8x1xf32>
    %55 = vector.broadcast %54 : vector<8x1xf32> to vector<8x8xf32>
    %56 = arith.mulf %51, %55 : vector<8x8xf32>
    %57 = arith.truncf %56 : vector<8x8xf32> to vector<8x8xbf16>
    %cst_20 = arith.constant dense<0.000000e+00> : vector<8x8xf32>
    %58 = tpu.matmul %57, %45, %cst_20 {dimension_numbers = #tpu.dot_dimension_numbers<[1], [0], [0], [1], [0, 0, 1, 1], [], []>} : vector<8x8xbf16>, vector<8x8xbf16>, vector<8x8xf32> -> vector<8x8xf32>
    %59 = vector.extract_strided_slice %8 {offsets = [0, 24], sizes = [8, 8], strides = [1, 1]} : vector<8x32xbf16> to vector<8x8xbf16>
    %60 = vector.extract_strided_slice %10 {offsets = [0, 24], sizes = [8, 8], strides = [1, 1]} : vector<8x64xbf16> to vector<8x8xbf16>
    %61 = vector.extract_strided_slice %10 {offsets = [0, 56], sizes = [8, 8], strides = [1, 1]} : vector<8x64xbf16> to vector<8x8xbf16>
    %cst_21 = arith.constant dense<0.000000e+00> : vector<8x8xf32>
    %62 = tpu.matmul %59, %60, %cst_21 {dimension_numbers = #tpu.dot_dimension_numbers<[1], [1], [0], [0], [0, 0, 1, 0], [], []>} : vector<8x8xbf16>, vector<8x8xbf16>, vector<8x8xf32> -> vector<8x8xf32>
    %cst_22 = arith.constant dense<0xFF800000> : vector<8xf32>
    %63 = vector.multi_reduction <maximumf>, %62, %cst_22 [1] : vector<8x8xf32> to vector<8xf32>
    %64 = vector.shape_cast %63 : vector<8xf32> to vector<8x1xf32>
    %65 = vector.broadcast %64 : vector<8x1xf32> to vector<8x8xf32>
    %66 = arith.subf %62, %65 : vector<8x8xf32>
    %67 = math.exp %66 : vector<8x8xf32>
    %cst_23 = arith.constant dense<0.000000e+00> : vector<8xf32>
    %68 = vector.multi_reduction <add>, %67, %cst_23 [1] : vector<8x8xf32> to vector<8xf32>
    %69 = vector.shape_cast %68 : vector<8xf32> to vector<8x1xf32>
    %70 = tpu.reciprocal %69 {approx = true} : vector<8x1xf32> -> vector<8x1xf32>
    %71 = vector.broadcast %70 : vector<8x1xf32> to vector<8x8xf32>
    %72 = arith.mulf %67, %71 : vector<8x8xf32>
    %73 = arith.truncf %72 : vector<8x8xf32> to vector<8x8xbf16>
    %cst_24 = arith.constant dense<0.000000e+00> : vector<8x8xf32>
    %74 = tpu.matmul %73, %61, %cst_24 {dimension_numbers = #tpu.dot_dimension_numbers<[1], [0], [0], [1], [0, 0, 1, 1], [], []>} : vector<8x8xbf16>, vector<8x8xbf16>, vector<8x8xf32> -> vector<8x8xf32>
    %75 = tpu.concatenate %26, %42, %58, %74 in 1 : vector<8x8xf32>, vector<8x8xf32>, vector<8x8xf32>, vector<8x8xf32> -> vector<8x32xf32>
    %76 = arith.truncf %75 : vector<8x32xf32> to vector<8x32xbf16>
    %c0_25 = arith.constant 0 : index
    %c0_26 = arith.constant 0 : index
    %77 = vector.load %arg6[%c0_25, %c0_26] : memref<32x32xbf16, #tpu.memory_space<vmem>>, vector<32x32xbf16>
    %cst_27 = arith.constant dense<0.000000e+00> : vector<8x32xf32>
    %78 = tpu.matmul %76, %77, %cst_27 {dimension_numbers = #tpu.dot_dimension_numbers<[1], [0], [0], [1], [0, 0, 1, 1], [], []>} : vector<8x32xbf16>, vector<32x32xbf16>, vector<8x32xf32> -> vector<8x32xf32>
    %c0_28 = arith.constant 0 : index
    %c0_29 = arith.constant 0 : index
    %79 = vector.load %arg7[%c0_28, %c0_29] : memref<1x32xf32, #tpu.memory_space<vmem>>, vector<1x32xf32>
    %80 = vector.broadcast %79 : vector<1x32xf32> to vector<8x32xf32>
    %81 = arith.addf %78, %80 : vector<8x32xf32>
    %82 = arith.addf %1, %81 : vector<8x32xf32>
    %cst_30 = arith.constant dense<0.000000e+00> : vector<8xf32>
    %83 = vector.multi_reduction <add>, %82, %cst_30 [1] : vector<8x32xf32> to vector<8xf32>
    %84 = vector.shape_cast %83 : vector<8xf32> to vector<8x1xf32>
    %cst_31 = arith.constant 3.200000e+01 : f32
    %85 = vector.broadcast %cst_31 : f32 to vector<8x1xf32>
    %86 = arith.divf %84, %85 : vector<8x1xf32>
    %87 = vector.broadcast %86 : vector<8x1xf32> to vector<8x32xf32>
    %88 = arith.subf %82, %87 : vector<8x32xf32>
    %89 = arith.mulf %88, %88 : vector<8x32xf32>
    %cst_32 = arith.constant dense<0.000000e+00> : vector<8xf32>
    %90 = vector.multi_reduction <add>, %89, %cst_32 [1] : vector<8x32xf32> to vector<8xf32>
    %91 = vector.shape_cast %90 : vector<8xf32> to vector<8x1xf32>
    %cst_33 = arith.constant 3.200000e+01 : f32
    %92 = vector.broadcast %cst_33 : f32 to vector<8x1xf32>
    %93 = arith.divf %91, %92 : vector<8x1xf32>
    %cst_34 = arith.constant 9.99999974E-6 : f32
    %94 = vector.broadcast %cst_34 : f32 to vector<8x1xf32>
    %95 = arith.addf %93, %94 : vector<8x1xf32>
    %96 = math.rsqrt %95 : vector<8x1xf32>
    %97 = vector.broadcast %96 : vector<8x1xf32> to vector<8x32xf32>
    %98 = arith.mulf %88, %97 : vector<8x32xf32>
    %c0_35 = arith.constant 0 : index
    %c0_36 = arith.constant 0 : index
    %99 = vector.load %arg8[%c0_35, %c0_36] : memref<1x32xf32, #tpu.memory_space<vmem>>, vector<1x32xf32>
    %100 = vector.broadcast %99 : vector<1x32xf32> to vector<8x32xf32>
    %101 = arith.mulf %98, %100 : vector<8x32xf32>
    %c0_37 = arith.constant 0 : index
    %c0_38 = arith.constant 0 : index
    %102 = vector.load %arg9[%c0_37, %c0_38] : memref<1x32xf32, #tpu.memory_space<vmem>>, vector<1x32xf32>
    %103 = vector.broadcast %102 : vector<1x32xf32> to vector<8x32xf32>
    %104 = arith.addf %101, %103 : vector<8x32xf32>
    %c0_39 = arith.constant 0 : index
    %c0_40 = arith.constant 0 : index
    %c0_41 = arith.constant 0 : index
    %105 = vector.load %arg10[%c0_39, %c0_40, %c0_41] : memref<1x8x32xf32, #tpu.memory_space<vmem>>, vector<1x8x32xf32>
    %106 = vector.shape_cast %105 : vector<1x8x32xf32> to vector<8x32xf32>
    %107 = vector.shape_cast %104 : vector<8x32xf32> to vector<1x8x32xf32>
    tpu.vector_store %arg10[%c0_39, %c0_40, %c0_41], %107 {strides = array<i32>} : memref<1x8x32xf32, #tpu.memory_space<vmem>>, vector<1x8x32xf32>,
    return
  }
  func.func @transform_0(%arg0: i32, %arg1: i32) -> (i32, i32, i32) {
    %c0_i32 = arith.constant 0 : i32
    %c0_i32_0 = arith.constant 0 : i32
    return %arg0, %arg1, %c0_i32 : i32, i32, i32
  }
  func.func @transform_1(%arg0: i32, %arg1: i32) -> (i32, i32, i32) {
    %c0_i32 = arith.constant 0 : i32
    %c0_i32_0 = arith.constant 0 : i32
    %c0_i32_1 = arith.constant 0 : i32
    return %arg0, %c0_i32, %c0_i32_0 : i32, i32, i32
  }
  func.func @transform_2(%arg0: i32, %arg1: i32) -> (i32, i32) {
    %c0_i32 = arith.constant 0 : i32
    %c0_i32_0 = arith.constant 0 : i32
    %c0_i32_1 = arith.constant 0 : i32
    return %c0_i32, %c0_i32_0 : i32, i32
  }
  func.func @transform_3(%arg0: i32, %arg1: i32) -> (i32, i32) {
    %c0_i32 = arith.constant 0 : i32
    %c0_i32_0 = arith.constant 0 : i32
    %c0_i32_1 = arith.constant 0 : i32
    return %c0_i32, %c0_i32_0 : i32, i32
  }
  func.func @transform_4(%arg0: i32, %arg1: i32) -> (i32, i32) {
    %c0_i32 = arith.constant 0 : i32
    %c0_i32_0 = arith.constant 0 : i32
    %c0_i32_1 = arith.constant 0 : i32
    return %c0_i32, %c0_i32_0 : i32, i32
  }
  func.func @transform_5(%arg0: i32, %arg1: i32) -> (i32, i32) {
    %c0_i32 = arith.constant 0 : i32
    %c0_i32_0 = arith.constant 0 : i32
    %c0_i32_1 = arith.constant 0 : i32
    return %c0_i32, %c0_i32_0 : i32, i32
  }
  func.func @transform_6(%arg0: i32, %arg1: i32) -> (i32, i32) {
    %c0_i32 = arith.constant 0 : i32
    %c0_i32_0 = arith.constant 0 : i32
    %c0_i32_1 = arith.constant 0 : i32
    return %c0_i32, %c0_i32_0 : i32, i32
  }
  func.func @transform_7(%arg0: i32, %arg1: i32) -> (i32, i32) {
    %c0_i32 = arith.constant 0 : i32
    %c0_i32_0 = arith.constant 0 : i32
    %c0_i32_1 = arith.constant 0 : i32
    return %c0_i32, %c0_i32_0 : i32, i32
  }
  func.func @transform_8(%arg0: i32, %arg1: i32) -> (i32, i32, i32) {
    %c0_i32 = arith.constant 0 : i32
    %c0_i32_0 = arith.constant 0 : i32
    return %arg0, %arg1, %c0_i32 : i32, i32, i32
  }
}

module attributes {stable_mosaic.version = 11 : i64} {
  func.func @_attn_block_kernel(%arg0: i32, %arg1: i32, %arg2: memref<1x8x32xf32, #tpu.memory_space<vmem>>, %arg3: memref<1x10x64xbf16, #tpu.memory_space<vmem>>, %arg4: memref<32x32xbf16, #tpu.memory_space<vmem>>, %arg5: memref<1x32xf32, #tpu.memory_space<vmem>>, %arg6: memref<32x32xbf16, #tpu.memory_space<vmem>>, %arg7: memref<1x32xf32, #tpu.memory_space<vmem>>, %arg8: memref<1x32xf32, #tpu.memory_space<vmem>>, %arg9: memref<1x32xf32, #tpu.memory_space<vmem>>, %arg10: memref<1x8x32xf32, #tpu.memory_space<vmem>>) attributes {dimension_semantics = [#tpu.dimension_semantics<parallel>, #tpu.dimension_semantics<parallel>], iteration_bounds = array<i64: 2, 1>, scalar_prefetch = 0 : i64, scratch_operands = 0 : i64, tpu.core_type = #tpu.core_type<tc>, window_params = [{transform_indices = @transform_0, window_bounds = array<i64: 1, 8, 32>}, {transform_indices = @transform_1, window_bounds = array<i64: 1, 10, 64>}, {pipeline_mode = #tpu.pipeline_mode<synchronous>, transform_indices = @transform_2, window_bounds = array<i64: 32, 32>}, {pipeline_mode = #tpu.pipeline_mode<synchronous>, transform_indices = @transform_3, window_bounds = array<i64: 1, 32>}, {pipeline_mode = #tpu.pipeline_mode<synchronous>, transform_indices = @transform_4, window_bounds = array<i64: 32, 32>}, {pipeline_mode = #tpu.pipeline_mode<synchronous>, transform_indices = @transform_5, window_bounds = array<i64: 1, 32>}, {pipeline_mode = #tpu.pipeline_mode<synchronous>, transform_indices = @transform_6, window_bounds = array<i64: 1, 32>}, {pipeline_mode = #tpu.pipeline_mode<synchronous>, transform_indices = @transform_7, window_bounds = array<i64: 1, 32>}, {transform_indices = @transform_8, window_bounds = array<i64: 1, 8, 32>}]} {
    %c0 = arith.constant 0 : index
    %c0_0 = arith.constant 0 : index
    %c0_1 = arith.constant 0 : index
    %0 = vector.load %arg2[%c0, %c0_0, %c0_1] : memref<1x8x32xf32, #tpu.memory_space<vmem>>, vector<1x8x32xf32>
    %1 = vector.shape_cast %0 : vector<1x8x32xf32> to vector<8x32xf32>
    %2 = arith.truncf %1 : vector<8x32xf32> to vector<8x32xbf16>
    %c0_2 = arith.constant 0 : index
    %c0_3 = arith.constant 0 : index
    %3 = vector.load %arg4[%c0_2, %c0_3] : memref<32x32xbf16, #tpu.memory_space<vmem>>, vector<32x32xbf16>
    %cst = arith.constant dense<0.000000e+00> : vector<8x32xf32>
    %4 = tpu.matmul %2, %3, %cst {dimension_numbers = #tpu.dot_dimension_numbers<[1], [0], [0], [1], [0, 0, 1, 1], [], []>} : vector<8x32xbf16>, vector<32x32xbf16>, vector<8x32xf32> -> vector<8x32xf32>
    %c0_4 = arith.constant 0 : index
    %c0_5 = arith.constant 0 : index
    %5 = vector.load %arg5[%c0_4, %c0_5] : memref<1x32xf32, #tpu.memory_space<vmem>>, vector<1x32xf32>
    %6 = vector.broadcast %5 : vector<1x32xf32> to vector<8x32xf32>
    %7 = arith.addf %4, %6 : vector<8x32xf32>
    %8 = arith.truncf %7 : vector<8x32xf32> to vector<8x32xbf16>
    %c0_6 = arith.constant 0 : index
    %c0_7 = arith.constant 0 : index
    %c0_8 = arith.constant 0 : index
    %9 = vector.load %arg3[%c0_6, %c0_7, %c0_8] : memref<1x10x64xbf16, #tpu.memory_space<vmem>>, vector<1x10x64xbf16>
    %10 = vector.shape_cast %9 : vector<1x10x64xbf16> to vector<10x64xbf16>
    %11 = vector.extract_strided_slice %8 {offsets = [0, 0], sizes = [8, 8], strides = [1, 1]} : vector<8x32xbf16> to vector<8x8xbf16>
    %12 = vector.extract_strided_slice %10 {offsets = [0, 0], sizes = [10, 8], strides = [1, 1]} : vector<10x64xbf16> to vector<10x8xbf16>
    %13 = vector.extract_strided_slice %10 {offsets = [0, 32], sizes = [10, 8], strides = [1, 1]} : vector<10x64xbf16> to vector<10x8xbf16>
    %cst_9 = arith.constant dense<0.000000e+00> : vector<8x10xf32>
    %14 = tpu.matmul %11, %12, %cst_9 {dimension_numbers = #tpu.dot_dimension_numbers<[1], [1], [0], [0], [0, 0, 1, 0], [], []>} : vector<8x8xbf16>, vector<10x8xbf16>, vector<8x10xf32> -> vector<8x10xf32>
    %cst_10 = arith.constant dense<0xFF800000> : vector<8xf32>
    %15 = vector.multi_reduction <maximumf>, %14, %cst_10 [1] : vector<8x10xf32> to vector<8xf32>
    %16 = vector.shape_cast %15 : vector<8xf32> to vector<8x1xf32>
    %17 = vector.broadcast %16 : vector<8x1xf32> to vector<8x10xf32>
    %18 = arith.subf %14, %17 : vector<8x10xf32>
    %19 = math.exp %18 : vector<8x10xf32>
    %cst_11 = arith.constant dense<0.000000e+00> : vector<8xf32>
    %20 = vector.multi_reduction <add>, %19, %cst_11 [1] : vector<8x10xf32> to vector<8xf32>
    %21 = vector.shape_cast %20 : vector<8xf32> to vector<8x1xf32>
    %22 = tpu.reciprocal %21 {approx = true} : vector<8x1xf32> -> vector<8x1xf32>
    %23 = vector.broadcast %22 : vector<8x1xf32> to vector<8x10xf32>
    %24 = arith.mulf %19, %23 : vector<8x10xf32>
    %25 = arith.truncf %24 : vector<8x10xf32> to vector<8x10xbf16>
    %cst_12 = arith.constant dense<0.000000e+00> : vector<8x8xf32>
    %26 = tpu.matmul %25, %13, %cst_12 {dimension_numbers = #tpu.dot_dimension_numbers<[1], [0], [0], [1], [0, 0, 1, 1], [], []>} : vector<8x10xbf16>, vector<10x8xbf16>, vector<8x8xf32> -> vector<8x8xf32>
    %27 = vector.extract_strided_slice %8 {offsets = [0, 8], sizes = [8, 8], strides = [1, 1]} : vector<8x32xbf16> to vector<8x8xbf16>
    %28 = vector.extract_strided_slice %10 {offsets = [0, 8], sizes = [10, 8], strides = [1, 1]} : vector<10x64xbf16> to vector<10x8xbf16>
    %29 = vector.extract_strided_slice %10 {offsets = [0, 40], sizes = [10, 8], strides = [1, 1]} : vector<10x64xbf16> to vector<10x8xbf16>
    %cst_13 = arith.constant dense<0.000000e+00> : vector<8x10xf32>
    %30 = tpu.matmul %27, %28, %cst_13 {dimension_numbers = #tpu.dot_dimension_numbers<[1], [1], [0], [0], [0, 0, 1, 0], [], []>} : vector<8x8xbf16>, vector<10x8xbf16>, vector<8x10xf32> -> vector<8x10xf32>
    %cst_14 = arith.constant dense<0xFF800000> : vector<8xf32>
    %31 = vector.multi_reduction <maximumf>, %30, %cst_14 [1] : vector<8x10xf32> to vector<8xf32>
    %32 = vector.shape_cast %31 : vector<8xf32> to vector<8x1xf32>
    %33 = vector.broadcast %32 : vector<8x1xf32> to vector<8x10xf32>
    %34 = arith.subf %30, %33 : vector<8x10xf32>
    %35 = math.exp %34 : vector<8x10xf32>
    %cst_15 = arith.constant dense<0.000000e+00> : vector<8xf32>
    %36 = vector.multi_reduction <add>, %35, %cst_15 [1] : vector<8x10xf32> to vector<8xf32>
    %37 = vector.shape_cast %36 : vector<8xf32> to vector<8x1xf32>
    %38 = tpu.reciprocal %37 {approx = true} : vector<8x1xf32> -> vector<8x1xf32>
    %39 = vector.broadcast %38 : vector<8x1xf32> to vector<8x10xf32>
    %40 = arith.mulf %35, %39 : vector<8x10xf32>
    %41 = arith.truncf %40 : vector<8x10xf32> to vector<8x10xbf16>
    %cst_16 = arith.constant dense<0.000000e+00> : vector<8x8xf32>
    %42 = tpu.matmul %41, %29, %cst_16 {dimension_numbers = #tpu.dot_dimension_numbers<[1], [0], [0], [1], [0, 0, 1, 1], [], []>} : vector<8x10xbf16>, vector<10x8xbf16>, vector<8x8xf32> -> vector<8x8xf32>
    %43 = vector.extract_strided_slice %8 {offsets = [0, 16], sizes = [8, 8], strides = [1, 1]} : vector<8x32xbf16> to vector<8x8xbf16>
    %44 = vector.extract_strided_slice %10 {offsets = [0, 16], sizes = [10, 8], strides = [1, 1]} : vector<10x64xbf16> to vector<10x8xbf16>
    %45 = vector.extract_strided_slice %10 {offsets = [0, 48], sizes = [10, 8], strides = [1, 1]} : vector<10x64xbf16> to vector<10x8xbf16>
    %cst_17 = arith.constant dense<0.000000e+00> : vector<8x10xf32>
    %46 = tpu.matmul %43, %44, %cst_17 {dimension_numbers = #tpu.dot_dimension_numbers<[1], [1], [0], [0], [0, 0, 1, 0], [], []>} : vector<8x8xbf16>, vector<10x8xbf16>, vector<8x10xf32> -> vector<8x10xf32>
    %cst_18 = arith.constant dense<0xFF800000> : vector<8xf32>
    %47 = vector.multi_reduction <maximumf>, %46, %cst_18 [1] : vector<8x10xf32> to vector<8xf32>
    %48 = vector.shape_cast %47 : vector<8xf32> to vector<8x1xf32>
    %49 = vector.broadcast %48 : vector<8x1xf32> to vector<8x10xf32>
    %50 = arith.subf %46, %49 : vector<8x10xf32>
    %51 = math.exp %50 : vector<8x10xf32>
    %cst_19 = arith.constant dense<0.000000e+00> : vector<8xf32>
    %52 = vector.multi_reduction <add>, %51, %cst_19 [1] : vector<8x10xf32> to vector<8xf32>
    %53 = vector.shape_cast %52 : vector<8xf32> to vector<8x1xf32>
    %54 = tpu.reciprocal %53 {approx = true} : vector<8x1xf32> -> vector<8x1xf32>
    %55 = vector.broadcast %54 : vector<8x1xf32> to vector<8x10xf32>
    %56 = arith.mulf %51, %55 : vector<8x10xf32>
    %57 = arith.truncf %56 : vector<8x10xf32> to vector<8x10xbf16>
    %cst_20 = arith.constant dense<0.000000e+00> : vector<8x8xf32>
    %58 = tpu.matmul %57, %45, %cst_20 {dimension_numbers = #tpu.dot_dimension_numbers<[1], [0], [0], [1], [0, 0, 1, 1], [], []>} : vector<8x10xbf16>, vector<10x8xbf16>, vector<8x8xf32> -> vector<8x8xf32>
    %59 = vector.extract_strided_slice %8 {offsets = [0, 24], sizes = [8, 8], strides = [1, 1]} : vector<8x32xbf16> to vector<8x8xbf16>
    %60 = vector.extract_strided_slice %10 {offsets = [0, 24], sizes = [10, 8], strides = [1, 1]} : vector<10x64xbf16> to vector<10x8xbf16>
    %61 = vector.extract_strided_slice %10 {offsets = [0, 56], sizes = [10, 8], strides = [1, 1]} : vector<10x64xbf16> to vector<10x8xbf16>
    %cst_21 = arith.constant dense<0.000000e+00> : vector<8x10xf32>
    %62 = tpu.matmul %59, %60, %cst_21 {dimension_numbers = #tpu.dot_dimension_numbers<[1], [1], [0], [0], [0, 0, 1, 0], [], []>} : vector<8x8xbf16>, vector<10x8xbf16>, vector<8x10xf32> -> vector<8x10xf32>
    %cst_22 = arith.constant dense<0xFF800000> : vector<8xf32>
    %63 = vector.multi_reduction <maximumf>, %62, %cst_22 [1] : vector<8x10xf32> to vector<8xf32>
    %64 = vector.shape_cast %63 : vector<8xf32> to vector<8x1xf32>
    %65 = vector.broadcast %64 : vector<8x1xf32> to vector<8x10xf32>
    %66 = arith.subf %62, %65 : vector<8x10xf32>
    %67 = math.exp %66 : vector<8x10xf32>
    %cst_23 = arith.constant dense<0.000000e+00> : vector<8xf32>
    %68 = vector.multi_reduction <add>, %67, %cst_23 [1] : vector<8x10xf32> to vector<8xf32>
    %69 = vector.shape_cast %68 : vector<8xf32> to vector<8x1xf32>
    %70 = tpu.reciprocal %69 {approx = true} : vector<8x1xf32> -> vector<8x1xf32>
    %71 = vector.broadcast %70 : vector<8x1xf32> to vector<8x10xf32>
    %72 = arith.mulf %67, %71 : vector<8x10xf32>
    %73 = arith.truncf %72 : vector<8x10xf32> to vector<8x10xbf16>
    %cst_24 = arith.constant dense<0.000000e+00> : vector<8x8xf32>
    %74 = tpu.matmul %73, %61, %cst_24 {dimension_numbers = #tpu.dot_dimension_numbers<[1], [0], [0], [1], [0, 0, 1, 1], [], []>} : vector<8x10xbf16>, vector<10x8xbf16>, vector<8x8xf32> -> vector<8x8xf32>
    %75 = tpu.concatenate %26, %42, %58, %74 in 1 : vector<8x8xf32>, vector<8x8xf32>, vector<8x8xf32>, vector<8x8xf32> -> vector<8x32xf32>
    %76 = arith.truncf %75 : vector<8x32xf32> to vector<8x32xbf16>
    %c0_25 = arith.constant 0 : index
    %c0_26 = arith.constant 0 : index
    %77 = vector.load %arg6[%c0_25, %c0_26] : memref<32x32xbf16, #tpu.memory_space<vmem>>, vector<32x32xbf16>
    %cst_27 = arith.constant dense<0.000000e+00> : vector<8x32xf32>
    %78 = tpu.matmul %76, %77, %cst_27 {dimension_numbers = #tpu.dot_dimension_numbers<[1], [0], [0], [1], [0, 0, 1, 1], [], []>} : vector<8x32xbf16>, vector<32x32xbf16>, vector<8x32xf32> -> vector<8x32xf32>
    %c0_28 = arith.constant 0 : index
    %c0_29 = arith.constant 0 : index
    %79 = vector.load %arg7[%c0_28, %c0_29] : memref<1x32xf32, #tpu.memory_space<vmem>>, vector<1x32xf32>
    %80 = vector.broadcast %79 : vector<1x32xf32> to vector<8x32xf32>
    %81 = arith.addf %78, %80 : vector<8x32xf32>
    %82 = arith.addf %1, %81 : vector<8x32xf32>
    %cst_30 = arith.constant dense<0.000000e+00> : vector<8xf32>
    %83 = vector.multi_reduction <add>, %82, %cst_30 [1] : vector<8x32xf32> to vector<8xf32>
    %84 = vector.shape_cast %83 : vector<8xf32> to vector<8x1xf32>
    %cst_31 = arith.constant 3.200000e+01 : f32
    %85 = vector.broadcast %cst_31 : f32 to vector<8x1xf32>
    %86 = arith.divf %84, %85 : vector<8x1xf32>
    %87 = vector.broadcast %86 : vector<8x1xf32> to vector<8x32xf32>
    %88 = arith.subf %82, %87 : vector<8x32xf32>
    %89 = arith.mulf %88, %88 : vector<8x32xf32>
    %cst_32 = arith.constant dense<0.000000e+00> : vector<8xf32>
    %90 = vector.multi_reduction <add>, %89, %cst_32 [1] : vector<8x32xf32> to vector<8xf32>
    %91 = vector.shape_cast %90 : vector<8xf32> to vector<8x1xf32>
    %cst_33 = arith.constant 3.200000e+01 : f32
    %92 = vector.broadcast %cst_33 : f32 to vector<8x1xf32>
    %93 = arith.divf %91, %92 : vector<8x1xf32>
    %cst_34 = arith.constant 9.99999974E-6 : f32
    %94 = vector.broadcast %cst_34 : f32 to vector<8x1xf32>
    %95 = arith.addf %93, %94 : vector<8x1xf32>
    %96 = math.rsqrt %95 : vector<8x1xf32>
    %97 = vector.broadcast %96 : vector<8x1xf32> to vector<8x32xf32>
    %98 = arith.mulf %88, %97 : vector<8x32xf32>
    %c0_35 = arith.constant 0 : index
    %c0_36 = arith.constant 0 : index
    %99 = vector.load %arg8[%c0_35, %c0_36] : memref<1x32xf32, #tpu.memory_space<vmem>>, vector<1x32xf32>
    %100 = vector.broadcast %99 : vector<1x32xf32> to vector<8x32xf32>
    %101 = arith.mulf %98, %100 : vector<8x32xf32>
    %c0_37 = arith.constant 0 : index
    %c0_38 = arith.constant 0 : index
    %102 = vector.load %arg9[%c0_37, %c0_38] : memref<1x32xf32, #tpu.memory_space<vmem>>, vector<1x32xf32>
    %103 = vector.broadcast %102 : vector<1x32xf32> to vector<8x32xf32>
    %104 = arith.addf %101, %103 : vector<8x32xf32>
    %c0_39 = arith.constant 0 : index
    %c0_40 = arith.constant 0 : index
    %c0_41 = arith.constant 0 : index
    %105 = vector.load %arg10[%c0_39, %c0_40, %c0_41] : memref<1x8x32xf32, #tpu.memory_space<vmem>>, vector<1x8x32xf32>
    %106 = vector.shape_cast %105 : vector<1x8x32xf32> to vector<8x32xf32>
    %107 = vector.shape_cast %104 : vector<8x32xf32> to vector<1x8x32xf32>
    tpu.vector_store %arg10[%c0_39, %c0_40, %c0_41], %107 {strides = array<i32>} : memref<1x8x32xf32, #tpu.memory_space<vmem>>, vector<1x8x32xf32>,
    return
  }
  func.func @transform_0(%arg0: i32, %arg1: i32) -> (i32, i32, i32) {
    %c0_i32 = arith.constant 0 : i32
    %c0_i32_0 = arith.constant 0 : i32
    return %arg0, %arg1, %c0_i32 : i32, i32, i32
  }
  func.func @transform_1(%arg0: i32, %arg1: i32) -> (i32, i32, i32) {
    %c0_i32 = arith.constant 0 : i32
    %c0_i32_0 = arith.constant 0 : i32
    %c0_i32_1 = arith.constant 0 : i32
    return %arg0, %c0_i32, %c0_i32_0 : i32, i32, i32
  }
  func.func @transform_2(%arg0: i32, %arg1: i32) -> (i32, i32) {
    %c0_i32 = arith.constant 0 : i32
    %c0_i32_0 = arith.constant 0 : i32
    %c0_i32_1 = arith.constant 0 : i32
    return %c0_i32, %c0_i32_0 : i32, i32
  }
  func.func @transform_3(%arg0: i32, %arg1: i32) -> (i32, i32) {
    %c0_i32 = arith.constant 0 : i32
    %c0_i32_0 = arith.constant 0 : i32
    %c0_i32_1 = arith.constant 0 : i32
    return %c0_i32, %c0_i32_0 : i32, i32
  }
  func.func @transform_4(%arg0: i32, %arg1: i32) -> (i32, i32) {
    %c0_i32 = arith.constant 0 : i32
    %c0_i32_0 = arith.constant 0 : i32
    %c0_i32_1 = arith.constant 0 : i32
    return %c0_i32, %c0_i32_0 : i32, i32
  }
  func.func @transform_5(%arg0: i32, %arg1: i32) -> (i32, i32) {
    %c0_i32 = arith.constant 0 : i32
    %c0_i32_0 = arith.constant 0 : i32
    %c0_i32_1 = arith.constant 0 : i32
    return %c0_i32, %c0_i32_0 : i32, i32
  }
  func.func @transform_6(%arg0: i32, %arg1: i32) -> (i32, i32) {
    %c0_i32 = arith.constant 0 : i32
    %c0_i32_0 = arith.constant 0 : i32
    %c0_i32_1 = arith.constant 0 : i32
    return %c0_i32, %c0_i32_0 : i32, i32
  }
  func.func @transform_7(%arg0: i32, %arg1: i32) -> (i32, i32) {
    %c0_i32 = arith.constant 0 : i32
    %c0_i32_0 = arith.constant 0 : i32
    %c0_i32_1 = arith.constant 0 : i32
    return %c0_i32, %c0_i32_0 : i32, i32
  }
  func.func @transform_8(%arg0: i32, %arg1: i32) -> (i32, i32, i32) {
    %c0_i32 = arith.constant 0 : i32
    %c0_i32_0 = arith.constant 0 : i32
    return %arg0, %arg1, %c0_i32 : i32, i32, i32
  }
}

module attributes {stable_mosaic.version = 11 : i64} {
  func.func @_ffn_res_ln_kernel(%arg0: i32, %arg1: i32, %arg2: memref<16x32xf32, #tpu.memory_space<vmem>>, %arg3: memref<32x64xbf16, #tpu.memory_space<vmem>>, %arg4: memref<1x64xf32, #tpu.memory_space<vmem>>, %arg5: memref<64x32xbf16, #tpu.memory_space<vmem>>, %arg6: memref<1x32xf32, #tpu.memory_space<vmem>>, %arg7: memref<1x32xf32, #tpu.memory_space<vmem>>, %arg8: memref<1x32xf32, #tpu.memory_space<vmem>>, %arg9: memref<16x32xf32, #tpu.memory_space<vmem>>, %arg10: memref<16x32xf32, #tpu.memory_space<vmem>>) attributes {dimension_semantics = [#tpu.dimension_semantics<parallel>, #tpu.dimension_semantics<arbitrary>], iteration_bounds = array<i64: 1, 1>, scalar_prefetch = 0 : i64, scratch_operands = 1 : i64, tpu.core_type = #tpu.core_type<tc>, window_params = [{transform_indices = @transform_0, window_bounds = array<i64: 16, 32>}, {transform_indices = @transform_1, window_bounds = array<i64: 32, 64>}, {transform_indices = @transform_2, window_bounds = array<i64: 1, 64>}, {transform_indices = @transform_3, window_bounds = array<i64: 64, 32>}, {pipeline_mode = #tpu.pipeline_mode<synchronous>, transform_indices = @transform_4, window_bounds = array<i64: 1, 32>}, {pipeline_mode = #tpu.pipeline_mode<synchronous>, transform_indices = @transform_5, window_bounds = array<i64: 1, 32>}, {pipeline_mode = #tpu.pipeline_mode<synchronous>, transform_indices = @transform_6, window_bounds = array<i64: 1, 32>}, {transform_indices = @transform_7, window_bounds = array<i64: 16, 32>}]} {
    %c0_i32 = arith.constant 0 : i32
    %0 = arith.cmpi eq, %arg1, %c0_i32 : i32
    %1 = arith.extui %0 : i1 to i32
    %c0_i32_0 = arith.constant 0 : i32
    %2 = arith.cmpi ne, %1, %c0_i32_0 : i32
    scf.if %2 {
      %cst_16 = arith.constant 0.000000e+00 : f32
      %21 = vector.broadcast %cst_16 : f32 to vector<16x32xf32>
      %c0_17 = arith.constant 0 : index
      %c0_18 = arith.constant 0 : index
      %22 = vector.load %arg10[%c0_17, %c0_18] : memref<16x32xf32, #tpu.memory_space<vmem>>, vector<16x32xf32>
      tpu.vector_store %arg10[%c0_17, %c0_18], %21 {strides = array<i32>} : memref<16x32xf32, #tpu.memory_space<vmem>>, vector<16x32xf32>,
    } else {
    }
    %c0 = arith.constant 0 : index
    %c0_1 = arith.constant 0 : index
    %3 = vector.load %arg2[%c0, %c0_1] : memref<16x32xf32, #tpu.memory_space<vmem>>, vector<16x32xf32>
    %4 = arith.truncf %3 : vector<16x32xf32> to vector<16x32xbf16>
    %c0_2 = arith.constant 0 : index
    %c0_3 = arith.constant 0 : index
    %5 = vector.load %arg3[%c0_2, %c0_3] : memref<32x64xbf16, #tpu.memory_space<vmem>>, vector<32x64xbf16>
    %cst = arith.constant dense<0.000000e+00> : vector<16x64xf32>
    %6 = tpu.matmul %4, %5, %cst {dimension_numbers = #tpu.dot_dimension_numbers<[1], [0], [0], [1], [0, 0, 1, 1], [], []>} : vector<16x32xbf16>, vector<32x64xbf16>, vector<16x64xf32> -> vector<16x64xf32>
    %c0_4 = arith.constant 0 : index
    %c0_5 = arith.constant 0 : index
    %7 = vector.load %arg4[%c0_4, %c0_5] : memref<1x64xf32, #tpu.memory_space<vmem>>, vector<1x64xf32>
    %8 = vector.broadcast %7 : vector<1x64xf32> to vector<16x64xf32>
    %9 = arith.addf %6, %8 : vector<16x64xf32>
    %cst_6 = arith.constant 0.000000e+00 : f32
    %10 = vector.broadcast %cst_6 : f32 to vector<16x64xf32>
    %11 = arith.maximumf %9, %10 : vector<16x64xf32>
    %c0_7 = arith.constant 0 : index
    %c0_8 = arith.constant 0 : index
    %12 = vector.load %arg10[%c0_7, %c0_8] : memref<16x32xf32, #tpu.memory_space<vmem>>, vector<16x32xf32>
    %13 = arith.truncf %11 : vector<16x64xf32> to vector<16x64xbf16>
    %c0_9 = arith.constant 0 : index
    %c0_10 = arith.constant 0 : index
    %14 = vector.load %arg5[%c0_9, %c0_10] : memref<64x32xbf16, #tpu.memory_space<vmem>>, vector<64x32xbf16>
    %cst_11 = arith.constant dense<0.000000e+00> : vector<16x32xf32>
    %15 = tpu.matmul %13, %14, %cst_11 {dimension_numbers = #tpu.dot_dimension_numbers<[1], [0], [0], [1], [0, 0, 1, 1], [], []>} : vector<16x64xbf16>, vector<64x32xbf16>, vector<16x32xf32> -> vector<16x32xf32>
    %16 = arith.addf %12, %15 : vector<16x32xf32>
    %c0_12 = arith.constant 0 : index
    %c0_13 = arith.constant 0 : index
    %17 = vector.load %arg10[%c0_12, %c0_13] : memref<16x32xf32, #tpu.memory_space<vmem>>, vector<16x32xf32>
    tpu.vector_store %arg10[%c0_12, %c0_13], %16 {strides = array<i32>} : memref<16x32xf32, #tpu.memory_space<vmem>>, vector<16x32xf32>,
    %c0_i32_14 = arith.constant 0 : i32
    %18 = arith.cmpi eq, %arg1, %c0_i32_14 : i32
    %19 = arith.extui %18 : i1 to i32
    %c0_i32_15 = arith.constant 0 : i32
    %20 = arith.cmpi ne, %19, %c0_i32_15 : i32
    scf.if %20 {
      %c0_16 = arith.constant 0 : index
      %c0_17 = arith.constant 0 : index
      %21 = vector.load %arg2[%c0_16, %c0_17] : memref<16x32xf32, #tpu.memory_space<vmem>>, vector<16x32xf32>
      %c0_18 = arith.constant 0 : index
      %c0_19 = arith.constant 0 : index
      %22 = vector.load %arg10[%c0_18, %c0_19] : memref<16x32xf32, #tpu.memory_space<vmem>>, vector<16x32xf32>
      %23 = arith.addf %21, %22 : vector<16x32xf32>
      %c0_20 = arith.constant 0 : index
      %c0_21 = arith.constant 0 : index
      %24 = vector.load %arg6[%c0_20, %c0_21] : memref<1x32xf32, #tpu.memory_space<vmem>>, vector<1x32xf32>
      %25 = vector.broadcast %24 : vector<1x32xf32> to vector<16x32xf32>
      %26 = arith.addf %23, %25 : vector<16x32xf32>
      %cst_22 = arith.constant dense<0.000000e+00> : vector<16xf32>
      %27 = vector.multi_reduction <add>, %26, %cst_22 [1] : vector<16x32xf32> to vector<16xf32>
      %28 = vector.shape_cast %27 : vector<16xf32> to vector<16x1xf32>
      %cst_23 = arith.constant 3.200000e+01 : f32
      %29 = vector.broadcast %cst_23 : f32 to vector<16x1xf32>
      %30 = arith.divf %28, %29 : vector<16x1xf32>
      %31 = vector.broadcast %30 : vector<16x1xf32> to vector<16x32xf32>
      %32 = arith.subf %26, %31 : vector<16x32xf32>
      %33 = arith.mulf %32, %32 : vector<16x32xf32>
      %cst_24 = arith.constant dense<0.000000e+00> : vector<16xf32>
      %34 = vector.multi_reduction <add>, %33, %cst_24 [1] : vector<16x32xf32> to vector<16xf32>
      %35 = vector.shape_cast %34 : vector<16xf32> to vector<16x1xf32>
      %cst_25 = arith.constant 3.200000e+01 : f32
      %36 = vector.broadcast %cst_25 : f32 to vector<16x1xf32>
      %37 = arith.divf %35, %36 : vector<16x1xf32>
      %cst_26 = arith.constant 9.99999974E-6 : f32
      %38 = vector.broadcast %cst_26 : f32 to vector<16x1xf32>
      %39 = arith.addf %37, %38 : vector<16x1xf32>
      %40 = math.rsqrt %39 : vector<16x1xf32>
      %41 = vector.broadcast %40 : vector<16x1xf32> to vector<16x32xf32>
      %42 = arith.mulf %32, %41 : vector<16x32xf32>
      %c0_27 = arith.constant 0 : index
      %c0_28 = arith.constant 0 : index
      %43 = vector.load %arg7[%c0_27, %c0_28] : memref<1x32xf32, #tpu.memory_space<vmem>>, vector<1x32xf32>
      %44 = vector.broadcast %43 : vector<1x32xf32> to vector<16x32xf32>
      %45 = arith.mulf %42, %44 : vector<16x32xf32>
      %c0_29 = arith.constant 0 : index
      %c0_30 = arith.constant 0 : index
      %46 = vector.load %arg8[%c0_29, %c0_30] : memref<1x32xf32, #tpu.memory_space<vmem>>, vector<1x32xf32>
      %47 = vector.broadcast %46 : vector<1x32xf32> to vector<16x32xf32>
      %48 = arith.addf %45, %47 : vector<16x32xf32>
      %c0_31 = arith.constant 0 : index
      %c0_32 = arith.constant 0 : index
      %49 = vector.load %arg9[%c0_31, %c0_32] : memref<16x32xf32, #tpu.memory_space<vmem>>, vector<16x32xf32>
      tpu.vector_store %arg9[%c0_31, %c0_32], %48 {strides = array<i32>} : memref<16x32xf32, #tpu.memory_space<vmem>>, vector<16x32xf32>,
    } else {
    }
    return
  }
  func.func @transform_0(%arg0: i32, %arg1: i32) -> (i32, i32) {
    %c0_i32 = arith.constant 0 : i32
    %c0_i32_0 = arith.constant 0 : i32
    return %arg0, %c0_i32 : i32, i32
  }
  func.func @transform_1(%arg0: i32, %arg1: i32) -> (i32, i32) {
    %c0_i32 = arith.constant 0 : i32
    %c0_i32_0 = arith.constant 0 : i32
    return %c0_i32, %arg1 : i32, i32
  }
  func.func @transform_2(%arg0: i32, %arg1: i32) -> (i32, i32) {
    %c0_i32 = arith.constant 0 : i32
    %c0_i32_0 = arith.constant 0 : i32
    return %c0_i32, %arg1 : i32, i32
  }
  func.func @transform_3(%arg0: i32, %arg1: i32) -> (i32, i32) {
    %c0_i32 = arith.constant 0 : i32
    %c0_i32_0 = arith.constant 0 : i32
    return %arg1, %c0_i32 : i32, i32
  }
  func.func @transform_4(%arg0: i32, %arg1: i32) -> (i32, i32) {
    %c0_i32 = arith.constant 0 : i32
    %c0_i32_0 = arith.constant 0 : i32
    %c0_i32_1 = arith.constant 0 : i32
    return %c0_i32, %c0_i32_0 : i32, i32
  }
  func.func @transform_5(%arg0: i32, %arg1: i32) -> (i32, i32) {
    %c0_i32 = arith.constant 0 : i32
    %c0_i32_0 = arith.constant 0 : i32
    %c0_i32_1 = arith.constant 0 : i32
    return %c0_i32, %c0_i32_0 : i32, i32
  }
  func.func @transform_6(%arg0: i32, %arg1: i32) -> (i32, i32) {
    %c0_i32 = arith.constant 0 : i32
    %c0_i32_0 = arith.constant 0 : i32
    %c0_i32_1 = arith.constant 0 : i32
    return %c0_i32, %c0_i32_0 : i32, i32
  }
  func.func @transform_7(%arg0: i32, %arg1: i32) -> (i32, i32) {
    %c0_i32 = arith.constant 0 : i32
    %c0_i32_0 = arith.constant 0 : i32
    return %arg0, %c0_i32 : i32, i32
  }
}

module attributes {stable_mosaic.version = 11 : i64} {
  func.func @_linear_kernel(%arg0: i32, %arg1: memref<16x32xf32, #tpu.memory_space<vmem>>, %arg2: memref<32x64xbf16, #tpu.memory_space<vmem>>, %arg3: memref<1x64xf32, #tpu.memory_space<vmem>>, %arg4: memref<16x64xbf16, #tpu.memory_space<vmem>>) attributes {dimension_semantics = [#tpu.dimension_semantics<parallel>], iteration_bounds = array<i64: 1>, scalar_prefetch = 0 : i64, scratch_operands = 0 : i64, tpu.core_type = #tpu.core_type<tc>, window_params = [{transform_indices = @transform_0, window_bounds = array<i64: 16, 32>}, {pipeline_mode = #tpu.pipeline_mode<synchronous>, transform_indices = @transform_1, window_bounds = array<i64: 32, 64>}, {pipeline_mode = #tpu.pipeline_mode<synchronous>, transform_indices = @transform_2, window_bounds = array<i64: 1, 64>}, {transform_indices = @transform_3, window_bounds = array<i64: 16, 64>}]} {
    %c0 = arith.constant 0 : index
    %c0_0 = arith.constant 0 : index
    %0 = vector.load %arg1[%c0, %c0_0] : memref<16x32xf32, #tpu.memory_space<vmem>>, vector<16x32xf32>
    %1 = arith.truncf %0 : vector<16x32xf32> to vector<16x32xbf16>
    %c0_1 = arith.constant 0 : index
    %c0_2 = arith.constant 0 : index
    %2 = vector.load %arg2[%c0_1, %c0_2] : memref<32x64xbf16, #tpu.memory_space<vmem>>, vector<32x64xbf16>
    %cst = arith.constant dense<0.000000e+00> : vector<16x64xf32>
    %3 = tpu.matmul %1, %2, %cst {dimension_numbers = #tpu.dot_dimension_numbers<[1], [0], [0], [1], [0, 0, 1, 1], [], []>} : vector<16x32xbf16>, vector<32x64xbf16>, vector<16x64xf32> -> vector<16x64xf32>
    %c0_3 = arith.constant 0 : index
    %c0_4 = arith.constant 0 : index
    %4 = vector.load %arg3[%c0_3, %c0_4] : memref<1x64xf32, #tpu.memory_space<vmem>>, vector<1x64xf32>
    %5 = vector.broadcast %4 : vector<1x64xf32> to vector<16x64xf32>
    %6 = arith.addf %3, %5 : vector<16x64xf32>
    %7 = arith.truncf %6 : vector<16x64xf32> to vector<16x64xbf16>
    %c0_5 = arith.constant 0 : index
    %c0_6 = arith.constant 0 : index
    %8 = vector.load %arg4[%c0_5, %c0_6] : memref<16x64xbf16, #tpu.memory_space<vmem>>, vector<16x64xbf16>
    tpu.vector_store %arg4[%c0_5, %c0_6], %7 {strides = array<i32>} : memref<16x64xbf16, #tpu.memory_space<vmem>>, vector<16x64xbf16>,
    return
  }
  func.func @transform_0(%arg0: i32) -> (i32, i32) {
    %c0_i32 = arith.constant 0 : i32
    %c0_i32_0 = arith.constant 0 : i32
    return %arg0, %c0_i32 : i32, i32
  }
  func.func @transform_1(%arg0: i32) -> (i32, i32) {
    %c0_i32 = arith.constant 0 : i32
    %c0_i32_0 = arith.constant 0 : i32
    %c0_i32_1 = arith.constant 0 : i32
    return %c0_i32, %c0_i32_0 : i32, i32
  }
  func.func @transform_2(%arg0: i32) -> (i32, i32) {
    %c0_i32 = arith.constant 0 : i32
    %c0_i32_0 = arith.constant 0 : i32
    %c0_i32_1 = arith.constant 0 : i32
    return %c0_i32, %c0_i32_0 : i32, i32
  }
  func.func @transform_3(%arg0: i32) -> (i32, i32) {
    %c0_i32 = arith.constant 0 : i32
    %c0_i32_0 = arith.constant 0 : i32
    return %arg0, %c0_i32 : i32, i32
  }
}

module attributes {stable_mosaic.version = 11 : i64} {
  func.func @_ln_kernel(%arg0: i32, %arg1: memref<16x32xf32, #tpu.memory_space<vmem>>, %arg2: memref<1x32xf32, #tpu.memory_space<vmem>>, %arg3: memref<1x32xf32, #tpu.memory_space<vmem>>, %arg4: memref<16x32xf32, #tpu.memory_space<vmem>>) attributes {dimension_semantics = [#tpu.dimension_semantics<parallel>], iteration_bounds = array<i64: 1>, scalar_prefetch = 0 : i64, scratch_operands = 0 : i64, tpu.core_type = #tpu.core_type<tc>, window_params = [{transform_indices = @transform_0, window_bounds = array<i64: 16, 32>}, {pipeline_mode = #tpu.pipeline_mode<synchronous>, transform_indices = @transform_1, window_bounds = array<i64: 1, 32>}, {pipeline_mode = #tpu.pipeline_mode<synchronous>, transform_indices = @transform_2, window_bounds = array<i64: 1, 32>}, {transform_indices = @transform_3, window_bounds = array<i64: 16, 32>}]} {
    %c0 = arith.constant 0 : index
    %c0_0 = arith.constant 0 : index
    %0 = vector.load %arg1[%c0, %c0_0] : memref<16x32xf32, #tpu.memory_space<vmem>>, vector<16x32xf32>
    %cst = arith.constant dense<0.000000e+00> : vector<16xf32>
    %1 = vector.multi_reduction <add>, %0, %cst [1] : vector<16x32xf32> to vector<16xf32>
    %2 = vector.shape_cast %1 : vector<16xf32> to vector<16x1xf32>
    %cst_1 = arith.constant 3.200000e+01 : f32
    %3 = vector.broadcast %cst_1 : f32 to vector<16x1xf32>
    %4 = arith.divf %2, %3 : vector<16x1xf32>
    %5 = vector.broadcast %4 : vector<16x1xf32> to vector<16x32xf32>
    %6 = arith.subf %0, %5 : vector<16x32xf32>
    %7 = arith.mulf %6, %6 : vector<16x32xf32>
    %cst_2 = arith.constant dense<0.000000e+00> : vector<16xf32>
    %8 = vector.multi_reduction <add>, %7, %cst_2 [1] : vector<16x32xf32> to vector<16xf32>
    %9 = vector.shape_cast %8 : vector<16xf32> to vector<16x1xf32>
    %cst_3 = arith.constant 3.200000e+01 : f32
    %10 = vector.broadcast %cst_3 : f32 to vector<16x1xf32>
    %11 = arith.divf %9, %10 : vector<16x1xf32>
    %cst_4 = arith.constant 9.99999974E-6 : f32
    %12 = vector.broadcast %cst_4 : f32 to vector<16x1xf32>
    %13 = arith.addf %11, %12 : vector<16x1xf32>
    %14 = math.rsqrt %13 : vector<16x1xf32>
    %15 = vector.broadcast %14 : vector<16x1xf32> to vector<16x32xf32>
    %16 = arith.mulf %6, %15 : vector<16x32xf32>
    %c0_5 = arith.constant 0 : index
    %c0_6 = arith.constant 0 : index
    %17 = vector.load %arg2[%c0_5, %c0_6] : memref<1x32xf32, #tpu.memory_space<vmem>>, vector<1x32xf32>
    %18 = vector.broadcast %17 : vector<1x32xf32> to vector<16x32xf32>
    %19 = arith.mulf %16, %18 : vector<16x32xf32>
    %c0_7 = arith.constant 0 : index
    %c0_8 = arith.constant 0 : index
    %20 = vector.load %arg3[%c0_7, %c0_8] : memref<1x32xf32, #tpu.memory_space<vmem>>, vector<1x32xf32>
    %21 = vector.broadcast %20 : vector<1x32xf32> to vector<16x32xf32>
    %22 = arith.addf %19, %21 : vector<16x32xf32>
    %c0_9 = arith.constant 0 : index
    %c0_10 = arith.constant 0 : index
    %23 = vector.load %arg4[%c0_9, %c0_10] : memref<16x32xf32, #tpu.memory_space<vmem>>, vector<16x32xf32>
    tpu.vector_store %arg4[%c0_9, %c0_10], %22 {strides = array<i32>} : memref<16x32xf32, #tpu.memory_space<vmem>>, vector<16x32xf32>,
    return
  }
  func.func @transform_0(%arg0: i32) -> (i32, i32) {
    %c0_i32 = arith.constant 0 : i32
    %c0_i32_0 = arith.constant 0 : i32
    return %arg0, %c0_i32 : i32, i32
  }
  func.func @transform_1(%arg0: i32) -> (i32, i32) {
    %c0_i32 = arith.constant 0 : i32
    %c0_i32_0 = arith.constant 0 : i32
    %c0_i32_1 = arith.constant 0 : i32
    return %c0_i32, %c0_i32_0 : i32, i32
  }
  func.func @transform_2(%arg0: i32) -> (i32, i32) {
    %c0_i32 = arith.constant 0 : i32
    %c0_i32_0 = arith.constant 0 : i32
    %c0_i32_1 = arith.constant 0 : i32
    return %c0_i32, %c0_i32_0 : i32, i32
  }
  func.func @transform_3(%arg0: i32) -> (i32, i32) {
    %c0_i32 = arith.constant 0 : i32
    %c0_i32_0 = arith.constant 0 : i32
    return %arg0, %c0_i32 : i32, i32
  }
}

module attributes {stable_mosaic.version = 11 : i64} {
  func.func @_attn_block_kernel(%arg0: i32, %arg1: i32, %arg2: memref<1x8x32xf32, #tpu.memory_space<vmem>>, %arg3: memref<1x8x64xbf16, #tpu.memory_space<vmem>>, %arg4: memref<32x32xbf16, #tpu.memory_space<vmem>>, %arg5: memref<1x32xf32, #tpu.memory_space<vmem>>, %arg6: memref<32x32xbf16, #tpu.memory_space<vmem>>, %arg7: memref<1x32xf32, #tpu.memory_space<vmem>>, %arg8: memref<1x32xf32, #tpu.memory_space<vmem>>, %arg9: memref<1x32xf32, #tpu.memory_space<vmem>>, %arg10: memref<1x8x32xf32, #tpu.memory_space<vmem>>) attributes {dimension_semantics = [#tpu.dimension_semantics<parallel>, #tpu.dimension_semantics<parallel>], iteration_bounds = array<i64: 2, 1>, scalar_prefetch = 0 : i64, scratch_operands = 0 : i64, tpu.core_type = #tpu.core_type<tc>, window_params = [{transform_indices = @transform_0, window_bounds = array<i64: 1, 8, 32>}, {transform_indices = @transform_1, window_bounds = array<i64: 1, 8, 64>}, {pipeline_mode = #tpu.pipeline_mode<synchronous>, transform_indices = @transform_2, window_bounds = array<i64: 32, 32>}, {pipeline_mode = #tpu.pipeline_mode<synchronous>, transform_indices = @transform_3, window_bounds = array<i64: 1, 32>}, {pipeline_mode = #tpu.pipeline_mode<synchronous>, transform_indices = @transform_4, window_bounds = array<i64: 32, 32>}, {pipeline_mode = #tpu.pipeline_mode<synchronous>, transform_indices = @transform_5, window_bounds = array<i64: 1, 32>}, {pipeline_mode = #tpu.pipeline_mode<synchronous>, transform_indices = @transform_6, window_bounds = array<i64: 1, 32>}, {pipeline_mode = #tpu.pipeline_mode<synchronous>, transform_indices = @transform_7, window_bounds = array<i64: 1, 32>}, {transform_indices = @transform_8, window_bounds = array<i64: 1, 8, 32>}]} {
    %c0 = arith.constant 0 : index
    %c0_0 = arith.constant 0 : index
    %c0_1 = arith.constant 0 : index
    %0 = vector.load %arg2[%c0, %c0_0, %c0_1] : memref<1x8x32xf32, #tpu.memory_space<vmem>>, vector<1x8x32xf32>
    %1 = vector.shape_cast %0 : vector<1x8x32xf32> to vector<8x32xf32>
    %2 = arith.truncf %1 : vector<8x32xf32> to vector<8x32xbf16>
    %c0_2 = arith.constant 0 : index
    %c0_3 = arith.constant 0 : index
    %3 = vector.load %arg4[%c0_2, %c0_3] : memref<32x32xbf16, #tpu.memory_space<vmem>>, vector<32x32xbf16>
    %cst = arith.constant dense<0.000000e+00> : vector<8x32xf32>
    %4 = tpu.matmul %2, %3, %cst {dimension_numbers = #tpu.dot_dimension_numbers<[1], [0], [0], [1], [0, 0, 1, 1], [], []>} : vector<8x32xbf16>, vector<32x32xbf16>, vector<8x32xf32> -> vector<8x32xf32>
    %c0_4 = arith.constant 0 : index
    %c0_5 = arith.constant 0 : index
    %5 = vector.load %arg5[%c0_4, %c0_5] : memref<1x32xf32, #tpu.memory_space<vmem>>, vector<1x32xf32>
    %6 = vector.broadcast %5 : vector<1x32xf32> to vector<8x32xf32>
    %7 = arith.addf %4, %6 : vector<8x32xf32>
    %8 = arith.truncf %7 : vector<8x32xf32> to vector<8x32xbf16>
    %c0_6 = arith.constant 0 : index
    %c0_7 = arith.constant 0 : index
    %c0_8 = arith.constant 0 : index
    %9 = vector.load %arg3[%c0_6, %c0_7, %c0_8] : memref<1x8x64xbf16, #tpu.memory_space<vmem>>, vector<1x8x64xbf16>
    %10 = vector.shape_cast %9 : vector<1x8x64xbf16> to vector<8x64xbf16>
    %11 = vector.extract_strided_slice %8 {offsets = [0, 0], sizes = [8, 8], strides = [1, 1]} : vector<8x32xbf16> to vector<8x8xbf16>
    %12 = vector.extract_strided_slice %10 {offsets = [0, 0], sizes = [8, 8], strides = [1, 1]} : vector<8x64xbf16> to vector<8x8xbf16>
    %13 = vector.extract_strided_slice %10 {offsets = [0, 32], sizes = [8, 8], strides = [1, 1]} : vector<8x64xbf16> to vector<8x8xbf16>
    %cst_9 = arith.constant dense<0.000000e+00> : vector<8x8xf32>
    %14 = tpu.matmul %11, %12, %cst_9 {dimension_numbers = #tpu.dot_dimension_numbers<[1], [1], [0], [0], [0, 0, 1, 0], [], []>} : vector<8x8xbf16>, vector<8x8xbf16>, vector<8x8xf32> -> vector<8x8xf32>
    %cst_10 = arith.constant dense<0xFF800000> : vector<8xf32>
    %15 = vector.multi_reduction <maximumf>, %14, %cst_10 [1] : vector<8x8xf32> to vector<8xf32>
    %16 = vector.shape_cast %15 : vector<8xf32> to vector<8x1xf32>
    %17 = vector.broadcast %16 : vector<8x1xf32> to vector<8x8xf32>
    %18 = arith.subf %14, %17 : vector<8x8xf32>
    %19 = math.exp %18 : vector<8x8xf32>
    %cst_11 = arith.constant dense<0.000000e+00> : vector<8xf32>
    %20 = vector.multi_reduction <add>, %19, %cst_11 [1] : vector<8x8xf32> to vector<8xf32>
    %21 = vector.shape_cast %20 : vector<8xf32> to vector<8x1xf32>
    %22 = tpu.reciprocal %21 {approx = true} : vector<8x1xf32> -> vector<8x1xf32>
    %23 = vector.broadcast %22 : vector<8x1xf32> to vector<8x8xf32>
    %24 = arith.mulf %19, %23 : vector<8x8xf32>
    %25 = arith.truncf %24 : vector<8x8xf32> to vector<8x8xbf16>
    %cst_12 = arith.constant dense<0.000000e+00> : vector<8x8xf32>
    %26 = tpu.matmul %25, %13, %cst_12 {dimension_numbers = #tpu.dot_dimension_numbers<[1], [0], [0], [1], [0, 0, 1, 1], [], []>} : vector<8x8xbf16>, vector<8x8xbf16>, vector<8x8xf32> -> vector<8x8xf32>
    %27 = vector.extract_strided_slice %8 {offsets = [0, 8], sizes = [8, 8], strides = [1, 1]} : vector<8x32xbf16> to vector<8x8xbf16>
    %28 = vector.extract_strided_slice %10 {offsets = [0, 8], sizes = [8, 8], strides = [1, 1]} : vector<8x64xbf16> to vector<8x8xbf16>
    %29 = vector.extract_strided_slice %10 {offsets = [0, 40], sizes = [8, 8], strides = [1, 1]} : vector<8x64xbf16> to vector<8x8xbf16>
    %cst_13 = arith.constant dense<0.000000e+00> : vector<8x8xf32>
    %30 = tpu.matmul %27, %28, %cst_13 {dimension_numbers = #tpu.dot_dimension_numbers<[1], [1], [0], [0], [0, 0, 1, 0], [], []>} : vector<8x8xbf16>, vector<8x8xbf16>, vector<8x8xf32> -> vector<8x8xf32>
    %cst_14 = arith.constant dense<0xFF800000> : vector<8xf32>
    %31 = vector.multi_reduction <maximumf>, %30, %cst_14 [1] : vector<8x8xf32> to vector<8xf32>
    %32 = vector.shape_cast %31 : vector<8xf32> to vector<8x1xf32>
    %33 = vector.broadcast %32 : vector<8x1xf32> to vector<8x8xf32>
    %34 = arith.subf %30, %33 : vector<8x8xf32>
    %35 = math.exp %34 : vector<8x8xf32>
    %cst_15 = arith.constant dense<0.000000e+00> : vector<8xf32>
    %36 = vector.multi_reduction <add>, %35, %cst_15 [1] : vector<8x8xf32> to vector<8xf32>
    %37 = vector.shape_cast %36 : vector<8xf32> to vector<8x1xf32>
    %38 = tpu.reciprocal %37 {approx = true} : vector<8x1xf32> -> vector<8x1xf32>
    %39 = vector.broadcast %38 : vector<8x1xf32> to vector<8x8xf32>
    %40 = arith.mulf %35, %39 : vector<8x8xf32>
    %41 = arith.truncf %40 : vector<8x8xf32> to vector<8x8xbf16>
    %cst_16 = arith.constant dense<0.000000e+00> : vector<8x8xf32>
    %42 = tpu.matmul %41, %29, %cst_16 {dimension_numbers = #tpu.dot_dimension_numbers<[1], [0], [0], [1], [0, 0, 1, 1], [], []>} : vector<8x8xbf16>, vector<8x8xbf16>, vector<8x8xf32> -> vector<8x8xf32>
    %43 = vector.extract_strided_slice %8 {offsets = [0, 16], sizes = [8, 8], strides = [1, 1]} : vector<8x32xbf16> to vector<8x8xbf16>
    %44 = vector.extract_strided_slice %10 {offsets = [0, 16], sizes = [8, 8], strides = [1, 1]} : vector<8x64xbf16> to vector<8x8xbf16>
    %45 = vector.extract_strided_slice %10 {offsets = [0, 48], sizes = [8, 8], strides = [1, 1]} : vector<8x64xbf16> to vector<8x8xbf16>
    %cst_17 = arith.constant dense<0.000000e+00> : vector<8x8xf32>
    %46 = tpu.matmul %43, %44, %cst_17 {dimension_numbers = #tpu.dot_dimension_numbers<[1], [1], [0], [0], [0, 0, 1, 0], [], []>} : vector<8x8xbf16>, vector<8x8xbf16>, vector<8x8xf32> -> vector<8x8xf32>
    %cst_18 = arith.constant dense<0xFF800000> : vector<8xf32>
    %47 = vector.multi_reduction <maximumf>, %46, %cst_18 [1] : vector<8x8xf32> to vector<8xf32>
    %48 = vector.shape_cast %47 : vector<8xf32> to vector<8x1xf32>
    %49 = vector.broadcast %48 : vector<8x1xf32> to vector<8x8xf32>
    %50 = arith.subf %46, %49 : vector<8x8xf32>
    %51 = math.exp %50 : vector<8x8xf32>
    %cst_19 = arith.constant dense<0.000000e+00> : vector<8xf32>
    %52 = vector.multi_reduction <add>, %51, %cst_19 [1] : vector<8x8xf32> to vector<8xf32>
    %53 = vector.shape_cast %52 : vector<8xf32> to vector<8x1xf32>
    %54 = tpu.reciprocal %53 {approx = true} : vector<8x1xf32> -> vector<8x1xf32>
    %55 = vector.broadcast %54 : vector<8x1xf32> to vector<8x8xf32>
    %56 = arith.mulf %51, %55 : vector<8x8xf32>
    %57 = arith.truncf %56 : vector<8x8xf32> to vector<8x8xbf16>
    %cst_20 = arith.constant dense<0.000000e+00> : vector<8x8xf32>
    %58 = tpu.matmul %57, %45, %cst_20 {dimension_numbers = #tpu.dot_dimension_numbers<[1], [0], [0], [1], [0, 0, 1, 1], [], []>} : vector<8x8xbf16>, vector<8x8xbf16>, vector<8x8xf32> -> vector<8x8xf32>
    %59 = vector.extract_strided_slice %8 {offsets = [0, 24], sizes = [8, 8], strides = [1, 1]} : vector<8x32xbf16> to vector<8x8xbf16>
    %60 = vector.extract_strided_slice %10 {offsets = [0, 24], sizes = [8, 8], strides = [1, 1]} : vector<8x64xbf16> to vector<8x8xbf16>
    %61 = vector.extract_strided_slice %10 {offsets = [0, 56], sizes = [8, 8], strides = [1, 1]} : vector<8x64xbf16> to vector<8x8xbf16>
    %cst_21 = arith.constant dense<0.000000e+00> : vector<8x8xf32>
    %62 = tpu.matmul %59, %60, %cst_21 {dimension_numbers = #tpu.dot_dimension_numbers<[1], [1], [0], [0], [0, 0, 1, 0], [], []>} : vector<8x8xbf16>, vector<8x8xbf16>, vector<8x8xf32> -> vector<8x8xf32>
    %cst_22 = arith.constant dense<0xFF800000> : vector<8xf32>
    %63 = vector.multi_reduction <maximumf>, %62, %cst_22 [1] : vector<8x8xf32> to vector<8xf32>
    %64 = vector.shape_cast %63 : vector<8xf32> to vector<8x1xf32>
    %65 = vector.broadcast %64 : vector<8x1xf32> to vector<8x8xf32>
    %66 = arith.subf %62, %65 : vector<8x8xf32>
    %67 = math.exp %66 : vector<8x8xf32>
    %cst_23 = arith.constant dense<0.000000e+00> : vector<8xf32>
    %68 = vector.multi_reduction <add>, %67, %cst_23 [1] : vector<8x8xf32> to vector<8xf32>
    %69 = vector.shape_cast %68 : vector<8xf32> to vector<8x1xf32>
    %70 = tpu.reciprocal %69 {approx = true} : vector<8x1xf32> -> vector<8x1xf32>
    %71 = vector.broadcast %70 : vector<8x1xf32> to vector<8x8xf32>
    %72 = arith.mulf %67, %71 : vector<8x8xf32>
    %73 = arith.truncf %72 : vector<8x8xf32> to vector<8x8xbf16>
    %cst_24 = arith.constant dense<0.000000e+00> : vector<8x8xf32>
    %74 = tpu.matmul %73, %61, %cst_24 {dimension_numbers = #tpu.dot_dimension_numbers<[1], [0], [0], [1], [0, 0, 1, 1], [], []>} : vector<8x8xbf16>, vector<8x8xbf16>, vector<8x8xf32> -> vector<8x8xf32>
    %75 = tpu.concatenate %26, %42, %58, %74 in 1 : vector<8x8xf32>, vector<8x8xf32>, vector<8x8xf32>, vector<8x8xf32> -> vector<8x32xf32>
    %76 = arith.truncf %75 : vector<8x32xf32> to vector<8x32xbf16>
    %c0_25 = arith.constant 0 : index
    %c0_26 = arith.constant 0 : index
    %77 = vector.load %arg6[%c0_25, %c0_26] : memref<32x32xbf16, #tpu.memory_space<vmem>>, vector<32x32xbf16>
    %cst_27 = arith.constant dense<0.000000e+00> : vector<8x32xf32>
    %78 = tpu.matmul %76, %77, %cst_27 {dimension_numbers = #tpu.dot_dimension_numbers<[1], [0], [0], [1], [0, 0, 1, 1], [], []>} : vector<8x32xbf16>, vector<32x32xbf16>, vector<8x32xf32> -> vector<8x32xf32>
    %c0_28 = arith.constant 0 : index
    %c0_29 = arith.constant 0 : index
    %79 = vector.load %arg7[%c0_28, %c0_29] : memref<1x32xf32, #tpu.memory_space<vmem>>, vector<1x32xf32>
    %80 = vector.broadcast %79 : vector<1x32xf32> to vector<8x32xf32>
    %81 = arith.addf %78, %80 : vector<8x32xf32>
    %82 = arith.addf %1, %81 : vector<8x32xf32>
    %cst_30 = arith.constant dense<0.000000e+00> : vector<8xf32>
    %83 = vector.multi_reduction <add>, %82, %cst_30 [1] : vector<8x32xf32> to vector<8xf32>
    %84 = vector.shape_cast %83 : vector<8xf32> to vector<8x1xf32>
    %cst_31 = arith.constant 3.200000e+01 : f32
    %85 = vector.broadcast %cst_31 : f32 to vector<8x1xf32>
    %86 = arith.divf %84, %85 : vector<8x1xf32>
    %87 = vector.broadcast %86 : vector<8x1xf32> to vector<8x32xf32>
    %88 = arith.subf %82, %87 : vector<8x32xf32>
    %89 = arith.mulf %88, %88 : vector<8x32xf32>
    %cst_32 = arith.constant dense<0.000000e+00> : vector<8xf32>
    %90 = vector.multi_reduction <add>, %89, %cst_32 [1] : vector<8x32xf32> to vector<8xf32>
    %91 = vector.shape_cast %90 : vector<8xf32> to vector<8x1xf32>
    %cst_33 = arith.constant 3.200000e+01 : f32
    %92 = vector.broadcast %cst_33 : f32 to vector<8x1xf32>
    %93 = arith.divf %91, %92 : vector<8x1xf32>
    %cst_34 = arith.constant 9.99999974E-6 : f32
    %94 = vector.broadcast %cst_34 : f32 to vector<8x1xf32>
    %95 = arith.addf %93, %94 : vector<8x1xf32>
    %96 = math.rsqrt %95 : vector<8x1xf32>
    %97 = vector.broadcast %96 : vector<8x1xf32> to vector<8x32xf32>
    %98 = arith.mulf %88, %97 : vector<8x32xf32>
    %c0_35 = arith.constant 0 : index
    %c0_36 = arith.constant 0 : index
    %99 = vector.load %arg8[%c0_35, %c0_36] : memref<1x32xf32, #tpu.memory_space<vmem>>, vector<1x32xf32>
    %100 = vector.broadcast %99 : vector<1x32xf32> to vector<8x32xf32>
    %101 = arith.mulf %98, %100 : vector<8x32xf32>
    %c0_37 = arith.constant 0 : index
    %c0_38 = arith.constant 0 : index
    %102 = vector.load %arg9[%c0_37, %c0_38] : memref<1x32xf32, #tpu.memory_space<vmem>>, vector<1x32xf32>
    %103 = vector.broadcast %102 : vector<1x32xf32> to vector<8x32xf32>
    %104 = arith.addf %101, %103 : vector<8x32xf32>
    %c0_39 = arith.constant 0 : index
    %c0_40 = arith.constant 0 : index
    %c0_41 = arith.constant 0 : index
    %105 = vector.load %arg10[%c0_39, %c0_40, %c0_41] : memref<1x8x32xf32, #tpu.memory_space<vmem>>, vector<1x8x32xf32>
    %106 = vector.shape_cast %105 : vector<1x8x32xf32> to vector<8x32xf32>
    %107 = vector.shape_cast %104 : vector<8x32xf32> to vector<1x8x32xf32>
    tpu.vector_store %arg10[%c0_39, %c0_40, %c0_41], %107 {strides = array<i32>} : memref<1x8x32xf32, #tpu.memory_space<vmem>>, vector<1x8x32xf32>,
    return
  }
  func.func @transform_0(%arg0: i32, %arg1: i32) -> (i32, i32, i32) {
    %c0_i32 = arith.constant 0 : i32
    %c0_i32_0 = arith.constant 0 : i32
    return %arg0, %arg1, %c0_i32 : i32, i32, i32
  }
  func.func @transform_1(%arg0: i32, %arg1: i32) -> (i32, i32, i32) {
    %c0_i32 = arith.constant 0 : i32
    %c0_i32_0 = arith.constant 0 : i32
    %c0_i32_1 = arith.constant 0 : i32
    return %arg0, %c0_i32, %c0_i32_0 : i32, i32, i32
  }
  func.func @transform_2(%arg0: i32, %arg1: i32) -> (i32, i32) {
    %c0_i32 = arith.constant 0 : i32
    %c0_i32_0 = arith.constant 0 : i32
    %c0_i32_1 = arith.constant 0 : i32
    return %c0_i32, %c0_i32_0 : i32, i32
  }
  func.func @transform_3(%arg0: i32, %arg1: i32) -> (i32, i32) {
    %c0_i32 = arith.constant 0 : i32
    %c0_i32_0 = arith.constant 0 : i32
    %c0_i32_1 = arith.constant 0 : i32
    return %c0_i32, %c0_i32_0 : i32, i32
  }
  func.func @transform_4(%arg0: i32, %arg1: i32) -> (i32, i32) {
    %c0_i32 = arith.constant 0 : i32
    %c0_i32_0 = arith.constant 0 : i32
    %c0_i32_1 = arith.constant 0 : i32
    return %c0_i32, %c0_i32_0 : i32, i32
  }
  func.func @transform_5(%arg0: i32, %arg1: i32) -> (i32, i32) {
    %c0_i32 = arith.constant 0 : i32
    %c0_i32_0 = arith.constant 0 : i32
    %c0_i32_1 = arith.constant 0 : i32
    return %c0_i32, %c0_i32_0 : i32, i32
  }
  func.func @transform_6(%arg0: i32, %arg1: i32) -> (i32, i32) {
    %c0_i32 = arith.constant 0 : i32
    %c0_i32_0 = arith.constant 0 : i32
    %c0_i32_1 = arith.constant 0 : i32
    return %c0_i32, %c0_i32_0 : i32, i32
  }
  func.func @transform_7(%arg0: i32, %arg1: i32) -> (i32, i32) {
    %c0_i32 = arith.constant 0 : i32
    %c0_i32_0 = arith.constant 0 : i32
    %c0_i32_1 = arith.constant 0 : i32
    return %c0_i32, %c0_i32_0 : i32, i32
  }
  func.func @transform_8(%arg0: i32, %arg1: i32) -> (i32, i32, i32) {
    %c0_i32 = arith.constant 0 : i32
    %c0_i32_0 = arith.constant 0 : i32
    return %arg0, %arg1, %c0_i32 : i32, i32, i32
  }
}

</mosaic_0001>

<llo_original>
// kernel: checkpoint.10
$region0: #{checkpoint.10}
  #allocation0 [shape = 'u32[]', space=smem, size = 0x4, offset = 0x4, fixed_abs, tag = 'smem constant byte address 0x4 - core index']
  #allocation1 [shape = 'u32[72,128]{1,0:T(1,128)}', space=vmem, size = 0x9000, scoped, tag = 'internal scratch']
  %s0 = inlined_call_operand.vmem [shape: f32[16,32], index: 0, kind: input, shape index: {}]
  %s1 = inlined_call_operand.hbm [shape: bf16[32,64], index: 1, kind: input, shape index: {}]
  %s2 = inlined_call_operand.vmem [shape: f32[1,64], index: 2, kind: input, shape index: {}]
  %s3 = inlined_call_operand.vmem [shape: bf16[16,64], index: 3, kind: output, shape index: {}]
  %s4 = sld [smem:[#allocation0]]
  $region26: #{checkpoint.10} parent=0
    _
  %s6 = ssub.s32 1, %s4
  %s7 = scalar_select 0, %s6, %s4
  $region1: #{checkpoint.10} parent=0
    #allocation2 [shape = 'u8[8192]{0}', space=vmem, size = 0x2000, scoped, tag = 'input window, operand 1, single buffered']
    #allocation3 [shape = 's32[1]{0}', space=sflag, size = 0x4, scoped, tag = 'scoped memory for checkpoint.10']
    %8 = vsyncpa [#allocation3], 0
    // Predicated region
    $region2: #{checkpoint.10} parent=1 // pred_check
      _
    $region3: #{checkpoint.10} parent=1 // pred_check_branch
      %10 = sbr.rel (0) target = $region5
    $region4: #{checkpoint.10} parent=1 // pred_region
      _
    $region5: #{checkpoint.10} parent=1 // pred_fallthru
      _
    // Predicated region
    $region6: #{checkpoint.10} parent=1 // pred_check
      _
    $region7: #{checkpoint.10} parent=1 // pred_check_branch
      %12 = sbr.rel (0) target = $region9
    $region8: #{checkpoint.10} parent=1 // pred_region
      %14 = vsyncadd [#allocation3], 0
      %s15 = sshll.u32 %s1, 4
      %s16 = int_to_ptr.hbm [resolvable:$true] %s15
      %s17 = sshll.u32 [#allocation2], 4
      %s18 = int_to_ptr.vmem [resolvable:$true] %s17
      %23 = dma.hbm_to_vmem [thread:$0]  %s16, 256, %s18, [#allocation3], 64, 64, 4
    $region9: #{checkpoint.10} parent=1 // pred_fallthru
      _
    // Predicated region
    $region10: #{checkpoint.10} parent=1 // pred_check
      _
    $region11: #{checkpoint.10} parent=1 // pred_check_branch
      %25 = sbr.rel (0) target = $region13
    $region12: #{checkpoint.10} parent=1 // pred_region
      _
    $region13: #{checkpoint.10} parent=1 // pred_fallthru
      _
    // Predicated region
    $region14: #{checkpoint.10} parent=1 // pred_check
      _
    $region15: #{checkpoint.10} parent=1 // pred_check_branch
      %27 = sbr.rel (0) target = $region17
    $region16: #{checkpoint.10} parent=1 // pred_region
      %29 = dma.done [#allocation3], 256
    $region17: #{checkpoint.10} parent=1 // pred_fallthru
      _
    %v31 = vld [vmem:[%s0] sm:$0xff]
    %v32 = vld [vmem:[%s0 + $0x8] sm:$0xff]
    %v33 = vpack.c.bf16 %v32, %v31
    %v34 = vld [vmem:[#allocation2] sm:$0xf]
    %v35 = vld [vmem:[#allocation2 + $0x4] sm:$0xf]
    %v36 = vld [vmem:[#allocation2 + $0x8] sm:$0xf]
    %v37 = vld [vmem:[#allocation2 + $0xc] sm:$0xf]
    %v38 = vld [vmem:[%s2] sm:$0x1]
    %v40 = vperm.slane %v38, 0
    %v46 = vunpack.c.l.b16 %v34
    %v47 = vunpack.c.l.b16 %v35
    %v48 = vunpack.c.l.b16 %v36
    %v49 = vunpack.c.l.b16 %v37
    %v50 = vpack.c.b16 %v47, %v46
    %v51 = vpack.c.b16 %v49, %v48
    %vm54 = vcmask 261120
    %v56 = vsel %vm54, %v33, 0
    %58 = vmatpush.bf16.msra.mxu0 0
    %59 = vmatpush.bf16.msra.mxu0 0
    %60 = vmatpush.bf16.msra.mxu0 0
    %61 = vmatpush.bf16.msra.mxu0 0
    %62 = vmatpush.bf16.msra.mxu0 0
    %63 = vmatpush.bf16.msra.mxu0 0
    %64 = vmatpush.bf16.msra.mxu0 %v51
    %65 = vmatpush.bf16.msra.mxu0 %v50
    %66 = vmatmul.bf16.gmra.mxu0 %v56
    %v67 = vpop.f32.mrf.mxu0
    %v68 = vadd.f32 %v40, %v67
    %v69 = vpop.f32.mrf.mxu0
    %v70 = vadd.f32 %v40, %v69
    %71 = vdwg.mxu0
    %v72 = vpack.c.bf16 %v68, %v68
    %v73 = vpack.c.bf16 %v70, %v70
    %vm74 = vcmask 519168
    %75 = vst.msk [vmem:[%s3] sm:$0xf] %vm74, %v72
    %76 = vst.msk [vmem:[%s3 + $0x4] sm:$0xf] %vm74, %v73
    // Predicated region
    $region18: #{checkpoint.10} parent=1 // pred_check
      _
    $region19: #{checkpoint.10} parent=1 // pred_check_branch
      %78 = sbr.rel (0) target = $region21
    $region20: #{checkpoint.10} parent=1 // pred_region
      _
    $region21: #{checkpoint.10} parent=1 // pred_fallthru
      _
    // Predicated region
    $region22: #{checkpoint.10} parent=1 // pred_check
      _
    $region23: #{checkpoint.10} parent=1 // pred_check_branch
      %80 = sbr.rel (0) target = $region25
    $region24: #{checkpoint.10} parent=1 // pred_region
      _
    $region25: #{checkpoint.10} parent=1 // pred_fallthru
      _
    %81 = vsyncpa [#allocation3], 1

// kernel: checkpoint.17
$region0: #{checkpoint.17}
  #allocation0 [shape = 'u32[]', space=smem, size = 0x4, offset = 0x4, fixed_abs, tag = 'smem constant byte address 0x4 - core index']
  #allocation1 [shape = 'u32[72,128]{1,0:T(1,128)}', space=vmem, size = 0x9000, scoped, tag = 'internal scratch']
  %s0 = inlined_call_operand.vmem [shape: f32[20,32], index: 0, kind: input, shape index: {}]
  %s1 = inlined_call_operand.hbm [shape: bf16[32,64], index: 1, kind: input, shape index: {}]
  %s2 = inlined_call_operand.vmem [shape: f32[1,64], index: 2, kind: input, shape index: {}]
  %s3 = inlined_call_operand.vmem [shape: bf16[20,64], index: 3, kind: output, shape index: {}]
  %s4 = sld [smem:[#allocation0]]
  $region26: #{checkpoint.17} parent=0
    _
  %s6 = ssub.s32 1, %s4
  %s7 = scalar_select 0, %s6, %s4
  $region1: #{checkpoint.17} parent=0
    #allocation2 [shape = 'u8[8192]{0}', space=vmem, size = 0x2000, scoped, tag = 'input window, operand 1, single buffered']
    #allocation3 [shape = 's32[1]{0}', space=sflag, size = 0x4, scoped, tag = 'scoped memory for checkpoint.17']
    %8 = vsyncpa [#allocation3], 0
    // Predicated region
    $region2: #{checkpoint.17} parent=1 // pred_check
      _
    $region3: #{checkpoint.17} parent=1 // pred_check_branch
      %10 = sbr.rel (0) target = $region5
    $region4: #{checkpoint.17} parent=1 // pred_region
      _
    $region5: #{checkpoint.17} parent=1 // pred_fallthru
      _
    // Predicated region
    $region6: #{checkpoint.17} parent=1 // pred_check
      _
    $region7: #{checkpoint.17} parent=1 // pred_check_branch
      %12 = sbr.rel (0) target = $region9
    $region8: #{checkpoint.17} parent=1 // pred_region
      %14 = vsyncadd [#allocation3], 0
      %s15 = sshll.u32 %s1, 4
      %s16 = int_to_ptr.hbm [resolvable:$true] %s15
      %s17 = sshll.u32 [#allocation2], 4
      %s18 = int_to_ptr.vmem [resolvable:$true] %s17
      %23 = dma.hbm_to_vmem [thread:$0]  %s16, 256, %s18, [#allocation3], 64, 64, 4
    $region9: #{checkpoint.17} parent=1 // pred_fallthru
      _
    // Predicated region
    $region10: #{checkpoint.17} parent=1 // pred_check
      _
    $region11: #{checkpoint.17} parent=1 // pred_check_branch
      %25 = sbr.rel (0) target = $region13
    $region12: #{checkpoint.17} parent=1 // pred_region
      _
    $region13: #{checkpoint.17} parent=1 // pred_fallthru
      _
    // Predicated region
    $region14: #{checkpoint.17} parent=1 // pred_check
      _
    $region15: #{checkpoint.17} parent=1 // pred_check_branch
      %27 = sbr.rel (0) target = $region17
    $region16: #{checkpoint.17} parent=1 // pred_region
      %29 = dma.done [#allocation3], 256
    $region17: #{checkpoint.17} parent=1 // pred_fallthru
      _
    %v31 = vld [vmem:[%s0] sm:$0xff]
    %v32 = vld [vmem:[%s0 + $0x8] sm:$0xff]
    %v33 = vld [vmem:[%s0 + $0x10] sm:$0xf]
    %v34 = vpack.c.bf16 %v32, %v31
    %v35 = vpack.c.bf16 %v33, %v33
    %v36 = vld [vmem:[#allocation2] sm:$0xf]
    %v37 = vld [vmem:[#allocation2 + $0x4] sm:$0xf]
    %v38 = vld [vmem:[#allocation2 + $0x8] sm:$0xf]
    %v39 = vld [vmem:[#allocation2 + $0xc] sm:$0xf]
    %v40 = vld [vmem:[%s2] sm:$0x1]
    %v42 = vperm.slane %v40, 0
    %v48 = vunpack.c.l.b16 %v36
    %v49 = vunpack.c.l.b16 %v37
    %v50 = vunpack.c.l.b16 %v38
    %v51 = vunpack.c.l.b16 %v39
    %v52 = vpack.c.b16 %v49, %v48
    %v53 = vpack.c.b16 %v51, %v50
    %vm56 = vcmask 261120
    %v58 = vsel %vm56, %v34, 0
    %v61 = vsel %vm56, %v35, 0
    %63 = vmatpush.bf16.msra.mxu0 0
    %64 = vmatpush.bf16.msra.mxu0 0
    %65 = vmatpush.bf16.msra.mxu0 0
    %66 = vmatpush.bf16.msra.mxu0 0
    %67 = vmatpush.bf16.msra.mxu0 0
    %68 = vmatpush.bf16.msra.mxu0 0
    %69 = vmatpush.bf16.msra.mxu0 %v53
    %70 = vmatpush.bf16.msra.mxu0 %v52
    %71 = vmatmul.bf16.gmra.mxu0 %v58
    %v72 = vpop.f32.mrf.mxu0
    %v73 = vadd.f32 %v42, %v72
    %v74 = vpop.f32.mrf.mxu0
    %v75 = vadd.f32 %v42, %v74
    %76 = vmatmul.bf16.gmra.mxu0 %v61
    %v77 = vpop.f32.mrf.mxu0
    %v78 = vadd.f32 %v42, %v77
    %v79 = vpop.f32.mrf.mxu0
    %80 = vdwg.mxu0
    %v81 = vpack.c.bf16 %v73, %v73
    %v82 = vpack.c.bf16 %v75, %v75
    %v83 = vpack.c.bf16 %v78, %v78
    %vm84 = vcmask 519168
    %85 = vst.msk [vmem:[%s3] sm:$0xf] %vm84, %v81
    %86 = vst.msk [vmem:[%s3 + $0x4] sm:$0xf] %vm84, %v82
    %vm87 = vcmask 517120
    %88 = vst.msk [vmem:[%s3 + $0x8] sm:$0x3] %vm87, %v83
    // Predicated region
    $region18: #{checkpoint.17} parent=1 // pred_check
      _
    $region19: #{checkpoint.17} parent=1 // pred_check_branch
      %90 = sbr.rel (0) target = $region21
    $region20: #{checkpoint.17} parent=1 // pred_region
      _
    $region21: #{checkpoint.17} parent=1 // pred_fallthru
      _
    // Predicated region
    $region22: #{checkpoint.17} parent=1 // pred_check
      _
    $region23: #{checkpoint.17} parent=1 // pred_check_branch
      %92 = sbr.rel (0) target = $region25
    $region24: #{checkpoint.17} parent=1 // pred_region
      _
    $region25: #{checkpoint.17} parent=1 // pred_fallthru
      _
    %93 = vsyncpa [#allocation3], 1

// kernel: checkpoint.11
$region0: #{checkpoint.11}
  #allocation0 [shape = 'u32[]', space=smem, size = 0x4, offset = 0x4, fixed_abs, tag = 'smem constant byte address 0x4 - core index']
  #allocation1 [shape = 'u32[72,128]{1,0:T(1,128)}', space=vmem, size = 0x9000, scoped, tag = 'internal scratch']
  %s0 = inlined_call_operand.vmem [shape: f32[2,8,32], index: 0, kind: input, shape index: {}]
  %s1 = inlined_call_operand.vmem [shape: bf16[2,8,64], index: 1, kind: input, shape index: {}]
  %s2 = inlined_call_operand.vmem [shape: bf16[32,32], index: 2, kind: input, shape index: {}]
  %s3 = inlined_call_operand.vmem [shape: f32[1,32], index: 3, kind: input, shape index: {}, may-alias: {3,5,7}]
  %s4 = inlined_call_operand.hbm [shape: bf16[32,32], index: 4, kind: input, shape index: {}]
  %s5 = inlined_call_operand.vmem [shape: f32[1,32], index: 5, kind: input, shape index: {}, may-alias: {3,5,7}]
  %s6 = inlined_call_operand.vmem [shape: f32[1,32], index: 6, kind: input, shape index: {}]
  %s7 = inlined_call_operand.vmem [shape: f32[1,32], index: 7, kind: input, shape index: {}, may-alias: {3,5,7}]
  %s8 = inlined_call_operand.vmem [shape: f32[2,8,32], index: 8, kind: output, shape index: {}]
  %s9 = sld [smem:[#allocation0]]
  $region69: #{checkpoint.11} parent=0
    _
  %s11 = ssub.s32 1, %s9
  %s12 = scalar_select 0, %s11, %s9
  $region1: #{checkpoint.11} parent=0
    #allocation2 [shape = 'u8[8192]{0}', space=vmem, size = 0x2000, scoped, tag = 'input window, operand 4, single buffered']
    #allocation3 [shape = 's32[2]{0}', space=sflag, size = 0x8, scoped, tag = 'scoped memory for checkpoint.11']
    %13 = vsyncpa [#allocation3], 0
    loop: start=0, step=1, limit=4
    $region2: #{checkpoint.11} parent=1 // loop_pre_header
      _
    $region3: #{checkpoint.11} parent=1 // loop_header
      %s15 = sphi 0, %s19
      %p16 = scmp.ge.s32.totalorder %s15, 4
      %s22 = sphi 0, %s34
      %s23 = sphi 0, %s30
      %s24 = sphi 0, %s22
      %s25 = sphi 0, %s23
      %s26 = sphi 0, %s24
      %s27 = sphi 0, %s25
      %s39 = sphi 0, %s41
      %s42 = sphi 0, %s39
      %s43 = sphi 0, %s42
      %s59 = sphi 0, %s43
      %s65 = sphi 0, %s67
      %s68 = sphi 0, %s65
      %s69 = sphi 0, %s68
      %s85 = sphi 0, %s69
      %s89 = sphi 0, %s89
      %s91 = sphi 0, %s89
      %s92 = sphi 0, %s91
      %s106 = sphi 0, %s92
      %s110 = sphi 0, %s110
      %s112 = sphi 0, %s110
      %s113 = sphi 0, %s112
      %s127 = sphi 0, %s113
      %s131 = sphi 0, %s131
      %s133 = sphi 0, %s131
      %s134 = sphi 0, %s133
      %s148 = sphi 0, %s134
      %s152 = sphi 0, %s152
      %s154 = sphi 0, %s152
      %s155 = sphi 0, %s154
      %s169 = sphi 0, %s155
      %s173 = sphi 0, %s173
      %s175 = sphi 0, %s173
      %s176 = sphi 0, %s175
      %s190 = sphi 0, %s176
      %s194 = sphi 0, %s194
      %s196 = sphi 0, %s194
      %s197 = sphi 0, %s196
      %s211 = sphi 0, %s197
      %s219 = sphi 0, %s221
      %s222 = sphi 0, %s219
      %s223 = sphi 0, %s222
      %s239 = sphi 0, %s223
    $region4: #{checkpoint.11} parent=1 // loop_header_branch
      %18 = sbr.rel (%p16) target = $region8
    $region5: #{checkpoint.11} parent=1 // loop_body
      %s20 = ssub.s32 %s15, 1
      %s21 = ssub.s32 %s15, 2
      %s28 = sadd.s32 1, %s23
      %p29 = scmp.ge.s32.totalorder %s28, 1
      %s30 = scalar_select %p29, 0, %s28
      %s31 = sadd.s32 1, %s22
      %s32 = scalar_select %p29, %s31, %s22
      %p33 = scmp.ge.s32.totalorder %s32, 2
      %s34 = scalar_select %p33, 0, %s32
      %s35 = ssub.s32 %s22, %s34
      %s36 = ssub.s32 %s23, %s30
      %s37 = sor.u32 %s35, %s36
      %p38 = scmp.eq.s32.totalorder %s37, 0
      %s40 = sadd.s32 %s39, 1
      %s41 = scalar_select %p38, %s39, %s40
      %p44 = pneg %p38
      %p45 = scmp.eq.s32.totalorder %s15, 1
      %p46 = por %p44, %p45
      %p47 = scmp.ne.s32.totalorder %s39, %s42
      %p48 = scmp.eq.s32.totalorder %s15, 0
      %p49 = por %p47, %p48
      %p50 = scmp.ne.s32.totalorder %s39, %s42
      %p51 = scmp.eq.s32.totalorder %s20, 1
      %p52 = por %p50, %p51
      %p53 = scmp.ne.s32.totalorder %s42, %s43
      %p54 = scmp.eq.s32.totalorder %s20, 0
      %p55 = por %p53, %p54
      %p56 = scmp.ne.s32.totalorder %s42, %s43
      %p57 = scmp.eq.s32.totalorder %s21, 1
      %p58 = por %p56, %p57
      %p60 = scmp.ne.s32.totalorder %s43, %s59
      %p61 = scmp.eq.s32.totalorder %s21, 0
      %p62 = por %p60, %p61
      %s63 = ssub.s32 %s22, %s34
      %p64 = scmp.eq.s32.totalorder %s63, 0
      %s66 = sadd.s32 %s65, 1
      %s67 = scalar_select %p64, %s65, %s66
      %p70 = pneg %p64
      %p71 = scmp.eq.s32.totalorder %s15, 1
      %p72 = por %p70, %p71
      %p73 = scmp.ne.s32.totalorder %s65, %s68
      %p74 = scmp.eq.s32.totalorder %s15, 0
      %p75 = por %p73, %p74
      %p76 = scmp.ne.s32.totalorder %s65, %s68
      %p77 = scmp.eq.s32.totalorder %s20, 1
      %p78 = por %p76, %p77
      %p79 = scmp.ne.s32.totalorder %s68, %s69
      %p80 = scmp.eq.s32.totalorder %s20, 0
      %p81 = por %p79, %p80
      %p82 = scmp.ne.s32.totalorder %s68, %s69
      %p83 = scmp.eq.s32.totalorder %s21, 1
      %p84 = por %p82, %p83
      %p86 = scmp.ne.s32.totalorder %s69, %s85
      %p87 = scmp.eq.s32.totalorder %s21, 0
      %p88 = por %p86, %p87
      %s90 = sadd.s32 %s89, 1
      %p93 = scmp.eq.s32.totalorder %s15, 1
      %p94 = scmp.ne.s32.totalorder %s89, %s91
      %p95 = scmp.eq.s32.totalorder %s15, 0
      %p96 = por %p94, %p95
      %p97 = scmp.ne.s32.totalorder %s89, %s91
      %p98 = scmp.eq.s32.totalorder %s20, 1
      %p99 = por %p97, %p98
      %p100 = scmp.ne.s32.totalorder %s91, %s92
      %p101 = scmp.eq.s32.totalorder %s20, 0
      %p102 = por %p100, %p101
      %p103 = scmp.ne.s32.totalorder %s91, %s92
      %p104 = scmp.eq.s32.totalorder %s21, 1
      %p105 = por %p103, %p104
      %p107 = scmp.ne.s32.totalorder %s92, %s106
      %p108 = scmp.eq.s32.totalorder %s21, 0
      %p109 = por %p107, %p108
      %s111 = sadd.s32 %s110, 1
      %p114 = scmp.eq.s32.totalorder %s15, 1
      %p115 = scmp.ne.s32.totalorder %s110, %s112
      %p116 = scmp.eq.s32.totalorder %s15, 0
      %p117 = por %p115, %p116
      %p118 = scmp.ne.s32.totalorder %s110, %s112
      %p119 = scmp.eq.s32.totalorder %s20, 1
      %p120 = por %p118, %p119
      %p121 = scmp.ne.s32.totalorder %s112, %s113
      %p122 = scmp.eq.s32.totalorder %s20, 0
      %p123 = por %p121, %p122
      %p124 = scmp.ne.s32.totalorder %s112, %s113
      %p125 = scmp.eq.s32.totalorder %s21, 1
      %p126 = por %p124, %p125
      %p128 = scmp.ne.s32.totalorder %s113, %s127
      %p129 = scmp.eq.s32.totalorder %s21, 0
      %p130 = por %p128, %p129
      %s132 = sadd.s32 %s131, 1
      %p135 = scmp.eq.s32.totalorder %s15, 1
      %p136 = scmp.ne.s32.totalorder %s131, %s133
      %p137 = scmp.eq.s32.totalorder %s15, 0
      %p138 = por %p136, %p137
      %p139 = scmp.ne.s32.totalorder %s131, %s133
      %p140 = scmp.eq.s32.totalorder %s20, 1
      %p141 = por %p139, %p140
      %p142 = scmp.ne.s32.totalorder %s133, %s134
      %p143 = scmp.eq.s32.totalorder %s20, 0
      %p144 = por %p142, %p143
      %p145 = scmp.ne.s32.totalorder %s133, %s134
      %p146 = scmp.eq.s32.totalorder %s21, 1
      %p147 = por %p145, %p146
      %p149 = scmp.ne.s32.totalorder %s134, %s148
      %p150 = scmp.eq.s32.totalorder %s21, 0
      %p151 = por %p149, %p150
      %s153 = sadd.s32 %s152, 1
      %p156 = scmp.eq.s32.totalorder %s15, 1
      %p157 = scmp.ne.s32.totalorder %s152, %s154
      %p158 = scmp.eq.s32.totalorder %s15, 0
      %p159 = por %p157, %p158
      %p160 = scmp.ne.s32.totalorder %s152, %s154
      %p161 = scmp.eq.s32.totalorder %s20, 1
      %p162 = por %p160, %p161
      %p163 = scmp.ne.s32.totalorder %s154, %s155
      %p164 = scmp.eq.s32.totalorder %s20, 0
      %p165 = por %p163, %p164
      %p166 = scmp.ne.s32.totalorder %s154, %s155
      %p167 = scmp.eq.s32.totalorder %s21, 1
      %p168 = por %p166, %p167
      %p170 = scmp.ne.s32.totalorder %s155, %s169
      %p171 = scmp.eq.s32.totalorder %s21, 0
      %p172 = por %p170, %p171
      %s174 = sadd.s32 %s173, 1
      %p177 = scmp.eq.s32.totalorder %s15, 1
      %p178 = scmp.ne.s32.totalorder %s173, %s175
      %p179 = scmp.eq.s32.totalorder %s15, 0
      %p180 = por %p178, %p179
      %p181 = scmp.ne.s32.totalorder %s173, %s175
      %p182 = scmp.eq.s32.totalorder %s20, 1
      %p183 = por %p181, %p182
      %p184 = scmp.ne.s32.totalorder %s175, %s176
      %p185 = scmp.eq.s32.totalorder %s20, 0
      %p186 = por %p184, %p185
      %p187 = scmp.ne.s32.totalorder %s175, %s176
      %p188 = scmp.eq.s32.totalorder %s21, 1
      %p189 = por %p187, %p188
      %p191 = scmp.ne.s32.totalorder %s176, %s190
      %p192 = scmp.eq.s32.totalorder %s21, 0
      %p193 = por %p191, %p192
      %s195 = sadd.s32 %s194, 1
      %p198 = scmp.eq.s32.totalorder %s15, 1
      %p199 = scmp.ne.s32.totalorder %s194, %s196
      %p200 = scmp.eq.s32.totalorder %s15, 0
      %p201 = por %p199, %p200
      %p202 = scmp.ne.s32.totalorder %s194, %s196
      %p203 = scmp.eq.s32.totalorder %s20, 1
      %p204 = por %p202, %p203
      %p205 = scmp.ne.s32.totalorder %s196, %s197
      %p206 = scmp.eq.s32.totalorder %s20, 0
      %p207 = por %p205, %p206
      %p208 = scmp.ne.s32.totalorder %s196, %s197
      %p209 = scmp.eq.s32.totalorder %s21, 1
      %p210 = por %p208, %p209
      %p212 = scmp.ne.s32.totalorder %s197, %s211
      %p213 = scmp.eq.s32.totalorder %s21, 0
      %p214 = por %p212, %p213
      %s215 = ssub.s32 %s22, %s34
      %s216 = ssub.s32 %s23, %s30
      %s217 = sor.u32 %s215, %s216
      %p218 = scmp.eq.s32.totalorder %s217, 0
      %s220 = sadd.s32 %s219, 1
      %s221 = scalar_select %p218, %s219, %s220
      %p224 = pneg %p218
      %p225 = scmp.eq.s32.totalorder %s15, 1
      %p226 = por %p224, %p225
      %p227 = scmp.ne.s32.totalorder %s219, %s222
      %p228 = scmp.eq.s32.totalorder %s15, 0
      %p229 = por %p227, %p228
      %p230 = scmp.ne.s32.totalorder %s219, %s222
      %p231 = scmp.eq.s32.totalorder %s20, 1
      %p232 = por %p230, %p231
      %p233 = scmp.ne.s32.totalorder %s222, %s223
      %p234 = scmp.eq.s32.totalorder %s20, 0
      %p235 = por %p233, %p234
      %p236 = scmp.ne.s32.totalorder %s222, %s223
      %p237 = scmp.eq.s32.totalorder %s21, 1
      %p238 = por %p236, %p237
      %p240 = scmp.ne.s32.totalorder %s223, %s239
      %p241 = scmp.eq.s32.totalorder %s21, 0
      %p242 = por %p240, %p241
      %p243 = scmp.le.s32.totalorder 1, %s15
      %p244 = scmp.lt.s32.totalorder %s15, 3
      %p245 = pnand %p243, %p244
      %p246 = pneg %p245
      // Predicated region
      $region9: #{checkpoint.11} parent=5 // pred_check
        _
      $region10: #{checkpoint.11} parent=5 // pred_check_branch
        %248 = sbr.rel (%p245) target = $region12
      $region11: #{checkpoint.11} parent=5 // pred_region
        %s249 = ssub.s32 %s15, 1
        // Predicated region
        $region13: #{checkpoint.11} parent=11 // pred_check
          %p250 = pneg %p102
        $region14: #{checkpoint.11} parent=11 // pred_check_branch
          %252 = sbr.rel (%p250) target = $region16
        $region15: #{checkpoint.11} parent=11 // pred_region
          _
        $region16: #{checkpoint.11} parent=11 // pred_fallthru
          _
        // Predicated region
        $region17: #{checkpoint.11} parent=11 // pred_check
          %p253 = pneg %p123
        $region18: #{checkpoint.11} parent=11 // pred_check_branch
          %255 = sbr.rel (%p253) target = $region20
        $region19: #{checkpoint.11} parent=11 // pred_region
          _
        $region20: #{checkpoint.11} parent=11 // pred_fallthru
          _
        // Predicated region
        $region21: #{checkpoint.11} parent=11 // pred_check
          %p256 = pneg %p144
        $region22: #{checkpoint.11} parent=11 // pred_check_branch
          %258 = sbr.rel (%p256) target = $region24
        $region23: #{checkpoint.11} parent=11 // pred_region
          %260 = vsyncadd [#allocation3], 0
          %s261 = sshll.u32 %s4, 4
          %s262 = int_to_ptr.hbm [resolvable:$true] %s261
          %s263 = sshll.u32 [#allocation2], 4
          %s264 = int_to_ptr.vmem [resolvable:$true] %s263
          %269 = dma.hbm_to_vmem [thread:$0]  %s262, 256, %s264, [#allocation3], 64, 64, 4
        $region24: #{checkpoint.11} parent=11 // pred_fallthru
          _
        // Predicated region
        $region25: #{checkpoint.11} parent=11 // pred_check
          %p270 = pneg %p165
        $region26: #{checkpoint.11} parent=11 // pred_check_branch
          %272 = sbr.rel (%p270) target = $region28
        $region27: #{checkpoint.11} parent=11 // pred_region
          _
        $region28: #{checkpoint.11} parent=11 // pred_fallthru
          _
        // Predicated region
        $region29: #{checkpoint.11} parent=11 // pred_check
          %p273 = pneg %p186
        $region30: #{checkpoint.11} parent=11 // pred_check_branch
          %275 = sbr.rel (%p273) target = $region32
        $region31: #{checkpoint.11} parent=11 // pred_region
          _
        $region32: #{checkpoint.11} parent=11 // pred_fallthru
          _
        // Predicated region
        $region33: #{checkpoint.11} parent=11 // pred_check
          %p276 = pneg %p207
        $region34: #{checkpoint.11} parent=11 // pred_check_branch
          %278 = sbr.rel (%p276) target = $region36
        $region35: #{checkpoint.11} parent=11 // pred_region
          _
        $region36: #{checkpoint.11} parent=11 // pred_fallthru
          _
      $region12: #{checkpoint.11} parent=5 // pred_fallthru
        _
      %p279 = scmp.lt.s32.totalorder %s15, 2
      // Predicated region
      $region37: #{checkpoint.11} parent=5 // pred_check
        %p280 = pneg %p279
      $region38: #{checkpoint.11} parent=5 // pred_check_branch
        %282 = sbr.rel (%p280) target = $region40
      $region39: #{checkpoint.11} parent=5 // pred_region
        // Predicated region
        $region41: #{checkpoint.11} parent=39 // pred_check
          %p283 = pneg %p49
        $region42: #{checkpoint.11} parent=39 // pred_check_branch
          %285 = sbr.rel (%p283) target = $region44
        $region43: #{checkpoint.11} parent=39 // pred_region
          %p286 = scmp.lt.s32.totalorder %s22, 1
          %s287 = scalar_select %p286, %s22, 1
          %p288 = scmp.lt.s32.totalorder %s23, 0
          %s289 = scalar_select %p288, %s23, 0
          %s290 = sadd.s32 %s289, %s287
          %s291 = smul.addr %s290, 8
          %s292 = scalar_lea.vmem %s0, %s291
        $region44: #{checkpoint.11} parent=39 // pred_fallthru
          _
        // Predicated region
        $region45: #{checkpoint.11} parent=39 // pred_check
          %p293 = pneg %p75
        $region46: #{checkpoint.11} parent=39 // pred_check_branch
          %295 = sbr.rel (%p293) target = $region48
        $region47: #{checkpoint.11} parent=39 // pred_region
          %p296 = scmp.lt.s32.totalorder %s22, 1
          %s297 = scalar_select %p296, %s22, 1
          %s298 = smul.addr %s297, 4
          %s299 = scalar_lea.vmem %s1, %s298
        $region48: #{checkpoint.11} parent=39 // pred_fallthru
          _
      $region40: #{checkpoint.11} parent=5 // pred_fallthru
        _
      %p300 = scmp.le.s32.totalorder 1, %s15
      %p301 = scmp.lt.s32.totalorder %s15, 3
      %p302 = pnand %p300, %p301
      %p303 = pneg %p302
      // Predicated region
      $region49: #{checkpoint.11} parent=5 // pred_check
        _
      $region50: #{checkpoint.11} parent=5 // pred_check_branch
        %305 = sbr.rel (%p302) target = $region52
      $region51: #{checkpoint.11} parent=5 // pred_region
        %s306 = ssub.s32 %s15, 1
        // Predicated region
        $region53: #{checkpoint.11} parent=51 // pred_check
          %p307 = pneg %p144
        $region54: #{checkpoint.11} parent=51 // pred_check_branch
          %309 = sbr.rel (%p307) target = $region56
        $region55: #{checkpoint.11} parent=51 // pred_region
          %311 = dma.done [#allocation3], 256
        $region56: #{checkpoint.11} parent=51 // pred_fallthru
          _
        %p312 = scmp.lt.s32.totalorder %s24, 1
        %s313 = scalar_select %p312, %s24, 1
        %p314 = scmp.lt.s32.totalorder %s25, 0
        %s315 = scalar_select %p314, %s25, 0
        %s316 = sadd.s32 %s315, %s313
        %s317 = smul.addr %s316, 8
        %s318 = scalar_lea.vmem %s0, %s317
        %p319 = pneg %p55
        %p320 = pneg %p52
        %p321 = scmp.lt.s32.totalorder %s24, 1
        %s322 = scalar_select %p321, %s24, 1
        %s323 = smul.addr %s322, 4
        %s324 = scalar_lea.vmem %s1, %s323
        %p325 = pneg %p81
        %p326 = pneg %p78
        %p327 = pneg %p102
        %p328 = pneg %p99
        %p329 = pneg %p123
        %p330 = pneg %p120
        %p331 = pneg %p144
        %p332 = pneg %p141
        %p333 = pneg %p165
        %p334 = pneg %p162
        %p335 = pneg %p186
        %p336 = pneg %p183
        %p337 = pneg %p207
        %p338 = pneg %p204
        %p339 = pneg %p235
        %p340 = pneg %p232
        %p341 = scmp.lt.s32.totalorder %s24, 1
        %s342 = scalar_select %p341, %s24, 1
        %p343 = scmp.lt.s32.totalorder %s25, 0
        %s344 = scalar_select %p343, %s25, 0
        %s345 = sadd.s32 %s344, %s342
        %s346 = smul.addr %s345, 8
        %s347 = scalar_lea.vmem %s8, %s346
        %p348 = scmp.lt.s32.totalorder %s24, 1
        %s349 = scalar_select %p348, %s24, 1
        %p350 = scmp.lt.s32.totalorder %s25, 0
        %s351 = scalar_select %p350, %s25, 0
        %s352 = sadd.s32 %s351, %s349
        %s353 = smul.addr %s352, 8
        %s354 = scalar_lea.vmem %s0, %s353
        %p355 = scmp.lt.s32.totalorder %s24, 1
        %s356 = scalar_select %p355, %s24, 1
        %s357 = smul.addr %s356, 4
        %s358 = scalar_lea.vmem %s1, %s357
        %p359 = scmp.lt.s32.totalorder %s24, 1
        %s360 = scalar_select %p359, %s24, 1
        %p361 = scmp.lt.s32.totalorder %s25, 0
        %s362 = scalar_select %p361, %s25, 0
        %s363 = sadd.s32 %s362, %s360
        %s364 = smul.addr %s363, 8
        %s365 = scalar_lea.vmem %s8, %s364
        %v367 = vld [vmem:[%s354] sm:$0xff]
        %v368 = vpack.c.bf16 %v367, %v367
        %v369 = vld [vmem:[%s2] sm:$0xf]
        %v370 = vld [vmem:[%s2 + $0x4] sm:$0xf]
        %v371 = vld [vmem:[%s2 + $0x8] sm:$0xf]
        %v372 = vld [vmem:[%s2 + $0xc] sm:$0xf]
        %v373 = vld [vmem:[%s3] sm:$0x1]
        %v375 = vperm.slane %v373, 0
        %v381 = vunpack.c.l.b16 %v369
        %v382 = vunpack.c.l.b16 %v370
        %v383 = vunpack.c.l.b16 %v371
        %v384 = vunpack.c.l.b16 %v372
        %v385 = vpack.c.b16 %v382, %v381
        %v386 = vpack.c.b16 %v384, %v383
        %vm389 = vcmask 261120
        %v391 = vsel %vm389, %v368, 0
        %393 = vmatpush.bf16.msra.mxu0 0
        %394 = vmatpush.bf16.msra.mxu0 0
        %395 = vmatpush.bf16.msra.mxu0 0
        %396 = vmatpush.bf16.msra.mxu0 0
        %397 = vmatpush.bf16.msra.mxu0 0
        %398 = vmatpush.bf16.msra.mxu0 0
        %399 = vmatpush.bf16.msra.mxu0 %v386
        %400 = vmatpush.bf16.msra.mxu0 %v385
        %401 = vmatmul.bf16.gmra.mxu0 %v391
        %v402 = vpop.f32.mrf.mxu0
        %v403 = vadd.f32 %v375, %v402
        %v404 = vpop.f32.mrf.mxu0
        %405 = vdwg.mxu0
        %v406 = vpack.c.bf16 %v403, %v403
        %v407 = vld [vmem:[%s358] sm:$0xf]
        %vm408 = vcmask 64512
        %v410 = vsel %vm408, %v406, 0
        %v413 = vsel %vm408, %v407, 0
        %415 = vmatpush.bf16.xpose.msra.mxu0 0
        %416 = vmatpush.bf16.xpose.msra.mxu0 0
        %417 = vmatpush.bf16.xpose.msra.mxu0 0
        %418 = vmatpush.bf16.xpose.msra.mxu0 0
        %419 = vmatpush.bf16.xpose.msra.mxu0 0
        %420 = vmatpush.bf16.xpose.msra.mxu0 0
        %421 = vmatpush.bf16.xpose.msra.mxu0 0
        %422 = vmatpush.bf16.xpose.msra.mxu0 %v413
        %423 = vmatmul.bf16.gmra.mxu0 %v410
        %v424 = vpop.f32.mrf.mxu0
        %v425 = vadd.f32 0.0, %v424
        %v426 = vpop.f32.mrf.mxu0
        %427 = vdwg.mxu0
        %v428 = vsel %vm408, %v425, -inf
        %429 = vmax.xlane.f32.xlu0 %v428
        %v430 = vpop.xlane.xlu0 %429
        %v431 = vsub.f32 %v425, %v430
        %v432 = vmul.f32 %v431, 1.442695
        %v433 = vpow.pop %v432
        %v434 = vsel %vm408, %v433, 0.0
        %435 = vadd.xlane.f32.xlu0 %v434
        %v436 = vpop.xlane.xlu0 %435
        %v437 = vrcp.pop %v436
        %v438 = vmul.f32 %v433, %v437
        %v439 = vpack.c.bf16 %v438, %v438
        %v441 = vunpack.c.l.b16 %v407
        %v442 = vpack.c.b16 %v441, %v441
        %443 = vrot.lane.b32.xlu0 %v442, 96
        %v444 = vpop.permute.xlu0 %443
        %v446 = vsel %vm408, %v439, 0
        %vm448 = vcmask 1043456
        %v450 = vsel %vm448, %v444, 0
        %452 = vmatpush.bf16.msra.mxu0 0
        %453 = vmatpush.bf16.msra.mxu0 0
        %454 = vmatpush.bf16.msra.mxu0 0
        %455 = vmatpush.bf16.msra.mxu0 0
        %456 = vmatpush.bf16.msra.mxu0 0
        %457 = vmatpush.bf16.msra.mxu0 0
        %458 = vmatpush.bf16.msra.mxu0 0
        %459 = vmatpush.bf16.msra.mxu0 %v450
        %460 = vmatmul.bf16.gmra.mxu0 %v446
        %v461 = vpop.f32.mrf.mxu0
        %v462 = vadd.f32 0.0, %v461
        %v463 = vpop.f32.mrf.mxu0
        %464 = vdwg.mxu0
        %v466 = vunpack.c.l.b16 %v406
        %v467 = vpack.c.b16 %v466, %v466
        %468 = vrot.lane.b32.xlu0 %v467, 120
        %v469 = vpop.permute.xlu0 %468
        %470 = vrot.lane.b32.xlu0 %v442, 120
        %v471 = vpop.permute.xlu0 %470
        %v473 = vsel %vm408, %v469, 0
        %v476 = vsel %vm408, %v471, 0
        %478 = vmatpush.bf16.xpose.msra.mxu0 0
        %479 = vmatpush.bf16.xpose.msra.mxu0 0
        %480 = vmatpush.bf16.xpose.msra.mxu0 0
        %481 = vmatpush.bf16.xpose.msra.mxu0 0
        %482 = vmatpush.bf16.xpose.msra.mxu0 0
        %483 = vmatpush.bf16.xpose.msra.mxu0 0
        %484 = vmatpush.bf16.xpose.msra.mxu0 0
        %485 = vmatpush.bf16.xpose.msra.mxu0 %v476
        %486 = vmatmul.bf16.gmra.mxu0 %v473
        %v487 = vpop.f32.mrf.mxu0
        %v488 = vadd.f32 0.0, %v487
        %v489 = vpop.f32.mrf.mxu0
        %490 = vdwg.mxu0
        %v491 = vsel %vm408, %v488, -inf
        %492 = vmax.xlane.f32.xlu0 %v491
        %v493 = vpop.xlane.xlu0 %492
        %v494 = vsub.f32 %v488, %v493
        %v495 = vmul.f32 %v494, 1.442695
        %v496 = vpow.pop %v495
        %v497 = vsel %vm408, %v496, 0.0
        %498 = vadd.xlane.f32.xlu0 %v497
        %v499 = vpop.xlane.xlu0 %498
        %v500 = vrcp.pop %v499
        %v501 = vmul.f32 %v496, %v500
        %v502 = vpack.c.bf16 %v501, %v501
        %503 = vrot.lane.b32.xlu0 %v442, 88
        %v504 = vpop.permute.xlu0 %503
        %v506 = vsel %vm408, %v502, 0
        %v509 = vsel %vm448, %v504, 0
        %511 = vmatpush.bf16.msra.mxu0 0
        %512 = vmatpush.bf16.msra.mxu0 0
        %513 = vmatpush.bf16.msra.mxu0 0
        %514 = vmatpush.bf16.msra.mxu0 0
        %515 = vmatpush.bf16.msra.mxu0 0
        %516 = vmatpush.bf16.msra.mxu0 0
        %517 = vmatpush.bf16.msra.mxu0 0
        %518 = vmatpush.bf16.msra.mxu0 %v509
        %519 = vmatmul.bf16.gmra.mxu0 %v506
        %v520 = vpop.f32.mrf.mxu0
        %v521 = vadd.f32 0.0, %v520
        %v522 = vpop.f32.mrf.mxu0
        %523 = vdwg.mxu0
        %524 = vrot.lane.b32.xlu0 %v467, 112
        %v525 = vpop.permute.xlu0 %524
        %526 = vrot.lane.b32.xlu0 %v442, 112
        %v527 = vpop.permute.xlu0 %526
        %v529 = vsel %vm408, %v525, 0
        %v532 = vsel %vm408, %v527, 0
        %534 = vmatpush.bf16.xpose.msra.mxu0 0
        %535 = vmatpush.bf16.xpose.msra.mxu0 0
        %536 = vmatpush.bf16.xpose.msra.mxu0 0
        %537 = vmatpush.bf16.xpose.msra.mxu0 0
        %538 = vmatpush.bf16.xpose.msra.mxu0 0
        %539 = vmatpush.bf16.xpose.msra.mxu0 0
        %540 = vmatpush.bf16.xpose.msra.mxu0 0
        %541 = vmatpush.bf16.xpose.msra.mxu0 %v532
        %542 = vmatmul.bf16.gmra.mxu0 %v529
        %v543 = vpop.f32.mrf.mxu0
        %v544 = vadd.f32 0.0, %v543
        %v545 = vpop.f32.mrf.mxu0
        %546 = vdwg.mxu0
        %v547 = vsel %vm408, %v544, -inf
        %548 = vmax.xlane.f32.xlu0 %v547
        %v549 = vpop.xlane.xlu0 %548
        %v550 = vsub.f32 %v544, %v549
        %v551 = vmul.f32 %v550, 1.442695
        %v552 = vpow.pop %v551
        %v553 = vsel %vm408, %v552, 0.0
        %554 = vadd.xlane.f32.xlu0 %v553
        %v555 = vpop.xlane.xlu0 %554
        %v556 = vrcp.pop %v555
        %v557 = vmul.f32 %v552, %v556
        %v558 = vpack.c.bf16 %v557, %v557
        %559 = vrot.lane.b32.xlu0 %v442, 80
        %v560 = vpop.permute.xlu0 %559
        %v562 = vsel %vm408, %v558, 0
        %v565 = vsel %vm448, %v560, 0
        %567 = vmatpush.bf16.msra.mxu0 0
        %568 = vmatpush.bf16.msra.mxu0 0
        %569 = vmatpush.bf16.msra.mxu0 0
        %570 = vmatpush.bf16.msra.mxu0 0
        %571 = vmatpush.bf16.msra.mxu0 0
        %572 = vmatpush.bf16.msra.mxu0 0
        %573 = vmatpush.bf16.msra.mxu0 0
        %574 = vmatpush.bf16.msra.mxu0 %v565
        %575 = vmatmul.bf16.gmra.mxu0 %v562
        %v576 = vpop.f32.mrf.mxu0
        %v577 = vadd.f32 0.0, %v576
        %v578 = vpop.f32.mrf.mxu0
        %579 = vdwg.mxu0
        %580 = vrot.lane.b32.xlu0 %v467, 104
        %v581 = vpop.permute.xlu0 %580
        %582 = vrot.lane.b32.xlu0 %v442, 104
        %v583 = vpop.permute.xlu0 %582
        %v585 = vsel %vm408, %v581, 0
        %v588 = vsel %vm408, %v583, 0
        %590 = vmatpush.bf16.xpose.msra.mxu0 0
        %591 = vmatpush.bf16.xpose.msra.mxu0 0
        %592 = vmatpush.bf16.xpose.msra.mxu0 0
        %593 = vmatpush.bf16.xpose.msra.mxu0 0
        %594 = vmatpush.bf16.xpose.msra.mxu0 0
        %595 = vmatpush.bf16.xpose.msra.mxu0 0
        %596 = vmatpush.bf16.xpose.msra.mxu0 0
        %597 = vmatpush.bf16.xpose.msra.mxu0 %v588
        %598 = vmatmul.bf16.gmra.mxu0 %v585
        %v599 = vpop.f32.mrf.mxu0
        %v600 = vadd.f32 0.0, %v599
        %v601 = vpop.f32.mrf.mxu0
        %602 = vdwg.mxu0
        %v603 = vsel %vm408, %v600, -inf
        %604 = vmax.xlane.f32.xlu0 %v603
        %v605 = vpop.xlane.xlu0 %604
        %v606 = vsub.f32 %v600, %v605
        %v607 = vmul.f32 %v606, 1.442695
        %v608 = vpow.pop %v607
        %v609 = vsel %vm408, %v608, 0.0
        %610 = vadd.xlane.f32.xlu0 %v609
        %v611 = vpop.xlane.xlu0 %610
        %v612 = vrcp.pop %v611
        %v613 = vmul.f32 %v608, %v612
        %v614 = vpack.c.bf16 %v613, %v613
        %615 = vrot.lane.b32.xlu0 %v442, 72
        %v616 = vpop.permute.xlu0 %615
        %v618 = vsel %vm408, %v614, 0
        %v621 = vsel %vm448, %v616, 0
        %623 = vmatpush.bf16.msra.mxu0 0
        %624 = vmatpush.bf16.msra.mxu0 0
        %625 = vmatpush.bf16.msra.mxu0 0
        %626 = vmatpush.bf16.msra.mxu0 0
        %627 = vmatpush.bf16.msra.mxu0 0
        %628 = vmatpush.bf16.msra.mxu0 0
        %629 = vmatpush.bf16.msra.mxu0 0
        %630 = vmatpush.bf16.msra.mxu0 %v621
        %631 = vmatmul.bf16.gmra.mxu0 %v618
        %v632 = vpop.f32.mrf.mxu0
        %v633 = vadd.f32 0.0, %v632
        %v634 = vpop.f32.mrf.mxu0
        %635 = vdwg.mxu0
        %637 = vrot.lane.b32.xlu0 %v521, 8
        %v638 = vpop.permute.xlu0 %637
        %641 = vrot.lane.b32.xlu0 %v577, 16
        %v642 = vpop.permute.xlu0 %641
        %645 = vrot.lane.b32.xlu0 %v633, 24
        %v646 = vpop.permute.xlu0 %645
        %v648 = vsel %vm408, %v462, %v638
        %vm649 = vcmask 130048
        %v650 = vsel %vm649, %v648, %v642
        %vm651 = vcmask 195584
        %v652 = vsel %vm651, %v650, %v646
        %v653 = vpack.c.bf16 %v652, %v652
        %v654 = vld [vmem:[#allocation2] sm:$0xf]
        %v655 = vld [vmem:[#allocation2 + $0x4] sm:$0xf]
        %v656 = vld [vmem:[#allocation2 + $0x8] sm:$0xf]
        %v657 = vld [vmem:[#allocation2 + $0xc] sm:$0xf]
        %v658 = vld [vmem:[%s5] sm:$0x1]
        %v660 = vperm.slane %v658, 0
        %v666 = vunpack.c.l.b16 %v654
        %v667 = vunpack.c.l.b16 %v655
        %v668 = vunpack.c.l.b16 %v656
        %v669 = vunpack.c.l.b16 %v657
        %v670 = vpack.c.b16 %v667, %v666
        %v671 = vpack.c.b16 %v669, %v668
        %v675 = vsel %vm389, %v653, 0
        %677 = vmatpush.bf16.msra.mxu0 0
        %678 = vmatpush.bf16.msra.mxu0 0
        %679 = vmatpush.bf16.msra.mxu0 0
        %680 = vmatpush.bf16.msra.mxu0 0
        %681 = vmatpush.bf16.msra.mxu0 0
        %682 = vmatpush.bf16.msra.mxu0 0
        %683 = vmatpush.bf16.msra.mxu0 %v671
        %684 = vmatpush.bf16.msra.mxu0 %v670
        %685 = vmatmul.bf16.gmra.mxu0 %v675
        %v686 = vpop.f32.mrf.mxu0
        %v687 = vadd.f32 %v660, %v686
        %v688 = vpop.f32.mrf.mxu0
        %689 = vdwg.mxu0
        %v690 = vadd.f32 %v367, %v687
        %v691 = vsel %vm389, %v690, 0.0
        %692 = vadd.xlane.f32.xlu0 %v691
        %v693 = vpop.xlane.xlu0 %692
        %v694 = vrcp.pop 32.0
        %v695 = vmul.f32 32.0, %v694
        %v696 = vsub.f32 1.0, %v695
        %v697 = vmul.f32 %v694, %v696
        %v698 = vadd.f32 %v694, %v697
        %vm699 = vweird.f32 %v694
        %v700 = vsel %vm699, %v694, %v698
        %v701 = vmul.f32 %v693, %v700
        %v702 = vsub.f32 %v690, %v701
        %v703 = vmul.f32 %v702, %v702
        %v704 = vsel %vm389, %v703, 0.0
        %705 = vadd.xlane.f32.xlu0 %v704
        %v706 = vpop.xlane.xlu0 %705
        %v707 = vmul.f32 %v706, %v700
        %v708 = vadd.f32 %v707, 1e-05
        %v709 = vrsqrt.pop %v708
        %v710 = vmul.f32 %v709, %v708
        %v711 = vmul.f32 %v710, %v709
        %v712 = vmul.f32 0.5, %v711
        %v713 = vsub.f32 1.5, %v712
        %v714 = vmul.f32 %v709, %v713
        %vm715 = vweird.f32 %v708
        %vm716 = vweird.f32 %v709
        %vm717 = vmor %vm715, %vm716
        %v718 = vsel %vm717, %v709, %v714
        %v719 = vmul.f32 %v702, %v718
        %v720 = vld [vmem:[%s6] sm:$0x1]
        %v722 = vperm.slane %v720, 0
        %v724 = vmul.f32 %v719, %v722
        %v725 = vld [vmem:[%s7] sm:$0x1]
        %v727 = vperm.slane %v725, 0
        %v729 = vadd.f32 %v724, %v727
        %730 = vst.msk [vmem:[%s365] sm:$0xff] %vm389, %v729
        %p731 = scmp.lt.s32.totalorder %s24, 1
        %s732 = scalar_select %p731, %s24, 1
        %p733 = scmp.lt.s32.totalorder %s25, 0
        %s734 = scalar_select %p733, %s25, 0
        %s735 = sadd.s32 %s734, %s732
        %s736 = smul.addr %s735, 8
        %s737 = scalar_lea.vmem %s8, %s736
        // Predicated region
        $region57: #{checkpoint.11} parent=51 // pred_check
          %p738 = pneg %p232
        $region58: #{checkpoint.11} parent=51 // pred_check_branch
          %740 = sbr.rel (%p738) target = $region60
        $region59: #{checkpoint.11} parent=51 // pred_region
          _
        $region60: #{checkpoint.11} parent=51 // pred_fallthru
          _
      $region52: #{checkpoint.11} parent=5 // pred_fallthru
        _
      %p741 = scmp.le.s32.totalorder 2, %s15
      // Predicated region
      $region61: #{checkpoint.11} parent=5 // pred_check
        %p742 = pneg %p741
      $region62: #{checkpoint.11} parent=5 // pred_check_branch
        %744 = sbr.rel (%p742) target = $region64
      $region63: #{checkpoint.11} parent=5 // pred_region
        %s745 = ssub.s32 %s15, 2
        // Predicated region
        $region65: #{checkpoint.11} parent=63 // pred_check
          %p746 = pneg %p238
        $region66: #{checkpoint.11} parent=63 // pred_check_branch
          %748 = sbr.rel (%p746) target = $region68
        $region67: #{checkpoint.11} parent=63 // pred_region
          %p749 = scmp.lt.s32.totalorder %s26, 1
          %s750 = scalar_select %p749, %s26, 1
          %p751 = scmp.lt.s32.totalorder %s27, 0
          %s752 = scalar_select %p751, %s27, 0
          %s753 = sadd.s32 %s752, %s750
          %s754 = smul.addr %s753, 8
          %s755 = scalar_lea.vmem %s8, %s754
        $region68: #{checkpoint.11} parent=63 // pred_fallthru
          _
      $region64: #{checkpoint.11} parent=5 // pred_fallthru
        _
    $region6: #{checkpoint.11} parent=1 // loop_footer
      %s19 = sadd.s32 1, %s15
    $region7: #{checkpoint.11} parent=1 // loop_footer_branch
      %14 = sbr.rel target = $region3
    $region8: #{checkpoint.11} parent=1 // loop_exit
      _
    %756 = vsyncpa [#allocation3], 1
    %s757 = scalar_lea.sflag [#allocation3], 1
    %758 = vsyncpa %s757, 1

// kernel: checkpoint.13
$region0: #{checkpoint.13}
  #allocation0 [shape = 'u32[]', space=smem, size = 0x4, offset = 0x4, fixed_abs, tag = 'smem constant byte address 0x4 - core index']
  #allocation1 [shape = 'u32[72,128]{1,0:T(1,128)}', space=vmem, size = 0x9000, scoped, tag = 'internal scratch']
  %s0 = inlined_call_operand.vmem [shape: f32[2,8,32], index: 0, kind: input, shape index: {}]
  %s1 = inlined_call_operand.vmem [shape: bf16[2,10,64], index: 1, kind: input, shape index: {}]
  %s2 = inlined_call_operand.vmem [shape: bf16[32,32], index: 2, kind: input, shape index: {}]
  %s3 = inlined_call_operand.vmem [shape: f32[1,32], index: 3, kind: input, shape index: {}, may-alias: {3,5,7}]
  %s4 = inlined_call_operand.vmem [shape: bf16[32,32], index: 4, kind: input, shape index: {}]
  %s5 = inlined_call_operand.vmem [shape: f32[1,32], index: 5, kind: input, shape index: {}, may-alias: {3,5,7}]
  %s6 = inlined_call_operand.vmem [shape: f32[1,32], index: 6, kind: input, shape index: {}]
  %s7 = inlined_call_operand.vmem [shape: f32[1,32], index: 7, kind: input, shape index: {}, may-alias: {3,5,7}]
  %s8 = inlined_call_operand.vmem [shape: f32[2,8,32], index: 8, kind: output, shape index: {}]
  %s9 = sld [smem:[#allocation0]]
  $region65: #{checkpoint.13} parent=0
    _
  %s11 = ssub.s32 1, %s9
  %s12 = scalar_select 0, %s11, %s9
  loop: start=0, step=1, limit=4
  $region2: #{checkpoint.13} parent=0 // loop_pre_header
    _
  $region3: #{checkpoint.13} parent=0 // loop_header
    %s14 = sphi 0, %s18
    %p15 = scmp.ge.s32.totalorder %s14, 4
    %s21 = sphi 0, %s33
    %s22 = sphi 0, %s29
    %s23 = sphi 0, %s21
    %s24 = sphi 0, %s22
    %s25 = sphi 0, %s23
    %s26 = sphi 0, %s24
    %s38 = sphi 0, %s40
    %s41 = sphi 0, %s38
    %s42 = sphi 0, %s41
    %s58 = sphi 0, %s42
    %s64 = sphi 0, %s66
    %s67 = sphi 0, %s64
    %s68 = sphi 0, %s67
    %s84 = sphi 0, %s68
    %s88 = sphi 0, %s88
    %s90 = sphi 0, %s88
    %s91 = sphi 0, %s90
    %s105 = sphi 0, %s91
    %s109 = sphi 0, %s109
    %s111 = sphi 0, %s109
    %s112 = sphi 0, %s111
    %s126 = sphi 0, %s112
    %s130 = sphi 0, %s130
    %s132 = sphi 0, %s130
    %s133 = sphi 0, %s132
    %s147 = sphi 0, %s133
    %s151 = sphi 0, %s151
    %s153 = sphi 0, %s151
    %s154 = sphi 0, %s153
    %s168 = sphi 0, %s154
    %s172 = sphi 0, %s172
    %s174 = sphi 0, %s172
    %s175 = sphi 0, %s174
    %s189 = sphi 0, %s175
    %s193 = sphi 0, %s193
    %s195 = sphi 0, %s193
    %s196 = sphi 0, %s195
    %s210 = sphi 0, %s196
    %s218 = sphi 0, %s220
    %s221 = sphi 0, %s218
    %s222 = sphi 0, %s221
    %s238 = sphi 0, %s222
  $region4: #{checkpoint.13} parent=0 // loop_header_branch
    %17 = sbr.rel (%p15) target = $region8
  $region5: #{checkpoint.13} parent=0 // loop_body
    %s19 = ssub.s32 %s14, 1
    %s20 = ssub.s32 %s14, 2
    %s27 = sadd.s32 1, %s22
    %p28 = scmp.ge.s32.totalorder %s27, 1
    %s29 = scalar_select %p28, 0, %s27
    %s30 = sadd.s32 1, %s21
    %s31 = scalar_select %p28, %s30, %s21
    %p32 = scmp.ge.s32.totalorder %s31, 2
    %s33 = scalar_select %p32, 0, %s31
    %s34 = ssub.s32 %s21, %s33
    %s35 = ssub.s32 %s22, %s29
    %s36 = sor.u32 %s34, %s35
    %p37 = scmp.eq.s32.totalorder %s36, 0
    %s39 = sadd.s32 %s38, 1
    %s40 = scalar_select %p37, %s38, %s39
    %p43 = pneg %p37
    %p44 = scmp.eq.s32.totalorder %s14, 1
    %p45 = por %p43, %p44
    %p46 = scmp.ne.s32.totalorder %s38, %s41
    %p47 = scmp.eq.s32.totalorder %s14, 0
    %p48 = por %p46, %p47
    %p49 = scmp.ne.s32.totalorder %s38, %s41
    %p50 = scmp.eq.s32.totalorder %s19, 1
    %p51 = por %p49, %p50
    %p52 = scmp.ne.s32.totalorder %s41, %s42
    %p53 = scmp.eq.s32.totalorder %s19, 0
    %p54 = por %p52, %p53
    %p55 = scmp.ne.s32.totalorder %s41, %s42
    %p56 = scmp.eq.s32.totalorder %s20, 1
    %p57 = por %p55, %p56
    %p59 = scmp.ne.s32.totalorder %s42, %s58
    %p60 = scmp.eq.s32.totalorder %s20, 0
    %p61 = por %p59, %p60
    %s62 = ssub.s32 %s21, %s33
    %p63 = scmp.eq.s32.totalorder %s62, 0
    %s65 = sadd.s32 %s64, 1
    %s66 = scalar_select %p63, %s64, %s65
    %p69 = pneg %p63
    %p70 = scmp.eq.s32.totalorder %s14, 1
    %p71 = por %p69, %p70
    %p72 = scmp.ne.s32.totalorder %s64, %s67
    %p73 = scmp.eq.s32.totalorder %s14, 0
    %p74 = por %p72, %p73
    %p75 = scmp.ne.s32.totalorder %s64, %s67
    %p76 = scmp.eq.s32.totalorder %s19, 1
    %p77 = por %p75, %p76
    %p78 = scmp.ne.s32.totalorder %s67, %s68
    %p79 = scmp.eq.s32.totalorder %s19, 0
    %p80 = por %p78, %p79
    %p81 = scmp.ne.s32.totalorder %s67, %s68
    %p82 = scmp.eq.s32.totalorder %s20, 1
    %p83 = por %p81, %p82
    %p85 = scmp.ne.s32.totalorder %s68, %s84
    %p86 = scmp.eq.s32.totalorder %s20, 0
    %p87 = por %p85, %p86
    %s89 = sadd.s32 %s88, 1
    %p92 = scmp.eq.s32.totalorder %s14, 1
    %p93 = scmp.ne.s32.totalorder %s88, %s90
    %p94 = scmp.eq.s32.totalorder %s14, 0
    %p95 = por %p93, %p94
    %p96 = scmp.ne.s32.totalorder %s88, %s90
    %p97 = scmp.eq.s32.totalorder %s19, 1
    %p98 = por %p96, %p97
    %p99 = scmp.ne.s32.totalorder %s90, %s91
    %p100 = scmp.eq.s32.totalorder %s19, 0
    %p101 = por %p99, %p100
    %p102 = scmp.ne.s32.totalorder %s90, %s91
    %p103 = scmp.eq.s32.totalorder %s20, 1
    %p104 = por %p102, %p103
    %p106 = scmp.ne.s32.totalorder %s91, %s105
    %p107 = scmp.eq.s32.totalorder %s20, 0
    %p108 = por %p106, %p107
    %s110 = sadd.s32 %s109, 1
    %p113 = scmp.eq.s32.totalorder %s14, 1
    %p114 = scmp.ne.s32.totalorder %s109, %s111
    %p115 = scmp.eq.s32.totalorder %s14, 0
    %p116 = por %p114, %p115
    %p117 = scmp.ne.s32.totalorder %s109, %s111
    %p118 = scmp.eq.s32.totalorder %s19, 1
    %p119 = por %p117, %p118
    %p120 = scmp.ne.s32.totalorder %s111, %s112
    %p121 = scmp.eq.s32.totalorder %s19, 0
    %p122 = por %p120, %p121
    %p123 = scmp.ne.s32.totalorder %s111, %s112
    %p124 = scmp.eq.s32.totalorder %s20, 1
    %p125 = por %p123, %p124
    %p127 = scmp.ne.s32.totalorder %s112, %s126
    %p128 = scmp.eq.s32.totalorder %s20, 0
    %p129 = por %p127, %p128
    %s131 = sadd.s32 %s130, 1
    %p134 = scmp.eq.s32.totalorder %s14, 1
    %p135 = scmp.ne.s32.totalorder %s130, %s132
    %p136 = scmp.eq.s32.totalorder %s14, 0
    %p137 = por %p135, %p136
    %p138 = scmp.ne.s32.totalorder %s130, %s132
    %p139 = scmp.eq.s32.totalorder %s19, 1
    %p140 = por %p138, %p139
    %p141 = scmp.ne.s32.totalorder %s132, %s133
    %p142 = scmp.eq.s32.totalorder %s19, 0
    %p143 = por %p141, %p142
    %p144 = scmp.ne.s32.totalorder %s132, %s133
    %p145 = scmp.eq.s32.totalorder %s20, 1
    %p146 = por %p144, %p145
    %p148 = scmp.ne.s32.totalorder %s133, %s147
    %p149 = scmp.eq.s32.totalorder %s20, 0
    %p150 = por %p148, %p149
    %s152 = sadd.s32 %s151, 1
    %p155 = scmp.eq.s32.totalorder %s14, 1
    %p156 = scmp.ne.s32.totalorder %s151, %s153
    %p157 = scmp.eq.s32.totalorder %s14, 0
    %p158 = por %p156, %p157
    %p159 = scmp.ne.s32.totalorder %s151, %s153
    %p160 = scmp.eq.s32.totalorder %s19, 1
    %p161 = por %p159, %p160
    %p162 = scmp.ne.s32.totalorder %s153, %s154
    %p163 = scmp.eq.s32.totalorder %s19, 0
    %p164 = por %p162, %p163
    %p165 = scmp.ne.s32.totalorder %s153, %s154
    %p166 = scmp.eq.s32.totalorder %s20, 1
    %p167 = por %p165, %p166
    %p169 = scmp.ne.s32.totalorder %s154, %s168
    %p170 = scmp.eq.s32.totalorder %s20, 0
    %p171 = por %p169, %p170
    %s173 = sadd.s32 %s172, 1
    %p176 = scmp.eq.s32.totalorder %s14, 1
    %p177 = scmp.ne.s32.totalorder %s172, %s174
    %p178 = scmp.eq.s32.totalorder %s14, 0
    %p179 = por %p177, %p178
    %p180 = scmp.ne.s32.totalorder %s172, %s174
    %p181 = scmp.eq.s32.totalorder %s19, 1
    %p182 = por %p180, %p181
    %p183 = scmp.ne.s32.totalorder %s174, %s175
    %p184 = scmp.eq.s32.totalorder %s19, 0
    %p185 = por %p183, %p184
    %p186 = scmp.ne.s32.totalorder %s174, %s175
    %p187 = scmp.eq.s32.totalorder %s20, 1
    %p188 = por %p186, %p187
    %p190 = scmp.ne.s32.totalorder %s175, %s189
    %p191 = scmp.eq.s32.totalorder %s20, 0
    %p192 = por %p190, %p191
    %s194 = sadd.s32 %s193, 1
    %p197 = scmp.eq.s32.totalorder %s14, 1
    %p198 = scmp.ne.s32.totalorder %s193, %s195
    %p199 = scmp.eq.s32.totalorder %s14, 0
    %p200 = por %p198, %p199
    %p201 = scmp.ne.s32.totalorder %s193, %s195
    %p202 = scmp.eq.s32.totalorder %s19, 1
    %p203 = por %p201, %p202
    %p204 = scmp.ne.s32.totalorder %s195, %s196
    %p205 = scmp.eq.s32.totalorder %s19, 0
    %p206 = por %p204, %p205
    %p207 = scmp.ne.s32.totalorder %s195, %s196
    %p208 = scmp.eq.s32.totalorder %s20, 1
    %p209 = por %p207, %p208
    %p211 = scmp.ne.s32.totalorder %s196, %s210
    %p212 = scmp.eq.s32.totalorder %s20, 0
    %p213 = por %p211, %p212
    %s214 = ssub.s32 %s21, %s33
    %s215 = ssub.s32 %s22, %s29
    %s216 = sor.u32 %s214, %s215
    %p217 = scmp.eq.s32.totalorder %s216, 0
    %s219 = sadd.s32 %s218, 1
    %s220 = scalar_select %p217, %s218, %s219
    %p223 = pneg %p217
    %p224 = scmp.eq.s32.totalorder %s14, 1
    %p225 = por %p223, %p224
    %p226 = scmp.ne.s32.totalorder %s218, %s221
    %p227 = scmp.eq.s32.totalorder %s14, 0
    %p228 = por %p226, %p227
    %p229 = scmp.ne.s32.totalorder %s218, %s221
    %p230 = scmp.eq.s32.totalorder %s19, 1
    %p231 = por %p229, %p230
    %p232 = scmp.ne.s32.totalorder %s221, %s222
    %p233 = scmp.eq.s32.totalorder %s19, 0
    %p234 = por %p232, %p233
    %p235 = scmp.ne.s32.totalorder %s221, %s222
    %p236 = scmp.eq.s32.totalorder %s20, 1
    %p237 = por %p235, %p236
    %p239 = scmp.ne.s32.totalorder %s222, %s238
    %p240 = scmp.eq.s32.totalorder %s20, 0
    %p241 = por %p239, %p240
    %p242 = scmp.le.s32.totalorder 1, %s14
    %p243 = scmp.lt.s32.totalorder %s14, 3
    %p244 = pnand %p242, %p243
    %p245 = pneg %p244
    // Predicated region
    $region9: #{checkpoint.13} parent=5 // pred_check
      _
    $region10: #{checkpoint.13} parent=5 // pred_check_branch
      %247 = sbr.rel (%p244) target = $region12
    $region11: #{checkpoint.13} parent=5 // pred_region
      %s248 = ssub.s32 %s14, 1
      // Predicated region
      $region13: #{checkpoint.13} parent=11 // pred_check
        %p249 = pneg %p101
      $region14: #{checkpoint.13} parent=11 // pred_check_branch
        %251 = sbr.rel (%p249) target = $region16
      $region15: #{checkpoint.13} parent=11 // pred_region
        _
      $region16: #{checkpoint.13} parent=11 // pred_fallthru
        _
      // Predicated region
      $region17: #{checkpoint.13} parent=11 // pred_check
        %p252 = pneg %p122
      $region18: #{checkpoint.13} parent=11 // pred_check_branch
        %254 = sbr.rel (%p252) target = $region20
      $region19: #{checkpoint.13} parent=11 // pred_region
        _
      $region20: #{checkpoint.13} parent=11 // pred_fallthru
        _
      // Predicated region
      $region21: #{checkpoint.13} parent=11 // pred_check
        %p255 = pneg %p143
      $region22: #{checkpoint.13} parent=11 // pred_check_branch
        %257 = sbr.rel (%p255) target = $region24
      $region23: #{checkpoint.13} parent=11 // pred_region
        _
      $region24: #{checkpoint.13} parent=11 // pred_fallthru
        _
      // Predicated region
      $region25: #{checkpoint.13} parent=11 // pred_check
        %p258 = pneg %p164
      $region26: #{checkpoint.13} parent=11 // pred_check_branch
        %260 = sbr.rel (%p258) target = $region28
      $region27: #{checkpoint.13} parent=11 // pred_region
        _
      $region28: #{checkpoint.13} parent=11 // pred_fallthru
        _
      // Predicated region
      $region29: #{checkpoint.13} parent=11 // pred_check
        %p261 = pneg %p185
      $region30: #{checkpoint.13} parent=11 // pred_check_branch
        %263 = sbr.rel (%p261) target = $region32
      $region31: #{checkpoint.13} parent=11 // pred_region
        _
      $region32: #{checkpoint.13} parent=11 // pred_fallthru
        _
      // Predicated region
      $region33: #{checkpoint.13} parent=11 // pred_check
        %p264 = pneg %p206
      $region34: #{checkpoint.13} parent=11 // pred_check_branch
        %266 = sbr.rel (%p264) target = $region36
      $region35: #{checkpoint.13} parent=11 // pred_region
        _
      $region36: #{checkpoint.13} parent=11 // pred_fallthru
        _
    $region12: #{checkpoint.13} parent=5 // pred_fallthru
      _
    %p267 = scmp.lt.s32.totalorder %s14, 2
    // Predicated region
    $region37: #{checkpoint.13} parent=5 // pred_check
      %p268 = pneg %p267
    $region38: #{checkpoint.13} parent=5 // pred_check_branch
      %270 = sbr.rel (%p268) target = $region40
    $region39: #{checkpoint.13} parent=5 // pred_region
      // Predicated region
      $region41: #{checkpoint.13} parent=39 // pred_check
        %p271 = pneg %p48
      $region42: #{checkpoint.13} parent=39 // pred_check_branch
        %273 = sbr.rel (%p271) target = $region44
      $region43: #{checkpoint.13} parent=39 // pred_region
        %p274 = scmp.lt.s32.totalorder %s21, 1
        %s275 = scalar_select %p274, %s21, 1
        %p276 = scmp.lt.s32.totalorder %s22, 0
        %s277 = scalar_select %p276, %s22, 0
        %s278 = sadd.s32 %s277, %s275
        %s279 = smul.addr %s278, 8
        %s280 = scalar_lea.vmem %s0, %s279
      $region44: #{checkpoint.13} parent=39 // pred_fallthru
        _
      // Predicated region
      $region45: #{checkpoint.13} parent=39 // pred_check
        %p281 = pneg %p74
      $region46: #{checkpoint.13} parent=39 // pred_check_branch
        %283 = sbr.rel (%p281) target = $region48
      $region47: #{checkpoint.13} parent=39 // pred_region
        %p284 = scmp.lt.s32.totalorder %s21, 1
        %s285 = scalar_select %p284, %s21, 1
        %s286 = smul.addr %s285, 2
        %s287 = smul.addr %s286, 4
        %s288 = scalar_lea.vmem %s1, %s287
      $region48: #{checkpoint.13} parent=39 // pred_fallthru
        _
    $region40: #{checkpoint.13} parent=5 // pred_fallthru
      _
    %p289 = scmp.le.s32.totalorder 1, %s14
    %p290 = scmp.lt.s32.totalorder %s14, 3
    %p291 = pnand %p289, %p290
    %p292 = pneg %p291
    // Predicated region
    $region49: #{checkpoint.13} parent=5 // pred_check
      _
    $region50: #{checkpoint.13} parent=5 // pred_check_branch
      %294 = sbr.rel (%p291) target = $region52
    $region51: #{checkpoint.13} parent=5 // pred_region
      %s295 = ssub.s32 %s14, 1
      %p296 = scmp.lt.s32.totalorder %s23, 1
      %s297 = scalar_select %p296, %s23, 1
      %p298 = scmp.lt.s32.totalorder %s24, 0
      %s299 = scalar_select %p298, %s24, 0
      %s300 = sadd.s32 %s299, %s297
      %s301 = smul.addr %s300, 8
      %s302 = scalar_lea.vmem %s0, %s301
      %p303 = pneg %p54
      %p304 = pneg %p51
      %p305 = scmp.lt.s32.totalorder %s23, 1
      %s306 = scalar_select %p305, %s23, 1
      %s307 = smul.addr %s306, 2
      %s308 = smul.addr %s307, 4
      %s309 = scalar_lea.vmem %s1, %s308
      %p310 = pneg %p80
      %p311 = pneg %p77
      %p312 = pneg %p101
      %p313 = pneg %p98
      %p314 = pneg %p122
      %p315 = pneg %p119
      %p316 = pneg %p143
      %p317 = pneg %p140
      %p318 = pneg %p164
      %p319 = pneg %p161
      %p320 = pneg %p185
      %p321 = pneg %p182
      %p322 = pneg %p206
      %p323 = pneg %p203
      %p324 = pneg %p234
      %p325 = pneg %p231
      %p326 = scmp.lt.s32.totalorder %s23, 1
      %s327 = scalar_select %p326, %s23, 1
      %p328 = scmp.lt.s32.totalorder %s24, 0
      %s329 = scalar_select %p328, %s24, 0
      %s330 = sadd.s32 %s329, %s327
      %s331 = smul.addr %s330, 8
      %s332 = scalar_lea.vmem %s8, %s331
      %p333 = scmp.lt.s32.totalorder %s23, 1
      %s334 = scalar_select %p333, %s23, 1
      %p335 = scmp.lt.s32.totalorder %s24, 0
      %s336 = scalar_select %p335, %s24, 0
      %s337 = sadd.s32 %s336, %s334
      %s338 = smul.addr %s337, 8
      %s339 = scalar_lea.vmem %s0, %s338
      %p340 = scmp.lt.s32.totalorder %s23, 1
      %s341 = scalar_select %p340, %s23, 1
      %s342 = smul.addr %s341, 2
      %s343 = smul.addr %s342, 4
      %s344 = scalar_lea.vmem %s1, %s343
      %p345 = scmp.lt.s32.totalorder %s23, 1
      %s346 = scalar_select %p345, %s23, 1
      %p347 = scmp.lt.s32.totalorder %s24, 0
      %s348 = scalar_select %p347, %s24, 0
      %s349 = sadd.s32 %s348, %s346
      %s350 = smul.addr %s349, 8
      %s351 = scalar_lea.vmem %s8, %s350
      %v353 = vld [vmem:[%s339] sm:$0xff]
      %v354 = vpack.c.bf16 %v353, %v353
      %v355 = vld [vmem:[%s2] sm:$0xf]
      %v356 = vld [vmem:[%s2 + $0x4] sm:$0xf]
      %v357 = vld [vmem:[%s2 + $0x8] sm:$0xf]
      %v358 = vld [vmem:[%s2 + $0xc] sm:$0xf]
      %v359 = vld [vmem:[%s3] sm:$0x1]
      %v361 = vperm.slane %v359, 0
      %v367 = vunpack.c.l.b16 %v355
      %v368 = vunpack.c.l.b16 %v356
      %v369 = vunpack.c.l.b16 %v357
      %v370 = vunpack.c.l.b16 %v358
      %v371 = vpack.c.b16 %v368, %v367
      %v372 = vpack.c.b16 %v370, %v369
      %vm375 = vcmask 261120
      %v377 = vsel %vm375, %v354, 0
      %379 = vmatpush.bf16.msra.mxu0 0
      %380 = vmatpush.bf16.msra.mxu0 0
      %381 = vmatpush.bf16.msra.mxu0 0
      %382 = vmatpush.bf16.msra.mxu0 0
      %383 = vmatpush.bf16.msra.mxu0 0
      %384 = vmatpush.bf16.msra.mxu0 0
      %385 = vmatpush.bf16.msra.mxu0 %v372
      %386 = vmatpush.bf16.msra.mxu0 %v371
      %387 = vmatmul.bf16.gmra.mxu0 %v377
      %v388 = vpop.f32.mrf.mxu0
      %v389 = vadd.f32 %v361, %v388
      %v390 = vpop.f32.mrf.mxu0
      %391 = vdwg.mxu0
      %v392 = vpack.c.bf16 %v389, %v389
      %v393 = vld [vmem:[%s344] sm:$0xf]
      %v394 = vld [vmem:[%s344 + $0x4] sm:$0x1]
      %v397 = vunpack.c.l.b16 %v393
      %v398 = vunpack.c.l.b16 %v394
      %v399 = vpack.c.b16 %v398, %v397
      %vm400 = vcmask 64512
      %v402 = vsel %vm400, %v392, 0
      %v405 = vsel %vm400, %v399, 0
      %407 = vmatpush.bf16.xpose.msra.mxu0 0
      %408 = vmatpush.bf16.xpose.msra.mxu0 0
      %409 = vmatpush.bf16.xpose.msra.mxu0 0
      %410 = vmatpush.bf16.xpose.msra.mxu0 0
      %411 = vmatpush.bf16.xpose.msra.mxu0 0
      %412 = vmatpush.bf16.xpose.msra.mxu0 0
      %413 = vmatpush.bf16.xpose.msra.mxu0 0
      %414 = vmatpush.bf16.xpose.msra.mxu0 %v405
      %415 = vmatmul.bf16.gmra.mxu0 %v402
      %v416 = vpop.f32.mrf.mxu0
      %v417 = vadd.f32 0.0, %v416
      %v418 = vpop.f32.mrf.mxu0
      %419 = vdwg.mxu0
      %vm420 = vcmask 80896
      %v421 = vsel %vm420, %v417, -inf
      %422 = vmax.xlane.f32.xlu0 %v421
      %v423 = vpop.xlane.xlu0 %422
      %v424 = vsub.f32 %v417, %v423
      %v425 = vmul.f32 %v424, 1.442695
      %v426 = vpow.pop %v425
      %v427 = vsel %vm420, %v426, 0.0
      %428 = vadd.xlane.f32.xlu0 %v427
      %v429 = vpop.xlane.xlu0 %428
      %v430 = vrcp.pop %v429
      %v431 = vmul.f32 %v426, %v430
      %v432 = vpack.c.bf16 %v431, %v431
      %433 = vrot.lane.b32.xlu0 %v399, 96
      %v434 = vpop.permute.xlu0 %433
      %v436 = vsel %vm420, %v432, 0
      %vm438 = vcmask 1044480
      %v440 = vsel %vm438, %v434, 0
      %442 = vmatpush.bf16.msra.mxu0 0
      %443 = vmatpush.bf16.msra.mxu0 0
      %444 = vmatpush.bf16.msra.mxu0 0
      %445 = vmatpush.bf16.msra.mxu0 0
      %446 = vmatpush.bf16.msra.mxu0 0
      %447 = vmatpush.bf16.msra.mxu0 0
      %448 = vmatpush.bf16.msra.mxu0 0
      %449 = vmatpush.bf16.msra.mxu0 %v440
      %450 = vmatmul.bf16.gmra.mxu0 %v436
      %v451 = vpop.f32.mrf.mxu0
      %v452 = vadd.f32 0.0, %v451
      %v453 = vpop.f32.mrf.mxu0
      %454 = vdwg.mxu0
      %v456 = vunpack.c.l.b16 %v392
      %v457 = vpack.c.b16 %v456, %v456
      %458 = vrot.lane.b32.xlu0 %v457, 120
      %v459 = vpop.permute.xlu0 %458
      %460 = vrot.lane.b32.xlu0 %v399, 120
      %v461 = vpop.permute.xlu0 %460
      %v463 = vsel %vm400, %v459, 0
      %v466 = vsel %vm400, %v461, 0
      %468 = vmatpush.bf16.xpose.msra.mxu0 0
      %469 = vmatpush.bf16.xpose.msra.mxu0 0
      %470 = vmatpush.bf16.xpose.msra.mxu0 0
      %471 = vmatpush.bf16.xpose.msra.mxu0 0
      %472 = vmatpush.bf16.xpose.msra.mxu0 0
      %473 = vmatpush.bf16.xpose.msra.mxu0 0
      %474 = vmatpush.bf16.xpose.msra.mxu0 0
      %475 = vmatpush.bf16.xpose.msra.mxu0 %v466
      %476 = vmatmul.bf16.gmra.mxu0 %v463
      %v477 = vpop.f32.mrf.mxu0
      %v478 = vadd.f32 0.0, %v477
      %v479 = vpop.f32.mrf.mxu0
      %480 = vdwg.mxu0
      %v481 = vsel %vm420, %v478, -inf
      %482 = vmax.xlane.f32.xlu0 %v481
      %v483 = vpop.xlane.xlu0 %482
      %v484 = vsub.f32 %v478, %v483
      %v485 = vmul.f32 %v484, 1.442695
      %v486 = vpow.pop %v485
      %v487 = vsel %vm420, %v486, 0.0
      %488 = vadd.xlane.f32.xlu0 %v487
      %v489 = vpop.xlane.xlu0 %488
      %v490 = vrcp.pop %v489
      %v491 = vmul.f32 %v486, %v490
      %v492 = vpack.c.bf16 %v491, %v491
      %493 = vrot.lane.b32.xlu0 %v399, 88
      %v494 = vpop.permute.xlu0 %493
      %v496 = vsel %vm420, %v492, 0
      %v499 = vsel %vm438, %v494, 0
      %501 = vmatpush.bf16.msra.mxu0 0
      %502 = vmatpush.bf16.msra.mxu0 0
      %503 = vmatpush.bf16.msra.mxu0 0
      %504 = vmatpush.bf16.msra.mxu0 0
      %505 = vmatpush.bf16.msra.mxu0 0
      %506 = vmatpush.bf16.msra.mxu0 0
      %507 = vmatpush.bf16.msra.mxu0 0
      %508 = vmatpush.bf16.msra.mxu0 %v499
      %509 = vmatmul.bf16.gmra.mxu0 %v496
      %v510 = vpop.f32.mrf.mxu0
      %v511 = vadd.f32 0.0, %v510
      %v512 = vpop.f32.mrf.mxu0
      %513 = vdwg.mxu0
      %514 = vrot.lane.b32.xlu0 %v457, 112
      %v515 = vpop.permute.xlu0 %514
      %516 = vrot.lane.b32.xlu0 %v399, 112
      %v517 = vpop.permute.xlu0 %516
      %v519 = vsel %vm400, %v515, 0
      %v522 = vsel %vm400, %v517, 0
      %524 = vmatpush.bf16.xpose.msra.mxu0 0
      %525 = vmatpush.bf16.xpose.msra.mxu0 0
      %526 = vmatpush.bf16.xpose.msra.mxu0 0
      %527 = vmatpush.bf16.xpose.msra.mxu0 0
      %528 = vmatpush.bf16.xpose.msra.mxu0 0
      %529 = vmatpush.bf16.xpose.msra.mxu0 0
      %530 = vmatpush.bf16.xpose.msra.mxu0 0
      %531 = vmatpush.bf16.xpose.msra.mxu0 %v522
      %532 = vmatmul.bf16.gmra.mxu0 %v519
      %v533 = vpop.f32.mrf.mxu0
      %v534 = vadd.f32 0.0, %v533
      %v535 = vpop.f32.mrf.mxu0
      %536 = vdwg.mxu0
      %v537 = vsel %vm420, %v534, -inf
      %538 = vmax.xlane.f32.xlu0 %v537
      %v539 = vpop.xlane.xlu0 %538
      %v540 = vsub.f32 %v534, %v539
      %v541 = vmul.f32 %v540, 1.442695
      %v542 = vpow.pop %v541
      %v543 = vsel %vm420, %v542, 0.0
      %544 = vadd.xlane.f32.xlu0 %v543
      %v545 = vpop.xlane.xlu0 %544
      %v546 = vrcp.pop %v545
      %v547 = vmul.f32 %v542, %v546
      %v548 = vpack.c.bf16 %v547, %v547
      %549 = vrot.lane.b32.xlu0 %v399, 80
      %v550 = vpop.permute.xlu0 %549
      %v552 = vsel %vm420, %v548, 0
      %v555 = vsel %vm438, %v550, 0
      %557 = vmatpush.bf16.msra.mxu0 0
      %558 = vmatpush.bf16.msra.mxu0 0
      %559 = vmatpush.bf16.msra.mxu0 0
      %560 = vmatpush.bf16.msra.mxu0 0
      %561 = vmatpush.bf16.msra.mxu0 0
      %562 = vmatpush.bf16.msra.mxu0 0
      %563 = vmatpush.bf16.msra.mxu0 0
      %564 = vmatpush.bf16.msra.mxu0 %v555
      %565 = vmatmul.bf16.gmra.mxu0 %v552
      %v566 = vpop.f32.mrf.mxu0
      %v567 = vadd.f32 0.0, %v566
      %v568 = vpop.f32.mrf.mxu0
      %569 = vdwg.mxu0
      %570 = vrot.lane.b32.xlu0 %v457, 104
      %v571 = vpop.permute.xlu0 %570
      %572 = vrot.lane.b32.xlu0 %v399, 104
      %v573 = vpop.permute.xlu0 %572
      %v575 = vsel %vm400, %v571, 0
      %v578 = vsel %vm400, %v573, 0
      %580 = vmatpush.bf16.xpose.msra.mxu0 0
      %581 = vmatpush.bf16.xpose.msra.mxu0 0
      %582 = vmatpush.bf16.xpose.msra.mxu0 0
      %583 = vmatpush.bf16.xpose.msra.mxu0 0
      %584 = vmatpush.bf16.xpose.msra.mxu0 0
      %585 = vmatpush.bf16.xpose.msra.mxu0 0
      %586 = vmatpush.bf16.xpose.msra.mxu0 0
      %587 = vmatpush.bf16.xpose.msra.mxu0 %v578
      %588 = vmatmul.bf16.gmra.mxu0 %v575
      %v589 = vpop.f32.mrf.mxu0
      %v590 = vadd.f32 0.0, %v589
      %v591 = vpop.f32.mrf.mxu0
      %592 = vdwg.mxu0
      %v593 = vsel %vm420, %v590, -inf
      %594 = vmax.xlane.f32.xlu0 %v593
      %v595 = vpop.xlane.xlu0 %594
      %v596 = vsub.f32 %v590, %v595
      %v597 = vmul.f32 %v596, 1.442695
      %v598 = vpow.pop %v597
      %v599 = vsel %vm420, %v598, 0.0
      %600 = vadd.xlane.f32.xlu0 %v599
      %v601 = vpop.xlane.xlu0 %600
      %v602 = vrcp.pop %v601
      %v603 = vmul.f32 %v598, %v602
      %v604 = vpack.c.bf16 %v603, %v603
      %605 = vrot.lane.b32.xlu0 %v399, 72
      %v606 = vpop.permute.xlu0 %605
      %v608 = vsel %vm420, %v604, 0
      %v611 = vsel %vm438, %v606, 0
      %613 = vmatpush.bf16.msra.mxu0 0
      %614 = vmatpush.bf16.msra.mxu0 0
      %615 = vmatpush.bf16.msra.mxu0 0
      %616 = vmatpush.bf16.msra.mxu0 0
      %617 = vmatpush.bf16.msra.mxu0 0
      %618 = vmatpush.bf16.msra.mxu0 0
      %619 = vmatpush.bf16.msra.mxu0 0
      %620 = vmatpush.bf16.msra.mxu0 %v611
      %621 = vmatmul.bf16.gmra.mxu0 %v608
      %v622 = vpop.f32.mrf.mxu0
      %v623 = vadd.f32 0.0, %v622
      %v624 = vpop.f32.mrf.mxu0
      %625 = vdwg.mxu0
      %627 = vrot.lane.b32.xlu0 %v511, 8
      %v628 = vpop.permute.xlu0 %627
      %631 = vrot.lane.b32.xlu0 %v567, 16
      %v632 = vpop.permute.xlu0 %631
      %635 = vrot.lane.b32.xlu0 %v623, 24
      %v636 = vpop.permute.xlu0 %635
      %v638 = vsel %vm400, %v452, %v628
      %vm639 = vcmask 130048
      %v640 = vsel %vm639, %v638, %v632
      %vm641 = vcmask 195584
      %v642 = vsel %vm641, %v640, %v636
      %v643 = vpack.c.bf16 %v642, %v642
      %v644 = vld [vmem:[%s4] sm:$0xf]
      %v645 = vld [vmem:[%s4 + $0x4] sm:$0xf]
      %v646 = vld [vmem:[%s4 + $0x8] sm:$0xf]
      %v647 = vld [vmem:[%s4 + $0xc] sm:$0xf]
      %v648 = vld [vmem:[%s5] sm:$0x1]
      %v650 = vperm.slane %v648, 0
      %v656 = vunpack.c.l.b16 %v644
      %v657 = vunpack.c.l.b16 %v645
      %v658 = vunpack.c.l.b16 %v646
      %v659 = vunpack.c.l.b16 %v647
      %v660 = vpack.c.b16 %v657, %v656
      %v661 = vpack.c.b16 %v659, %v658
      %v665 = vsel %vm375, %v643, 0
      %667 = vmatpush.bf16.msra.mxu0 0
      %668 = vmatpush.bf16.msra.mxu0 0
      %669 = vmatpush.bf16.msra.mxu0 0
      %670 = vmatpush.bf16.msra.mxu0 0
      %671 = vmatpush.bf16.msra.mxu0 0
      %672 = vmatpush.bf16.msra.mxu0 0
      %673 = vmatpush.bf16.msra.mxu0 %v661
      %674 = vmatpush.bf16.msra.mxu0 %v660
      %675 = vmatmul.bf16.gmra.mxu0 %v665
      %v676 = vpop.f32.mrf.mxu0
      %v677 = vadd.f32 %v650, %v676
      %v678 = vpop.f32.mrf.mxu0
      %679 = vdwg.mxu0
      %v680 = vadd.f32 %v353, %v677
      %v681 = vsel %vm375, %v680, 0.0
      %682 = vadd.xlane.f32.xlu0 %v681
      %v683 = vpop.xlane.xlu0 %682
      %v684 = vrcp.pop 32.0
      %v685 = vmul.f32 32.0, %v684
      %v686 = vsub.f32 1.0, %v685
      %v687 = vmul.f32 %v684, %v686
      %v688 = vadd.f32 %v684, %v687
      %vm689 = vweird.f32 %v684
      %v690 = vsel %vm689, %v684, %v688
      %v691 = vmul.f32 %v683, %v690
      %v692 = vsub.f32 %v680, %v691
      %v693 = vmul.f32 %v692, %v692
      %v694 = vsel %vm375, %v693, 0.0
      %695 = vadd.xlane.f32.xlu0 %v694
      %v696 = vpop.xlane.xlu0 %695
      %v697 = vmul.f32 %v696, %v690
      %v698 = vadd.f32 %v697, 1e-05
      %v699 = vrsqrt.pop %v698
      %v700 = vmul.f32 %v699, %v698
      %v701 = vmul.f32 %v700, %v699
      %v702 = vmul.f32 0.5, %v701
      %v703 = vsub.f32 1.5, %v702
      %v704 = vmul.f32 %v699, %v703
      %vm705 = vweird.f32 %v698
      %vm706 = vweird.f32 %v699
      %vm707 = vmor %vm705, %vm706
      %v708 = vsel %vm707, %v699, %v704
      %v709 = vmul.f32 %v692, %v708
      %v710 = vld [vmem:[%s6] sm:$0x1]
      %v712 = vperm.slane %v710, 0
      %v714 = vmul.f32 %v709, %v712
      %v715 = vld [vmem:[%s7] sm:$0x1]
      %v717 = vperm.slane %v715, 0
      %v719 = vadd.f32 %v714, %v717
      %720 = vst.msk [vmem:[%s351] sm:$0xff] %vm375, %v719
      %p721 = scmp.lt.s32.totalorder %s23, 1
      %s722 = scalar_select %p721, %s23, 1
      %p723 = scmp.lt.s32.totalorder %s24, 0
      %s724 = scalar_select %p723, %s24, 0
      %s725 = sadd.s32 %s724, %s722
      %s726 = smul.addr %s725, 8
      %s727 = scalar_lea.vmem %s8, %s726
      // Predicated region
      $region53: #{checkpoint.13} parent=51 // pred_check
        %p728 = pneg %p231
      $region54: #{checkpoint.13} parent=51 // pred_check_branch
        %730 = sbr.rel (%p728) target = $region56
      $region55: #{checkpoint.13} parent=51 // pred_region
        _
      $region56: #{checkpoint.13} parent=51 // pred_fallthru
        _
    $region52: #{checkpoint.13} parent=5 // pred_fallthru
      _
    %p731 = scmp.le.s32.totalorder 2, %s14
    // Predicated region
    $region57: #{checkpoint.13} parent=5 // pred_check
      %p732 = pneg %p731
    $region58: #{checkpoint.13} parent=5 // pred_check_branch
      %734 = sbr.rel (%p732) target = $region60
    $region59: #{checkpoint.13} parent=5 // pred_region
      %s735 = ssub.s32 %s14, 2
      // Predicated region
      $region61: #{checkpoint.13} parent=59 // pred_check
        %p736 = pneg %p237
      $region62: #{checkpoint.13} parent=59 // pred_check_branch
        %738 = sbr.rel (%p736) target = $region64
      $region63: #{checkpoint.13} parent=59 // pred_region
        %p739 = scmp.lt.s32.totalorder %s25, 1
        %s740 = scalar_select %p739, %s25, 1
        %p741 = scmp.lt.s32.totalorder %s26, 0
        %s742 = scalar_select %p741, %s26, 0
        %s743 = sadd.s32 %s742, %s740
        %s744 = smul.addr %s743, 8
        %s745 = scalar_lea.vmem %s8, %s744
      $region64: #{checkpoint.13} parent=59 // pred_fallthru
        _
    $region60: #{checkpoint.13} parent=5 // pred_fallthru
      _
  $region6: #{checkpoint.13} parent=0 // loop_footer
    %s18 = sadd.s32 1, %s14
  $region7: #{checkpoint.13} parent=0 // loop_footer_branch
    %13 = sbr.rel target = $region3
  $region8: #{checkpoint.13} parent=0 // loop_exit
    _

// kernel: checkpoint.14
$region0: #{checkpoint.14}
  #allocation0 [shape = 'u32[]', space=smem, size = 0x4, offset = 0x4, fixed_abs, tag = 'smem constant byte address 0x4 - core index']
  #allocation1 [shape = 'u32[72,128]{1,0:T(1,128)}', space=vmem, size = 0x9000, scoped, tag = 'internal scratch']
  #allocation2 [shape = 'f32[16,32]{1,0:T(8,128)}', space=vmem, size = 0x2000, scoped, tag = 'scratch operand']
  %s0 = inlined_call_operand.vmem [shape: f32[16,32], index: 0, kind: input, shape index: {}]
  %s1 = inlined_call_operand.vmem [shape: bf16[32,64], index: 1, kind: input, shape index: {}]
  %s2 = inlined_call_operand.vmem [shape: f32[1,64], index: 2, kind: input, shape index: {}]
  %s3 = inlined_call_operand.vmem [shape: bf16[64,32], index: 3, kind: input, shape index: {}]
  %s4 = inlined_call_operand.vmem [shape: f32[1,32], index: 4, kind: input, shape index: {}, may-alias: {4,6}]
  %s5 = inlined_call_operand.vmem [shape: f32[1,32], index: 5, kind: input, shape index: {}]
  %s6 = inlined_call_operand.vmem [shape: f32[1,32], index: 6, kind: input, shape index: {}, may-alias: {4,6}]
  %s7 = inlined_call_operand.vmem [shape: f32[16,32], index: 7, kind: output, shape index: {}]
  %s8 = sld [smem:[#allocation0]]
  $region46: #{checkpoint.14} parent=0
    _
  %s10 = ssub.s32 1, %s8
  %s11 = scalar_select 0, %s10, %s8
  // Predicated region
  $region2: #{checkpoint.14} parent=0 // pred_check
    _
  $region3: #{checkpoint.14} parent=0 // pred_check_branch
    %13 = sbr.rel (0) target = $region5
  $region4: #{checkpoint.14} parent=0 // pred_region
    _
  $region5: #{checkpoint.14} parent=0 // pred_fallthru
    _
  // Predicated region
  $region6: #{checkpoint.14} parent=0 // pred_check
    _
  $region7: #{checkpoint.14} parent=0 // pred_check_branch
    %15 = sbr.rel (0) target = $region9
  $region8: #{checkpoint.14} parent=0 // pred_region
    _
  $region9: #{checkpoint.14} parent=0 // pred_fallthru
    _
  // Predicated region
  $region10: #{checkpoint.14} parent=0 // pred_check
    _
  $region11: #{checkpoint.14} parent=0 // pred_check_branch
    %17 = sbr.rel (0) target = $region13
  $region12: #{checkpoint.14} parent=0 // pred_region
    _
  $region13: #{checkpoint.14} parent=0 // pred_fallthru
    _
  // Predicated region
  $region14: #{checkpoint.14} parent=0 // pred_check
    _
  $region15: #{checkpoint.14} parent=0 // pred_check_branch
    %19 = sbr.rel (0) target = $region17
  $region16: #{checkpoint.14} parent=0 // pred_region
    _
  $region17: #{checkpoint.14} parent=0 // pred_fallthru
    _
  // Predicated region
  $region18: #{checkpoint.14} parent=0 // pred_check
    _
  $region19: #{checkpoint.14} parent=0 // pred_check_branch
    %21 = sbr.rel (0) target = $region21
  $region20: #{checkpoint.14} parent=0 // pred_region
    _
  $region21: #{checkpoint.14} parent=0 // pred_fallthru
    _
  // Predicated region
  $region22: #{checkpoint.14} parent=0 // pred_check
    _
  $region23: #{checkpoint.14} parent=0 // pred_check_branch
    %23 = sbr.rel (0) target = $region25
  $region24: #{checkpoint.14} parent=0 // pred_region
    _
  $region25: #{checkpoint.14} parent=0 // pred_fallthru
    _
  // Predicated region
  $region26: #{checkpoint.14} parent=0 // pred_check
    _
  $region27: #{checkpoint.14} parent=0 // pred_check_branch
    %25 = sbr.rel (0) target = $region29
  $region28: #{checkpoint.14} parent=0 // pred_region
    _
  $region29: #{checkpoint.14} parent=0 // pred_fallthru
    _
  %p27 = scmp.eq.s32.totalorder 0, 0
  // Predicated region
  $region30: #{checkpoint.14} parent=0 // pred_check
    %p28 = pneg %p27
  $region31: #{checkpoint.14} parent=0 // pred_check_branch
    %30 = sbr.rel (%p28) target = $region33
  $region32: #{checkpoint.14} parent=0 // pred_region
    %vm31 = vcmask 261120
    %32 = vst.msk [vmem:[#allocation2] sm:$0xff] %vm31, 0.0
    %33 = vst.msk [vmem:[#allocation2 + $0x8] sm:$0xff] %vm31, 0.0
  $region33: #{checkpoint.14} parent=0 // pred_fallthru
    _
  %v34 = vld [vmem:[%s0] sm:$0xff]
  %v35 = vld [vmem:[%s0 + $0x8] sm:$0xff]
  %v36 = vpack.c.bf16 %v35, %v34
  %v37 = vld [vmem:[%s1] sm:$0xf]
  %v38 = vld [vmem:[%s1 + $0x4] sm:$0xf]
  %v39 = vld [vmem:[%s1 + $0x8] sm:$0xf]
  %v40 = vld [vmem:[%s1 + $0xc] sm:$0xf]
  %v41 = vld [vmem:[%s2] sm:$0x1]
  %v43 = vperm.slane %v41, 0
  %v49 = vunpack.c.l.b16 %v37
  %v50 = vunpack.c.l.b16 %v38
  %v51 = vunpack.c.l.b16 %v39
  %v52 = vunpack.c.l.b16 %v40
  %v53 = vpack.c.b16 %v50, %v49
  %v54 = vpack.c.b16 %v52, %v51
  %vm57 = vcmask 261120
  %v59 = vsel %vm57, %v36, 0
  %61 = vmatpush.bf16.msra.mxu0 0
  %62 = vmatpush.bf16.msra.mxu0 0
  %63 = vmatpush.bf16.msra.mxu0 0
  %64 = vmatpush.bf16.msra.mxu0 0
  %65 = vmatpush.bf16.msra.mxu0 0
  %66 = vmatpush.bf16.msra.mxu0 0
  %67 = vmatpush.bf16.msra.mxu0 %v54
  %68 = vmatpush.bf16.msra.mxu0 %v53
  %69 = vmatmul.bf16.gmra.mxu0 %v59
  %v70 = vpop.f32.mrf.mxu0
  %v71 = vadd.f32 %v43, %v70
  %v72 = vpop.f32.mrf.mxu0
  %v73 = vadd.f32 %v43, %v72
  %74 = vdwg.mxu0
  %v75 = vmax.f32 %v71, 0.0
  %v76 = vmax.f32 %v73, 0.0
  %v77 = vld [vmem:[#allocation2] sm:$0xff]
  %v78 = vld [vmem:[#allocation2 + $0x8] sm:$0xff]
  %v79 = vpack.c.bf16 %v76, %v75
  %v80 = vld [vmem:[%s3] sm:$0xf]
  %v81 = vld [vmem:[%s3 + $0x4] sm:$0xf]
  %v82 = vld [vmem:[%s3 + $0x8] sm:$0xf]
  %v83 = vld [vmem:[%s3 + $0xc] sm:$0xf]
  %v84 = vld [vmem:[%s3 + $0x10] sm:$0xf]
  %v85 = vld [vmem:[%s3 + $0x14] sm:$0xf]
  %v86 = vld [vmem:[%s3 + $0x18] sm:$0xf]
  %v87 = vld [vmem:[%s3 + $0x1c] sm:$0xf]
  %v96 = vunpack.c.l.b16 %v80
  %v97 = vunpack.c.l.b16 %v81
  %v98 = vunpack.c.l.b16 %v82
  %v99 = vunpack.c.l.b16 %v83
  %v100 = vunpack.c.l.b16 %v84
  %v101 = vunpack.c.l.b16 %v85
  %v102 = vunpack.c.l.b16 %v86
  %v103 = vunpack.c.l.b16 %v87
  %v104 = vpack.c.b16 %v97, %v96
  %v105 = vpack.c.b16 %v99, %v98
  %v106 = vpack.c.b16 %v101, %v100
  %v107 = vpack.c.b16 %v103, %v102
  %vm112 = vcmask 523264
  %v114 = vsel %vm112, %v79, 0
  %116 = vmatpush.bf16.msra.mxu0 0
  %117 = vmatpush.bf16.msra.mxu0 0
  %118 = vmatpush.bf16.msra.mxu0 0
  %119 = vmatpush.bf16.msra.mxu0 0
  %120 = vmatpush.bf16.msra.mxu0 %v107
  %121 = vmatpush.bf16.msra.mxu0 %v106
  %122 = vmatpush.bf16.msra.mxu0 %v105
  %123 = vmatpush.bf16.msra.mxu0 %v104
  %124 = vmatmul.bf16.gmra.mxu0 %v114
  %v125 = vpop.f32.mrf.mxu0
  %v126 = vadd.f32 0.0, %v125
  %v127 = vpop.f32.mrf.mxu0
  %v128 = vadd.f32 0.0, %v127
  %129 = vdwg.mxu0
  %v130 = vadd.f32 %v77, %v126
  %v131 = vadd.f32 %v78, %v128
  %132 = vst.msk [vmem:[#allocation2] sm:$0xff] %vm57, %v130
  %133 = vst.msk [vmem:[#allocation2 + $0x8] sm:$0xff] %vm57, %v131
  // Predicated region
  $region34: #{checkpoint.14} parent=0 // pred_check
    %p134 = pneg %p27
  $region35: #{checkpoint.14} parent=0 // pred_check_branch
    %136 = sbr.rel (%p134) target = $region37
  $region36: #{checkpoint.14} parent=0 // pred_region
    %v137 = vld [vmem:[%s0] sm:$0xff]
    %v138 = vld [vmem:[%s0 + $0x8] sm:$0xff]
    %v139 = vld [vmem:[#allocation2] sm:$0xff]
    %v140 = vld [vmem:[#allocation2 + $0x8] sm:$0xff]
    %v141 = vadd.f32 %v137, %v139
    %v142 = vadd.f32 %v138, %v140
    %v143 = vld [vmem:[%s4] sm:$0x1]
    %v145 = vperm.slane %v143, 0
    %v147 = vadd.f32 %v141, %v145
    %v148 = vadd.f32 %v142, %v145
    %v149 = vsel %vm57, %v147, 0.0
    %150 = vadd.xlane.f32.xlu0 %v149
    %v151 = vpop.xlane.xlu0 %150
    %v152 = vsel %vm57, %v148, 0.0
    %153 = vadd.xlane.f32.xlu0 %v152
    %v154 = vpop.xlane.xlu0 %153
    %v155 = vrcp.pop 32.0
    %v156 = vmul.f32 32.0, %v155
    %v157 = vsub.f32 1.0, %v156
    %v158 = vmul.f32 %v155, %v157
    %v159 = vadd.f32 %v155, %v158
    %vm160 = vweird.f32 %v155
    %v161 = vsel %vm160, %v155, %v159
    %v162 = vmul.f32 %v151, %v161
    %v163 = vmul.f32 %v154, %v161
    %v164 = vsub.f32 %v147, %v162
    %v165 = vsub.f32 %v148, %v163
    %v166 = vmul.f32 %v164, %v164
    %v167 = vmul.f32 %v165, %v165
    %v168 = vsel %vm57, %v166, 0.0
    %169 = vadd.xlane.f32.xlu0 %v168
    %v170 = vpop.xlane.xlu0 %169
    %v171 = vsel %vm57, %v167, 0.0
    %172 = vadd.xlane.f32.xlu0 %v171
    %v173 = vpop.xlane.xlu0 %172
    %v174 = vmul.f32 %v170, %v161
    %v175 = vmul.f32 %v173, %v161
    %v176 = vadd.f32 %v174, 1e-05
    %v177 = vadd.f32 %v175, 1e-05
    %v178 = vrsqrt.pop %v176
    %v179 = vmul.f32 %v178, %v176
    %v180 = vmul.f32 %v179, %v178
    %v181 = vmul.f32 0.5, %v180
    %v182 = vsub.f32 1.5, %v181
    %v183 = vmul.f32 %v178, %v182
    %vm184 = vweird.f32 %v176
    %vm185 = vweird.f32 %v178
    %vm186 = vmor %vm184, %vm185
    %v187 = vsel %vm186, %v178, %v183
    %v188 = vrsqrt.pop %v177
    %v189 = vmul.f32 %v188, %v177
    %v190 = vmul.f32 %v189, %v188
    %v191 = vmul.f32 0.5, %v190
    %v192 = vsub.f32 1.5, %v191
    %v193 = vmul.f32 %v188, %v192
    %vm194 = vweird.f32 %v177
    %vm195 = vweird.f32 %v188
    %vm196 = vmor %vm194, %vm195
    %v197 = vsel %vm196, %v188, %v193
    %v198 = vmul.f32 %v164, %v187
    %v199 = vmul.f32 %v165, %v197
    %v200 = vld [vmem:[%s5] sm:$0x1]
    %v202 = vperm.slane %v200, 0
    %v204 = vmul.f32 %v198, %v202
    %v205 = vmul.f32 %v199, %v202
    %v206 = vld [vmem:[%s6] sm:$0x1]
    %v208 = vperm.slane %v206, 0
    %v210 = vadd.f32 %v204, %v208
    %v211 = vadd.f32 %v205, %v208
    %212 = vst.msk [vmem:[%s7] sm:$0xff] %vm57, %v210
    %213 = vst.msk [vmem:[%s7 + $0x8] sm:$0xff] %vm57, %v211
  $region37: #{checkpoint.14} parent=0 // pred_fallthru
    _
  // Predicated region
  $region38: #{checkpoint.14} parent=0 // pred_check
    _
  $region39: #{checkpoint.14} parent=0 // pred_check_branch
    %215 = sbr.rel (0) target = $region41
  $region40: #{checkpoint.14} parent=0 // pred_region
    _
  $region41: #{checkpoint.14} parent=0 // pred_fallthru
    _
  // Predicated region
  $region42: #{checkpoint.14} parent=0 // pred_check
    _
  $region43: #{checkpoint.14} parent=0 // pred_check_branch
    %217 = sbr.rel (0) target = $region45
  $region44: #{checkpoint.14} parent=0 // pred_region
    _
  $region45: #{checkpoint.14} parent=0 // pred_fallthru
    _

// kernel: checkpoint.15
$region0: #{checkpoint.15}
  #allocation0 [shape = 'u32[]', space=smem, size = 0x4, offset = 0x4, fixed_abs, tag = 'smem constant byte address 0x4 - core index']
  #allocation1 [shape = 'u32[72,128]{1,0:T(1,128)}', space=vmem, size = 0x9000, scoped, tag = 'internal scratch']
  %s0 = inlined_call_operand.vmem [shape: f32[16,32], index: 0, kind: input, shape index: {}]
  %s1 = inlined_call_operand.vmem [shape: bf16[32,64], index: 1, kind: input, shape index: {}]
  %s2 = inlined_call_operand.vmem [shape: f32[1,64], index: 2, kind: input, shape index: {}]
  %s3 = inlined_call_operand.vmem [shape: bf16[16,64], index: 3, kind: output, shape index: {}]
  %s4 = sld [smem:[#allocation0]]
  $region22: #{checkpoint.15} parent=0
    _
  %s6 = ssub.s32 1, %s4
  %s7 = scalar_select 0, %s6, %s4
  // Predicated region
  $region2: #{checkpoint.15} parent=0 // pred_check
    _
  $region3: #{checkpoint.15} parent=0 // pred_check_branch
    %9 = sbr.rel (0) target = $region5
  $region4: #{checkpoint.15} parent=0 // pred_region
    _
  $region5: #{checkpoint.15} parent=0 // pred_fallthru
    _
  // Predicated region
  $region6: #{checkpoint.15} parent=0 // pred_check
    _
  $region7: #{checkpoint.15} parent=0 // pred_check_branch
    %11 = sbr.rel (0) target = $region9
  $region8: #{checkpoint.15} parent=0 // pred_region
    _
  $region9: #{checkpoint.15} parent=0 // pred_fallthru
    _
  // Predicated region
  $region10: #{checkpoint.15} parent=0 // pred_check
    _
  $region11: #{checkpoint.15} parent=0 // pred_check_branch
    %13 = sbr.rel (0) target = $region13
  $region12: #{checkpoint.15} parent=0 // pred_region
    _
  $region13: #{checkpoint.15} parent=0 // pred_fallthru
    _
  %v15 = vld [vmem:[%s0] sm:$0xff]
  %v16 = vld [vmem:[%s0 + $0x8] sm:$0xff]
  %v17 = vpack.c.bf16 %v16, %v15
  %v18 = vld [vmem:[%s1] sm:$0xf]
  %v19 = vld [vmem:[%s1 + $0x4] sm:$0xf]
  %v20 = vld [vmem:[%s1 + $0x8] sm:$0xf]
  %v21 = vld [vmem:[%s1 + $0xc] sm:$0xf]
  %v22 = vld [vmem:[%s2] sm:$0x1]
  %v24 = vperm.slane %v22, 0
  %v30 = vunpack.c.l.b16 %v18
  %v31 = vunpack.c.l.b16 %v19
  %v32 = vunpack.c.l.b16 %v20
  %v33 = vunpack.c.l.b16 %v21
  %v34 = vpack.c.b16 %v31, %v30
  %v35 = vpack.c.b16 %v33, %v32
  %vm38 = vcmask 261120
  %v40 = vsel %vm38, %v17, 0
  %42 = vmatpush.bf16.msra.mxu0 0
  %43 = vmatpush.bf16.msra.mxu0 0
  %44 = vmatpush.bf16.msra.mxu0 0
  %45 = vmatpush.bf16.msra.mxu0 0
  %46 = vmatpush.bf16.msra.mxu0 0
  %47 = vmatpush.bf16.msra.mxu0 0
  %48 = vmatpush.bf16.msra.mxu0 %v35
  %49 = vmatpush.bf16.msra.mxu0 %v34
  %50 = vmatmul.bf16.gmra.mxu0 %v40
  %v51 = vpop.f32.mrf.mxu0
  %v52 = vadd.f32 %v24, %v51
  %v53 = vpop.f32.mrf.mxu0
  %v54 = vadd.f32 %v24, %v53
  %55 = vdwg.mxu0
  %v56 = vpack.c.bf16 %v52, %v52
  %v57 = vpack.c.bf16 %v54, %v54
  %vm58 = vcmask 519168
  %59 = vst.msk [vmem:[%s3] sm:$0xf] %vm58, %v56
  %60 = vst.msk [vmem:[%s3 + $0x4] sm:$0xf] %vm58, %v57
  // Predicated region
  $region14: #{checkpoint.15} parent=0 // pred_check
    _
  $region15: #{checkpoint.15} parent=0 // pred_check_branch
    %62 = sbr.rel (0) target = $region17
  $region16: #{checkpoint.15} parent=0 // pred_region
    _
  $region17: #{checkpoint.15} parent=0 // pred_fallthru
    _
  // Predicated region
  $region18: #{checkpoint.15} parent=0 // pred_check
    _
  $region19: #{checkpoint.15} parent=0 // pred_check_branch
    %64 = sbr.rel (0) target = $region21
  $region20: #{checkpoint.15} parent=0 // pred_region
    _
  $region21: #{checkpoint.15} parent=0 // pred_fallthru
    _

// kernel: _lambda_.1
$region0: #{_lambda_.1}
  #allocation0 [shape = 'u32[]', space=smem, size = 0x4, offset = 0x4, fixed_abs, tag = 'smem constant byte address 0x4 - core index']
  #allocation1 [shape = 'u32[72,128]{1,0:T(1,128)}', space=vmem, size = 0x9000, scoped, tag = 'internal scratch']
  %s0 = inlined_call_operand.vmem [shape: f32[16,32], index: 0, kind: input, shape index: {}]
  %s1 = inlined_call_operand.vmem [shape: f32[1,32], index: 1, kind: input, shape index: {}]
  %s2 = inlined_call_operand.vmem [shape: f32[1,32], index: 2, kind: input, shape index: {}]
  %s3 = inlined_call_operand.vmem [shape: f32[16,32], index: 3, kind: output, shape index: {}]
  %s4 = sld [smem:[#allocation0]]
  $region22: #{_lambda_.1} parent=0
    _
  %s6 = ssub.s32 1, %s4
  %s7 = scalar_select 0, %s6, %s4
  // Predicated region
  $region2: #{_lambda_.1} parent=0 // pred_check
    _
  $region3: #{_lambda_.1} parent=0 // pred_check_branch
    %9 = sbr.rel (0) target = $region5
  $region4: #{_lambda_.1} parent=0 // pred_region
    _
  $region5: #{_lambda_.1} parent=0 // pred_fallthru
    _
  // Predicated region
  $region6: #{_lambda_.1} parent=0 // pred_check
    _
  $region7: #{_lambda_.1} parent=0 // pred_check_branch
    %11 = sbr.rel (0) target = $region9
  $region8: #{_lambda_.1} parent=0 // pred_region
    _
  $region9: #{_lambda_.1} parent=0 // pred_fallthru
    _
  // Predicated region
  $region10: #{_lambda_.1} parent=0 // pred_check
    _
  $region11: #{_lambda_.1} parent=0 // pred_check_branch
    %13 = sbr.rel (0) target = $region13
  $region12: #{_lambda_.1} parent=0 // pred_region
    _
  $region13: #{_lambda_.1} parent=0 // pred_fallthru
    _
  %v14 = vld [vmem:[%s0] sm:$0xff]
  %v15 = vld [vmem:[%s0 + $0x8] sm:$0xff]
  %vm16 = vcmask 261120
  %v17 = vsel %vm16, %v14, 0.0
  %18 = vadd.xlane.f32.xlu0 %v17
  %v19 = vpop.xlane.xlu0 %18
  %v20 = vsel %vm16, %v15, 0.0
  %21 = vadd.xlane.f32.xlu0 %v20
  %v22 = vpop.xlane.xlu0 %21
  %v23 = vrcp.pop 32.0
  %v24 = vmul.f32 32.0, %v23
  %v25 = vsub.f32 1.0, %v24
  %v26 = vmul.f32 %v23, %v25
  %v27 = vadd.f32 %v23, %v26
  %vm28 = vweird.f32 %v23
  %v29 = vsel %vm28, %v23, %v27
  %v30 = vmul.f32 %v19, %v29
  %v31 = vmul.f32 %v22, %v29
  %v32 = vsub.f32 %v14, %v30
  %v33 = vsub.f32 %v15, %v31
  %v34 = vmul.f32 %v32, %v32
  %v35 = vmul.f32 %v33, %v33
  %v36 = vsel %vm16, %v34, 0.0
  %37 = vadd.xlane.f32.xlu0 %v36
  %v38 = vpop.xlane.xlu0 %37
  %v39 = vsel %vm16, %v35, 0.0
  %40 = vadd.xlane.f32.xlu0 %v39
  %v41 = vpop.xlane.xlu0 %40
  %v42 = vmul.f32 %v38, %v29
  %v43 = vmul.f32 %v41, %v29
  %v44 = vadd.f32 %v42, 1e-05
  %v45 = vadd.f32 %v43, 1e-05
  %v46 = vrsqrt.pop %v44
  %v47 = vmul.f32 %v46, %v44
  %v48 = vmul.f32 %v47, %v46
  %v49 = vmul.f32 0.5, %v48
  %v50 = vsub.f32 1.5, %v49
  %v51 = vmul.f32 %v46, %v50
  %vm52 = vweird.f32 %v44
  %vm53 = vweird.f32 %v46
  %vm54 = vmor %vm52, %vm53
  %v55 = vsel %vm54, %v46, %v51
  %v56 = vrsqrt.pop %v45
  %v57 = vmul.f32 %v56, %v45
  %v58 = vmul.f32 %v57, %v56
  %v59 = vmul.f32 0.5, %v58
  %v60 = vsub.f32 1.5, %v59
  %v61 = vmul.f32 %v56, %v60
  %vm62 = vweird.f32 %v45
  %vm63 = vweird.f32 %v56
  %vm64 = vmor %vm62, %vm63
  %v65 = vsel %vm64, %v56, %v61
  %v66 = vmul.f32 %v32, %v55
  %v67 = vmul.f32 %v33, %v65
  %v68 = vld [vmem:[%s1] sm:$0x1]
  %v70 = vperm.slane %v68, 0
  %v72 = vmul.f32 %v66, %v70
  %v73 = vmul.f32 %v67, %v70
  %v74 = vld [vmem:[%s2] sm:$0x1]
  %v76 = vperm.slane %v74, 0
  %v78 = vadd.f32 %v72, %v76
  %v79 = vadd.f32 %v73, %v76
  %80 = vst.msk [vmem:[%s3] sm:$0xff] %vm16, %v78
  %81 = vst.msk [vmem:[%s3 + $0x8] sm:$0xff] %vm16, %v79
  // Predicated region
  $region14: #{_lambda_.1} parent=0 // pred_check
    _
  $region15: #{_lambda_.1} parent=0 // pred_check_branch
    %83 = sbr.rel (0) target = $region17
  $region16: #{_lambda_.1} parent=0 // pred_region
    _
  $region17: #{_lambda_.1} parent=0 // pred_fallthru
    _
  // Predicated region
  $region18: #{_lambda_.1} parent=0 // pred_check
    _
  $region19: #{_lambda_.1} parent=0 // pred_check_branch
    %85 = sbr.rel (0) target = $region21
  $region20: #{_lambda_.1} parent=0 // pred_region
    _
  $region21: #{_lambda_.1} parent=0 // pred_fallthru
    _

// kernel: checkpoint.16
$region0: #{checkpoint.16}
  #allocation0 [shape = 'u32[]', space=smem, size = 0x4, offset = 0x4, fixed_abs, tag = 'smem constant byte address 0x4 - core index']
  #allocation1 [shape = 'u32[72,128]{1,0:T(1,128)}', space=vmem, size = 0x9000, scoped, tag = 'internal scratch']
  %s0 = inlined_call_operand.vmem [shape: f32[2,8,32], index: 0, kind: input, shape index: {}]
  %s1 = inlined_call_operand.vmem [shape: bf16[2,8,64], index: 1, kind: input, shape index: {}]
  %s2 = inlined_call_operand.vmem [shape: bf16[32,32], index: 2, kind: input, shape index: {}]
  %s3 = inlined_call_operand.vmem [shape: f32[1,32], index: 3, kind: input, shape index: {}, may-alias: {3,5,7}]
  %s4 = inlined_call_operand.vmem [shape: bf16[32,32], index: 4, kind: input, shape index: {}]
  %s5 = inlined_call_operand.vmem [shape: f32[1,32], index: 5, kind: input, shape index: {}, may-alias: {3,5,7}]
  %s6 = inlined_call_operand.vmem [shape: f32[1,32], index: 6, kind: input, shape index: {}]
  %s7 = inlined_call_operand.vmem [shape: f32[1,32], index: 7, kind: input, shape index: {}, may-alias: {3,5,7}]
  %s8 = inlined_call_operand.vmem [shape: f32[2,8,32], index: 8, kind: output, shape index: {}]
  %s9 = sld [smem:[#allocation0]]
  $region65: #{checkpoint.16} parent=0
    _
  %s11 = ssub.s32 1, %s9
  %s12 = scalar_select 0, %s11, %s9
  loop: start=0, step=1, limit=4
  $region2: #{checkpoint.16} parent=0 // loop_pre_header
    _
  $region3: #{checkpoint.16} parent=0 // loop_header
    %s14 = sphi 0, %s18
    %p15 = scmp.ge.s32.totalorder %s14, 4
    %s21 = sphi 0, %s33
    %s22 = sphi 0, %s29
    %s23 = sphi 0, %s21
    %s24 = sphi 0, %s22
    %s25 = sphi 0, %s23
    %s26 = sphi 0, %s24
    %s38 = sphi 0, %s40
    %s41 = sphi 0, %s38
    %s42 = sphi 0, %s41
    %s58 = sphi 0, %s42
    %s64 = sphi 0, %s66
    %s67 = sphi 0, %s64
    %s68 = sphi 0, %s67
    %s84 = sphi 0, %s68
    %s88 = sphi 0, %s88
    %s90 = sphi 0, %s88
    %s91 = sphi 0, %s90
    %s105 = sphi 0, %s91
    %s109 = sphi 0, %s109
    %s111 = sphi 0, %s109
    %s112 = sphi 0, %s111
    %s126 = sphi 0, %s112
    %s130 = sphi 0, %s130
    %s132 = sphi 0, %s130
    %s133 = sphi 0, %s132
    %s147 = sphi 0, %s133
    %s151 = sphi 0, %s151
    %s153 = sphi 0, %s151
    %s154 = sphi 0, %s153
    %s168 = sphi 0, %s154
    %s172 = sphi 0, %s172
    %s174 = sphi 0, %s172
    %s175 = sphi 0, %s174
    %s189 = sphi 0, %s175
    %s193 = sphi 0, %s193
    %s195 = sphi 0, %s193
    %s196 = sphi 0, %s195
    %s210 = sphi 0, %s196
    %s218 = sphi 0, %s220
    %s221 = sphi 0, %s218
    %s222 = sphi 0, %s221
    %s238 = sphi 0, %s222
  $region4: #{checkpoint.16} parent=0 // loop_header_branch
    %17 = sbr.rel (%p15) target = $region8
  $region5: #{checkpoint.16} parent=0 // loop_body
    %s19 = ssub.s32 %s14, 1
    %s20 = ssub.s32 %s14, 2
    %s27 = sadd.s32 1, %s22
    %p28 = scmp.ge.s32.totalorder %s27, 1
    %s29 = scalar_select %p28, 0, %s27
    %s30 = sadd.s32 1, %s21
    %s31 = scalar_select %p28, %s30, %s21
    %p32 = scmp.ge.s32.totalorder %s31, 2
    %s33 = scalar_select %p32, 0, %s31
    %s34 = ssub.s32 %s21, %s33
    %s35 = ssub.s32 %s22, %s29
    %s36 = sor.u32 %s34, %s35
    %p37 = scmp.eq.s32.totalorder %s36, 0
    %s39 = sadd.s32 %s38, 1
    %s40 = scalar_select %p37, %s38, %s39
    %p43 = pneg %p37
    %p44 = scmp.eq.s32.totalorder %s14, 1
    %p45 = por %p43, %p44
    %p46 = scmp.ne.s32.totalorder %s38, %s41
    %p47 = scmp.eq.s32.totalorder %s14, 0
    %p48 = por %p46, %p47
    %p49 = scmp.ne.s32.totalorder %s38, %s41
    %p50 = scmp.eq.s32.totalorder %s19, 1
    %p51 = por %p49, %p50
    %p52 = scmp.ne.s32.totalorder %s41, %s42
    %p53 = scmp.eq.s32.totalorder %s19, 0
    %p54 = por %p52, %p53
    %p55 = scmp.ne.s32.totalorder %s41, %s42
    %p56 = scmp.eq.s32.totalorder %s20, 1
    %p57 = por %p55, %p56
    %p59 = scmp.ne.s32.totalorder %s42, %s58
    %p60 = scmp.eq.s32.totalorder %s20, 0
    %p61 = por %p59, %p60
    %s62 = ssub.s32 %s21, %s33
    %p63 = scmp.eq.s32.totalorder %s62, 0
    %s65 = sadd.s32 %s64, 1
    %s66 = scalar_select %p63, %s64, %s65
    %p69 = pneg %p63
    %p70 = scmp.eq.s32.totalorder %s14, 1
    %p71 = por %p69, %p70
    %p72 = scmp.ne.s32.totalorder %s64, %s67
    %p73 = scmp.eq.s32.totalorder %s14, 0
    %p74 = por %p72, %p73
    %p75 = scmp.ne.s32.totalorder %s64, %s67
    %p76 = scmp.eq.s32.totalorder %s19, 1
    %p77 = por %p75, %p76
    %p78 = scmp.ne.s32.totalorder %s67, %s68
    %p79 = scmp.eq.s32.totalorder %s19, 0
    %p80 = por %p78, %p79
    %p81 = scmp.ne.s32.totalorder %s67, %s68
    %p82 = scmp.eq.s32.totalorder %s20, 1
    %p83 = por %p81, %p82
    %p85 = scmp.ne.s32.totalorder %s68, %s84
    %p86 = scmp.eq.s32.totalorder %s20, 0
    %p87 = por %p85, %p86
    %s89 = sadd.s32 %s88, 1
    %p92 = scmp.eq.s32.totalorder %s14, 1
    %p93 = scmp.ne.s32.totalorder %s88, %s90
    %p94 = scmp.eq.s32.totalorder %s14, 0
    %p95 = por %p93, %p94
    %p96 = scmp.ne.s32.totalorder %s88, %s90
    %p97 = scmp.eq.s32.totalorder %s19, 1
    %p98 = por %p96, %p97
    %p99 = scmp.ne.s32.totalorder %s90, %s91
    %p100 = scmp.eq.s32.totalorder %s19, 0
    %p101 = por %p99, %p100
    %p102 = scmp.ne.s32.totalorder %s90, %s91
    %p103 = scmp.eq.s32.totalorder %s20, 1
    %p104 = por %p102, %p103
    %p106 = scmp.ne.s32.totalorder %s91, %s105
    %p107 = scmp.eq.s32.totalorder %s20, 0
    %p108 = por %p106, %p107
    %s110 = sadd.s32 %s109, 1
    %p113 = scmp.eq.s32.totalorder %s14, 1
    %p114 = scmp.ne.s32.totalorder %s109, %s111
    %p115 = scmp.eq.s32.totalorder %s14, 0
    %p116 = por %p114, %p115
    %p117 = scmp.ne.s32.totalorder %s109, %s111
    %p118 = scmp.eq.s32.totalorder %s19, 1
    %p119 = por %p117, %p118
    %p120 = scmp.ne.s32.totalorder %s111, %s112
    %p121 = scmp.eq.s32.totalorder %s19, 0
    %p122 = por %p120, %p121
    %p123 = scmp.ne.s32.totalorder %s111, %s112
    %p124 = scmp.eq.s32.totalorder %s20, 1
    %p125 = por %p123, %p124
    %p127 = scmp.ne.s32.totalorder %s112, %s126
    %p128 = scmp.eq.s32.totalorder %s20, 0
    %p129 = por %p127, %p128
    %s131 = sadd.s32 %s130, 1
    %p134 = scmp.eq.s32.totalorder %s14, 1
    %p135 = scmp.ne.s32.totalorder %s130, %s132
    %p136 = scmp.eq.s32.totalorder %s14, 0
    %p137 = por %p135, %p136
    %p138 = scmp.ne.s32.totalorder %s130, %s132
    %p139 = scmp.eq.s32.totalorder %s19, 1
    %p140 = por %p138, %p139
    %p141 = scmp.ne.s32.totalorder %s132, %s133
    %p142 = scmp.eq.s32.totalorder %s19, 0
    %p143 = por %p141, %p142
    %p144 = scmp.ne.s32.totalorder %s132, %s133
    %p145 = scmp.eq.s32.totalorder %s20, 1
    %p146 = por %p144, %p145
    %p148 = scmp.ne.s32.totalorder %s133, %s147
    %p149 = scmp.eq.s32.totalorder %s20, 0
    %p150 = por %p148, %p149
    %s152 = sadd.s32 %s151, 1
    %p155 = scmp.eq.s32.totalorder %s14, 1
    %p156 = scmp.ne.s32.totalorder %s151, %s153
    %p157 = scmp.eq.s32.totalorder %s14, 0
    %p158 = por %p156, %p157
    %p159 = scmp.ne.s32.totalorder %s151, %s153
    %p160 = scmp.eq.s32.totalorder %s19, 1
    %p161 = por %p159, %p160
    %p162 = scmp.ne.s32.totalorder %s153, %s154
    %p163 = scmp.eq.s32.totalorder %s19, 0
    %p164 = por %p162, %p163
    %p165 = scmp.ne.s32.totalorder %s153, %s154
    %p166 = scmp.eq.s32.totalorder %s20, 1
    %p167 = por %p165, %p166
    %p169 = scmp.ne.s32.totalorder %s154, %s168
    %p170 = scmp.eq.s32.totalorder %s20, 0
    %p171 = por %p169, %p170
    %s173 = sadd.s32 %s172, 1
    %p176 = scmp.eq.s32.totalorder %s14, 1
    %p177 = scmp.ne.s32.totalorder %s172, %s174
    %p178 = scmp.eq.s32.totalorder %s14, 0
    %p179 = por %p177, %p178
    %p180 = scmp.ne.s32.totalorder %s172, %s174
    %p181 = scmp.eq.s32.totalorder %s19, 1
    %p182 = por %p180, %p181
    %p183 = scmp.ne.s32.totalorder %s174, %s175
    %p184 = scmp.eq.s32.totalorder %s19, 0
    %p185 = por %p183, %p184
    %p186 = scmp.ne.s32.totalorder %s174, %s175
    %p187 = scmp.eq.s32.totalorder %s20, 1
    %p188 = por %p186, %p187
    %p190 = scmp.ne.s32.totalorder %s175, %s189
    %p191 = scmp.eq.s32.totalorder %s20, 0
    %p192 = por %p190, %p191
    %s194 = sadd.s32 %s193, 1
    %p197 = scmp.eq.s32.totalorder %s14, 1
    %p198 = scmp.ne.s32.totalorder %s193, %s195
    %p199 = scmp.eq.s32.totalorder %s14, 0
    %p200 = por %p198, %p199
    %p201 = scmp.ne.s32.totalorder %s193, %s195
    %p202 = scmp.eq.s32.totalorder %s19, 1
    %p203 = por %p201, %p202
    %p204 = scmp.ne.s32.totalorder %s195, %s196
    %p205 = scmp.eq.s32.totalorder %s19, 0
    %p206 = por %p204, %p205
    %p207 = scmp.ne.s32.totalorder %s195, %s196
    %p208 = scmp.eq.s32.totalorder %s20, 1
    %p209 = por %p207, %p208
    %p211 = scmp.ne.s32.totalorder %s196, %s210
    %p212 = scmp.eq.s32.totalorder %s20, 0
    %p213 = por %p211, %p212
    %s214 = ssub.s32 %s21, %s33
    %s215 = ssub.s32 %s22, %s29
    %s216 = sor.u32 %s214, %s215
    %p217 = scmp.eq.s32.totalorder %s216, 0
    %s219 = sadd.s32 %s218, 1
    %s220 = scalar_select %p217, %s218, %s219
    %p223 = pneg %p217
    %p224 = scmp.eq.s32.totalorder %s14, 1
    %p225 = por %p223, %p224
    %p226 = scmp.ne.s32.totalorder %s218, %s221
    %p227 = scmp.eq.s32.totalorder %s14, 0
    %p228 = por %p226, %p227
    %p229 = scmp.ne.s32.totalorder %s218, %s221
    %p230 = scmp.eq.s32.totalorder %s19, 1
    %p231 = por %p229, %p230
    %p232 = scmp.ne.s32.totalorder %s221, %s222
    %p233 = scmp.eq.s32.totalorder %s19, 0
    %p234 = por %p232, %p233
    %p235 = scmp.ne.s32.totalorder %s221, %s222
    %p236 = scmp.eq.s32.totalorder %s20, 1
    %p237 = por %p235, %p236
    %p239 = scmp.ne.s32.totalorder %s222, %s238
    %p240 = scmp.eq.s32.totalorder %s20, 0
    %p241 = por %p239, %p240
    %p242 = scmp.le.s32.totalorder 1, %s14
    %p243 = scmp.lt.s32.totalorder %s14, 3
    %p244 = pnand %p242, %p243
    %p245 = pneg %p244
    // Predicated region
    $region9: #{checkpoint.16} parent=5 // pred_check
      _
    $region10: #{checkpoint.16} parent=5 // pred_check_branch
      %247 = sbr.rel (%p244) target = $region12
    $region11: #{checkpoint.16} parent=5 // pred_region
      %s248 = ssub.s32 %s14, 1
      // Predicated region
      $region13: #{checkpoint.16} parent=11 // pred_check
        %p249 = pneg %p101
      $region14: #{checkpoint.16} parent=11 // pred_check_branch
        %251 = sbr.rel (%p249) target = $region16
      $region15: #{checkpoint.16} parent=11 // pred_region
        _
      $region16: #{checkpoint.16} parent=11 // pred_fallthru
        _
      // Predicated region
      $region17: #{checkpoint.16} parent=11 // pred_check
        %p252 = pneg %p122
      $region18: #{checkpoint.16} parent=11 // pred_check_branch
        %254 = sbr.rel (%p252) target = $region20
      $region19: #{checkpoint.16} parent=11 // pred_region
        _
      $region20: #{checkpoint.16} parent=11 // pred_fallthru
        _
      // Predicated region
      $region21: #{checkpoint.16} parent=11 // pred_check
        %p255 = pneg %p143
      $region22: #{checkpoint.16} parent=11 // pred_check_branch
        %257 = sbr.rel (%p255) target = $region24
      $region23: #{checkpoint.16} parent=11 // pred_region
        _
      $region24: #{checkpoint.16} parent=11 // pred_fallthru
        _
      // Predicated region
      $region25: #{checkpoint.16} parent=11 // pred_check
        %p258 = pneg %p164
      $region26: #{checkpoint.16} parent=11 // pred_check_branch
        %260 = sbr.rel (%p258) target = $region28
      $region27: #{checkpoint.16} parent=11 // pred_region
        _
      $region28: #{checkpoint.16} parent=11 // pred_fallthru
        _
      // Predicated region
      $region29: #{checkpoint.16} parent=11 // pred_check
        %p261 = pneg %p185
      $region30: #{checkpoint.16} parent=11 // pred_check_branch
        %263 = sbr.rel (%p261) target = $region32
      $region31: #{checkpoint.16} parent=11 // pred_region
        _
      $region32: #{checkpoint.16} parent=11 // pred_fallthru
        _
      // Predicated region
      $region33: #{checkpoint.16} parent=11 // pred_check
        %p264 = pneg %p206
      $region34: #{checkpoint.16} parent=11 // pred_check_branch
        %266 = sbr.rel (%p264) target = $region36
      $region35: #{checkpoint.16} parent=11 // pred_region
        _
      $region36: #{checkpoint.16} parent=11 // pred_fallthru
        _
    $region12: #{checkpoint.16} parent=5 // pred_fallthru
      _
    %p267 = scmp.lt.s32.totalorder %s14, 2
    // Predicated region
    $region37: #{checkpoint.16} parent=5 // pred_check
      %p268 = pneg %p267
    $region38: #{checkpoint.16} parent=5 // pred_check_branch
      %270 = sbr.rel (%p268) target = $region40
    $region39: #{checkpoint.16} parent=5 // pred_region
      // Predicated region
      $region41: #{checkpoint.16} parent=39 // pred_check
        %p271 = pneg %p48
      $region42: #{checkpoint.16} parent=39 // pred_check_branch
        %273 = sbr.rel (%p271) target = $region44
      $region43: #{checkpoint.16} parent=39 // pred_region
        %p274 = scmp.lt.s32.totalorder %s21, 1
        %s275 = scalar_select %p274, %s21, 1
        %p276 = scmp.lt.s32.totalorder %s22, 0
        %s277 = scalar_select %p276, %s22, 0
        %s278 = sadd.s32 %s277, %s275
        %s279 = smul.addr %s278, 8
        %s280 = scalar_lea.vmem %s0, %s279
      $region44: #{checkpoint.16} parent=39 // pred_fallthru
        _
      // Predicated region
      $region45: #{checkpoint.16} parent=39 // pred_check
        %p281 = pneg %p74
      $region46: #{checkpoint.16} parent=39 // pred_check_branch
        %283 = sbr.rel (%p281) target = $region48
      $region47: #{checkpoint.16} parent=39 // pred_region
        %p284 = scmp.lt.s32.totalorder %s21, 1
        %s285 = scalar_select %p284, %s21, 1
        %s286 = smul.addr %s285, 4
        %s287 = scalar_lea.vmem %s1, %s286
      $region48: #{checkpoint.16} parent=39 // pred_fallthru
        _
    $region40: #{checkpoint.16} parent=5 // pred_fallthru
      _
    %p288 = scmp.le.s32.totalorder 1, %s14
    %p289 = scmp.lt.s32.totalorder %s14, 3
    %p290 = pnand %p288, %p289
    %p291 = pneg %p290
    // Predicated region
    $region49: #{checkpoint.16} parent=5 // pred_check
      _
    $region50: #{checkpoint.16} parent=5 // pred_check_branch
      %293 = sbr.rel (%p290) target = $region52
    $region51: #{checkpoint.16} parent=5 // pred_region
      %s294 = ssub.s32 %s14, 1
      %p295 = scmp.lt.s32.totalorder %s23, 1
      %s296 = scalar_select %p295, %s23, 1
      %p297 = scmp.lt.s32.totalorder %s24, 0
      %s298 = scalar_select %p297, %s24, 0
      %s299 = sadd.s32 %s298, %s296
      %s300 = smul.addr %s299, 8
      %s301 = scalar_lea.vmem %s0, %s300
      %p302 = pneg %p54
      %p303 = pneg %p51
      %p304 = scmp.lt.s32.totalorder %s23, 1
      %s305 = scalar_select %p304, %s23, 1
      %s306 = smul.addr %s305, 4
      %s307 = scalar_lea.vmem %s1, %s306
      %p308 = pneg %p80
      %p309 = pneg %p77
      %p310 = pneg %p101
      %p311 = pneg %p98
      %p312 = pneg %p122
      %p313 = pneg %p119
      %p314 = pneg %p143
      %p315 = pneg %p140
      %p316 = pneg %p164
      %p317 = pneg %p161
      %p318 = pneg %p185
      %p319 = pneg %p182
      %p320 = pneg %p206
      %p321 = pneg %p203
      %p322 = pneg %p234
      %p323 = pneg %p231
      %p324 = scmp.lt.s32.totalorder %s23, 1
      %s325 = scalar_select %p324, %s23, 1
      %p326 = scmp.lt.s32.totalorder %s24, 0
      %s327 = scalar_select %p326, %s24, 0
      %s328 = sadd.s32 %s327, %s325
      %s329 = smul.addr %s328, 8
      %s330 = scalar_lea.vmem %s8, %s329
      %p331 = scmp.lt.s32.totalorder %s23, 1
      %s332 = scalar_select %p331, %s23, 1
      %p333 = scmp.lt.s32.totalorder %s24, 0
      %s334 = scalar_select %p333, %s24, 0
      %s335 = sadd.s32 %s334, %s332
      %s336 = smul.addr %s335, 8
      %s337 = scalar_lea.vmem %s0, %s336
      %p338 = scmp.lt.s32.totalorder %s23, 1
      %s339 = scalar_select %p338, %s23, 1
      %s340 = smul.addr %s339, 4
      %s341 = scalar_lea.vmem %s1, %s340
      %p342 = scmp.lt.s32.totalorder %s23, 1
      %s343 = scalar_select %p342, %s23, 1
      %p344 = scmp.lt.s32.totalorder %s24, 0
      %s345 = scalar_select %p344, %s24, 0
      %s346 = sadd.s32 %s345, %s343
      %s347 = smul.addr %s346, 8
      %s348 = scalar_lea.vmem %s8, %s347
      %v350 = vld [vmem:[%s337] sm:$0xff]
      %v351 = vpack.c.bf16 %v350, %v350
      %v352 = vld [vmem:[%s2] sm:$0xf]
      %v353 = vld [vmem:[%s2 + $0x4] sm:$0xf]
      %v354 = vld [vmem:[%s2 + $0x8] sm:$0xf]
      %v355 = vld [vmem:[%s2 + $0xc] sm:$0xf]
      %v356 = vld [vmem:[%s3] sm:$0x1]
      %v358 = vperm.slane %v356, 0
      %v364 = vunpack.c.l.b16 %v352
      %v365 = vunpack.c.l.b16 %v353
      %v366 = vunpack.c.l.b16 %v354
      %v367 = vunpack.c.l.b16 %v355
      %v368 = vpack.c.b16 %v365, %v364
      %v369 = vpack.c.b16 %v367, %v366
      %vm372 = vcmask 261120
      %v374 = vsel %vm372, %v351, 0
      %376 = vmatpush.bf16.msra.mxu0 0
      %377 = vmatpush.bf16.msra.mxu0 0
      %378 = vmatpush.bf16.msra.mxu0 0
      %379 = vmatpush.bf16.msra.mxu0 0
      %380 = vmatpush.bf16.msra.mxu0 0
      %381 = vmatpush.bf16.msra.mxu0 0
      %382 = vmatpush.bf16.msra.mxu0 %v369
      %383 = vmatpush.bf16.msra.mxu0 %v368
      %384 = vmatmul.bf16.gmra.mxu0 %v374
      %v385 = vpop.f32.mrf.mxu0
      %v386 = vadd.f32 %v358, %v385
      %v387 = vpop.f32.mrf.mxu0
      %388 = vdwg.mxu0
      %v389 = vpack.c.bf16 %v386, %v386
      %v390 = vld [vmem:[%s341] sm:$0xf]
      %vm391 = vcmask 64512
      %v393 = vsel %vm391, %v389, 0
      %v396 = vsel %vm391, %v390, 0
      %398 = vmatpush.bf16.xpose.msra.mxu0 0
      %399 = vmatpush.bf16.xpose.msra.mxu0 0
      %400 = vmatpush.bf16.xpose.msra.mxu0 0
      %401 = vmatpush.bf16.xpose.msra.mxu0 0
      %402 = vmatpush.bf16.xpose.msra.mxu0 0
      %403 = vmatpush.bf16.xpose.msra.mxu0 0
      %404 = vmatpush.bf16.xpose.msra.mxu0 0
      %405 = vmatpush.bf16.xpose.msra.mxu0 %v396
      %406 = vmatmul.bf16.gmra.mxu0 %v393
      %v407 = vpop.f32.mrf.mxu0
      %v408 = vadd.f32 0.0, %v407
      %v409 = vpop.f32.mrf.mxu0
      %410 = vdwg.mxu0
      %v411 = vsel %vm391, %v408, -inf
      %412 = vmax.xlane.f32.xlu0 %v411
      %v413 = vpop.xlane.xlu0 %412
      %v414 = vsub.f32 %v408, %v413
      %v415 = vmul.f32 %v414, 1.442695
      %v416 = vpow.pop %v415
      %v417 = vsel %vm391, %v416, 0.0
      %418 = vadd.xlane.f32.xlu0 %v417
      %v419 = vpop.xlane.xlu0 %418
      %v420 = vrcp.pop %v419
      %v421 = vmul.f32 %v416, %v420
      %v422 = vpack.c.bf16 %v421, %v421
      %v424 = vunpack.c.l.b16 %v390
      %v425 = vpack.c.b16 %v424, %v424
      %426 = vrot.lane.b32.xlu0 %v425, 96
      %v427 = vpop.permute.xlu0 %426
      %v429 = vsel %vm391, %v422, 0
      %vm431 = vcmask 1043456
      %v433 = vsel %vm431, %v427, 0
      %435 = vmatpush.bf16.msra.mxu0 0
      %436 = vmatpush.bf16.msra.mxu0 0
      %437 = vmatpush.bf16.msra.mxu0 0
      %438 = vmatpush.bf16.msra.mxu0 0
      %439 = vmatpush.bf16.msra.mxu0 0
      %440 = vmatpush.bf16.msra.mxu0 0
      %441 = vmatpush.bf16.msra.mxu0 0
      %442 = vmatpush.bf16.msra.mxu0 %v433
      %443 = vmatmul.bf16.gmra.mxu0 %v429
      %v444 = vpop.f32.mrf.mxu0
      %v445 = vadd.f32 0.0, %v444
      %v446 = vpop.f32.mrf.mxu0
      %447 = vdwg.mxu0
      %v449 = vunpack.c.l.b16 %v389
      %v450 = vpack.c.b16 %v449, %v449
      %451 = vrot.lane.b32.xlu0 %v450, 120
      %v452 = vpop.permute.xlu0 %451
      %453 = vrot.lane.b32.xlu0 %v425, 120
      %v454 = vpop.permute.xlu0 %453
      %v456 = vsel %vm391, %v452, 0
      %v459 = vsel %vm391, %v454, 0
      %461 = vmatpush.bf16.xpose.msra.mxu0 0
      %462 = vmatpush.bf16.xpose.msra.mxu0 0
      %463 = vmatpush.bf16.xpose.msra.mxu0 0
      %464 = vmatpush.bf16.xpose.msra.mxu0 0
      %465 = vmatpush.bf16.xpose.msra.mxu0 0
      %466 = vmatpush.bf16.xpose.msra.mxu0 0
      %467 = vmatpush.bf16.xpose.msra.mxu0 0
      %468 = vmatpush.bf16.xpose.msra.mxu0 %v459
      %469 = vmatmul.bf16.gmra.mxu0 %v456
      %v470 = vpop.f32.mrf.mxu0
      %v471 = vadd.f32 0.0, %v470
      %v472 = vpop.f32.mrf.mxu0
      %473 = vdwg.mxu0
      %v474 = vsel %vm391, %v471, -inf
      %475 = vmax.xlane.f32.xlu0 %v474
      %v476 = vpop.xlane.xlu0 %475
      %v477 = vsub.f32 %v471, %v476
      %v478 = vmul.f32 %v477, 1.442695
      %v479 = vpow.pop %v478
      %v480 = vsel %vm391, %v479, 0.0
      %481 = vadd.xlane.f32.xlu0 %v480
      %v482 = vpop.xlane.xlu0 %481
      %v483 = vrcp.pop %v482
      %v484 = vmul.f32 %v479, %v483
      %v485 = vpack.c.bf16 %v484, %v484
      %486 = vrot.lane.b32.xlu0 %v425, 88
      %v487 = vpop.permute.xlu0 %486
      %v489 = vsel %vm391, %v485, 0
      %v492 = vsel %vm431, %v487, 0
      %494 = vmatpush.bf16.msra.mxu0 0
      %495 = vmatpush.bf16.msra.mxu0 0
      %496 = vmatpush.bf16.msra.mxu0 0
      %497 = vmatpush.bf16.msra.mxu0 0
      %498 = vmatpush.bf16.msra.mxu0 0
      %499 = vmatpush.bf16.msra.mxu0 0
      %500 = vmatpush.bf16.msra.mxu0 0
      %501 = vmatpush.bf16.msra.mxu0 %v492
      %502 = vmatmul.bf16.gmra.mxu0 %v489
      %v503 = vpop.f32.mrf.mxu0
      %v504 = vadd.f32 0.0, %v503
      %v505 = vpop.f32.mrf.mxu0
      %506 = vdwg.mxu0
      %507 = vrot.lane.b32.xlu0 %v450, 112
      %v508 = vpop.permute.xlu0 %507
      %509 = vrot.lane.b32.xlu0 %v425, 112
      %v510 = vpop.permute.xlu0 %509
      %v512 = vsel %vm391, %v508, 0
      %v515 = vsel %vm391, %v510, 0
      %517 = vmatpush.bf16.xpose.msra.mxu0 0
      %518 = vmatpush.bf16.xpose.msra.mxu0 0
      %519 = vmatpush.bf16.xpose.msra.mxu0 0
      %520 = vmatpush.bf16.xpose.msra.mxu0 0
      %521 = vmatpush.bf16.xpose.msra.mxu0 0
      %522 = vmatpush.bf16.xpose.msra.mxu0 0
      %523 = vmatpush.bf16.xpose.msra.mxu0 0
      %524 = vmatpush.bf16.xpose.msra.mxu0 %v515
      %525 = vmatmul.bf16.gmra.mxu0 %v512
      %v526 = vpop.f32.mrf.mxu0
      %v527 = vadd.f32 0.0, %v526
      %v528 = vpop.f32.mrf.mxu0
      %529 = vdwg.mxu0
      %v530 = vsel %vm391, %v527, -inf
      %531 = vmax.xlane.f32.xlu0 %v530
      %v532 = vpop.xlane.xlu0 %531
      %v533 = vsub.f32 %v527, %v532
      %v534 = vmul.f32 %v533, 1.442695
      %v535 = vpow.pop %v534
      %v536 = vsel %vm391, %v535, 0.0
      %537 = vadd.xlane.f32.xlu0 %v536
      %v538 = vpop.xlane.xlu0 %537
      %v539 = vrcp.pop %v538
      %v540 = vmul.f32 %v535, %v539
      %v541 = vpack.c.bf16 %v540, %v540
      %542 = vrot.lane.b32.xlu0 %v425, 80
      %v543 = vpop.permute.xlu0 %542
      %v545 = vsel %vm391, %v541, 0
      %v548 = vsel %vm431, %v543, 0
      %550 = vmatpush.bf16.msra.mxu0 0
      %551 = vmatpush.bf16.msra.mxu0 0
      %552 = vmatpush.bf16.msra.mxu0 0
      %553 = vmatpush.bf16.msra.mxu0 0
      %554 = vmatpush.bf16.msra.mxu0 0
      %555 = vmatpush.bf16.msra.mxu0 0
      %556 = vmatpush.bf16.msra.mxu0 0
      %557 = vmatpush.bf16.msra.mxu0 %v548
      %558 = vmatmul.bf16.gmra.mxu0 %v545
      %v559 = vpop.f32.mrf.mxu0
      %v560 = vadd.f32 0.0, %v559
      %v561 = vpop.f32.mrf.mxu0
      %562 = vdwg.mxu0
      %563 = vrot.lane.b32.xlu0 %v450, 104
      %v564 = vpop.permute.xlu0 %563
      %565 = vrot.lane.b32.xlu0 %v425, 104
      %v566 = vpop.permute.xlu0 %565
      %v568 = vsel %vm391, %v564, 0
      %v571 = vsel %vm391, %v566, 0
      %573 = vmatpush.bf16.xpose.msra.mxu0 0
      %574 = vmatpush.bf16.xpose.msra.mxu0 0
      %575 = vmatpush.bf16.xpose.msra.mxu0 0
      %576 = vmatpush.bf16.xpose.msra.mxu0 0
      %577 = vmatpush.bf16.xpose.msra.mxu0 0
      %578 = vmatpush.bf16.xpose.msra.mxu0 0
      %579 = vmatpush.bf16.xpose.msra.mxu0 0
      %580 = vmatpush.bf16.xpose.msra.mxu0 %v571
      %581 = vmatmul.bf16.gmra.mxu0 %v568
      %v582 = vpop.f32.mrf.mxu0
      %v583 = vadd.f32 0.0, %v582
      %v584 = vpop.f32.mrf.mxu0
      %585 = vdwg.mxu0
      %v586 = vsel %vm391, %v583, -inf
      %587 = vmax.xlane.f32.xlu0 %v586
      %v588 = vpop.xlane.xlu0 %587
      %v589 = vsub.f32 %v583, %v588
      %v590 = vmul.f32 %v589, 1.442695
      %v591 = vpow.pop %v590
      %v592 = vsel %vm391, %v591, 0.0
      %593 = vadd.xlane.f32.xlu0 %v592
      %v594 = vpop.xlane.xlu0 %593
      %v595 = vrcp.pop %v594
      %v596 = vmul.f32 %v591, %v595
      %v597 = vpack.c.bf16 %v596, %v596
      %598 = vrot.lane.b32.xlu0 %v425, 72
      %v599 = vpop.permute.xlu0 %598
      %v601 = vsel %vm391, %v597, 0
      %v604 = vsel %vm431, %v599, 0
      %606 = vmatpush.bf16.msra.mxu0 0
      %607 = vmatpush.bf16.msra.mxu0 0
      %608 = vmatpush.bf16.msra.mxu0 0
      %609 = vmatpush.bf16.msra.mxu0 0
      %610 = vmatpush.bf16.msra.mxu0 0
      %611 = vmatpush.bf16.msra.mxu0 0
      %612 = vmatpush.bf16.msra.mxu0 0
      %613 = vmatpush.bf16.msra.mxu0 %v604
      %614 = vmatmul.bf16.gmra.mxu0 %v601
      %v615 = vpop.f32.mrf.mxu0
      %v616 = vadd.f32 0.0, %v615
      %v617 = vpop.f32.mrf.mxu0
      %618 = vdwg.mxu0
      %620 = vrot.lane.b32.xlu0 %v504, 8
      %v621 = vpop.permute.xlu0 %620
      %624 = vrot.lane.b32.xlu0 %v560, 16
      %v625 = vpop.permute.xlu0 %624
      %628 = vrot.lane.b32.xlu0 %v616, 24
      %v629 = vpop.permute.xlu0 %628
      %v631 = vsel %vm391, %v445, %v621
      %vm632 = vcmask 130048
      %v633 = vsel %vm632, %v631, %v625
      %vm634 = vcmask 195584
      %v635 = vsel %vm634, %v633, %v629
      %v636 = vpack.c.bf16 %v635, %v635
      %v637 = vld [vmem:[%s4] sm:$0xf]
      %v638 = vld [vmem:[%s4 + $0x4] sm:$0xf]
      %v639 = vld [vmem:[%s4 + $0x8] sm:$0xf]
      %v640 = vld [vmem:[%s4 + $0xc] sm:$0xf]
      %v641 = vld [vmem:[%s5] sm:$0x1]
      %v643 = vperm.slane %v641, 0
      %v649 = vunpack.c.l.b16 %v637
      %v650 = vunpack.c.l.b16 %v638
      %v651 = vunpack.c.l.b16 %v639
      %v652 = vunpack.c.l.b16 %v640
      %v653 = vpack.c.b16 %v650, %v649
      %v654 = vpack.c.b16 %v652, %v651
      %v658 = vsel %vm372, %v636, 0
      %660 = vmatpush.bf16.msra.mxu0 0
      %661 = vmatpush.bf16.msra.mxu0 0
      %662 = vmatpush.bf16.msra.mxu0 0
      %663 = vmatpush.bf16.msra.mxu0 0
      %664 = vmatpush.bf16.msra.mxu0 0
      %665 = vmatpush.bf16.msra.mxu0 0
      %666 = vmatpush.bf16.msra.mxu0 %v654
      %667 = vmatpush.bf16.msra.mxu0 %v653
      %668 = vmatmul.bf16.gmra.mxu0 %v658
      %v669 = vpop.f32.mrf.mxu0
      %v670 = vadd.f32 %v643, %v669
      %v671 = vpop.f32.mrf.mxu0
      %672 = vdwg.mxu0
      %v673 = vadd.f32 %v350, %v670
      %v674 = vsel %vm372, %v673, 0.0
      %675 = vadd.xlane.f32.xlu0 %v674
      %v676 = vpop.xlane.xlu0 %675
      %v677 = vrcp.pop 32.0
      %v678 = vmul.f32 32.0, %v677
      %v679 = vsub.f32 1.0, %v678
      %v680 = vmul.f32 %v677, %v679
      %v681 = vadd.f32 %v677, %v680
      %vm682 = vweird.f32 %v677
      %v683 = vsel %vm682, %v677, %v681
      %v684 = vmul.f32 %v676, %v683
      %v685 = vsub.f32 %v673, %v684
      %v686 = vmul.f32 %v685, %v685
      %v687 = vsel %vm372, %v686, 0.0
      %688 = vadd.xlane.f32.xlu0 %v687
      %v689 = vpop.xlane.xlu0 %688
      %v690 = vmul.f32 %v689, %v683
      %v691 = vadd.f32 %v690, 1e-05
      %v692 = vrsqrt.pop %v691
      %v693 = vmul.f32 %v692, %v691
      %v694 = vmul.f32 %v693, %v692
      %v695 = vmul.f32 0.5, %v694
      %v696 = vsub.f32 1.5, %v695
      %v697 = vmul.f32 %v692, %v696
      %vm698 = vweird.f32 %v691
      %vm699 = vweird.f32 %v692
      %vm700 = vmor %vm698, %vm699
      %v701 = vsel %vm700, %v692, %v697
      %v702 = vmul.f32 %v685, %v701
      %v703 = vld [vmem:[%s6] sm:$0x1]
      %v705 = vperm.slane %v703, 0
      %v707 = vmul.f32 %v702, %v705
      %v708 = vld [vmem:[%s7] sm:$0x1]
      %v710 = vperm.slane %v708, 0
      %v712 = vadd.f32 %v707, %v710
      %713 = vst.msk [vmem:[%s348] sm:$0xff] %vm372, %v712
      %p714 = scmp.lt.s32.totalorder %s23, 1
      %s715 = scalar_select %p714, %s23, 1
      %p716 = scmp.lt.s32.totalorder %s24, 0
      %s717 = scalar_select %p716, %s24, 0
      %s718 = sadd.s32 %s717, %s715
      %s719 = smul.addr %s718, 8
      %s720 = scalar_lea.vmem %s8, %s719
      // Predicated region
      $region53: #{checkpoint.16} parent=51 // pred_check
        %p721 = pneg %p231
      $region54: #{checkpoint.16} parent=51 // pred_check_branch
        %723 = sbr.rel (%p721) target = $region56
      $region55: #{checkpoint.16} parent=51 // pred_region
        _
      $region56: #{checkpoint.16} parent=51 // pred_fallthru
        _
    $region52: #{checkpoint.16} parent=5 // pred_fallthru
      _
    %p724 = scmp.le.s32.totalorder 2, %s14
    // Predicated region
    $region57: #{checkpoint.16} parent=5 // pred_check
      %p725 = pneg %p724
    $region58: #{checkpoint.16} parent=5 // pred_check_branch
      %727 = sbr.rel (%p725) target = $region60
    $region59: #{checkpoint.16} parent=5 // pred_region
      %s728 = ssub.s32 %s14, 2
      // Predicated region
      $region61: #{checkpoint.16} parent=59 // pred_check
        %p729 = pneg %p237
      $region62: #{checkpoint.16} parent=59 // pred_check_branch
        %731 = sbr.rel (%p729) target = $region64
      $region63: #{checkpoint.16} parent=59 // pred_region
        %p732 = scmp.lt.s32.totalorder %s25, 1
        %s733 = scalar_select %p732, %s25, 1
        %p734 = scmp.lt.s32.totalorder %s26, 0
        %s735 = scalar_select %p734, %s26, 0
        %s736 = sadd.s32 %s735, %s733
        %s737 = smul.addr %s736, 8
        %s738 = scalar_lea.vmem %s8, %s737
      $region64: #{checkpoint.16} parent=59 // pred_fallthru
        _
    $region60: #{checkpoint.16} parent=5 // pred_fallthru
      _
  $region6: #{checkpoint.16} parent=0 // loop_footer
    %s18 = sadd.s32 1, %s14
  $region7: #{checkpoint.16} parent=0 // loop_footer_branch
    %13 = sbr.rel target = $region3
  $region8: #{checkpoint.16} parent=0 // loop_exit
    _

</llo_original>
